<compile_context>
chip_gen: v7x
topology: tpu7x:2x2x1
jax: 0.10.0
libtpu: 0.0.40
codegen_flags: <defaults>
</compile_context>

<pallas_src>
import functools

import jax
import jax.numpy as jnp
from jax import lax
from jax.experimental import pallas as pl
from jax.experimental.pallas import tpu as pltpu

_LANE = 128
_WL = 8  # left halo width in the scratch W axis (sublane-aligned interior store)


def _round_up(x, m):
    return (x + m - 1) // m * m


def _largest_divisor_leq(n, cap):
    for d in range(min(n, cap), 0, -1):
        if n % d == 0:
            return d
    return 1


# ---------------------------------------------------------------------------
# Fused kernel: expand 1x1 -> depthwise 3x3 -> project 1x1 (+ residual).
# One batch image per grid step; hidden activation kept in VMEM scratch.
# ---------------------------------------------------------------------------
def _inverted_residual_kernel(x_ref, *rest, H, W, out_h, stride,
                              has_expand, use_res):
    if has_expand:
        (w1_ref, s1_ref, b1_ref,
         wdw_ref, s2_ref, b2_ref,
         w3_ref, s3_ref, b3_ref,
         o_ref, h_ref) = rest
    else:
        (wdw_ref, s2_ref, b2_ref,
         w3_ref, s3_ref, b3_ref,
         o_ref, h_ref) = rest

    f32 = jnp.float32
    Hp, Wq, Kp = h_ref.shape          # (H+2, W+2*_WL, hidden_padded)
    Cp = x_ref.shape[-1]              # padded input channels
    oup = o_ref.shape[-1]             # UNPADDED output channels

    # --- hoisted loop-invariant loads (review: don't reload/broadcast these
    #     inside every row block) -------------------------------------------
    taps = [wdw_ref[t:t + 1, :] for t in range(9)]     # 9 x (1, Kp)
    s2v, b2v = s2_ref[...], b2_ref[...]                # (1, Kp)
    w3v = w3_ref[...]                                  # (Kp, oup)
    s3v, b3v = s3_ref[...], b3_ref[...]                # (1, oup)
    if has_expand:
        w1v = w1_ref[...]                              # (Cp, Kp)
        s1v, b1v = s1_ref[...], b1_ref[...]            # (1, Kp)

    # --- zero only the halo cells the 3x3 taps actually read: the two border
    #     rows (full width, aligned dense stores) and the single column on
    #     each side of the interior.  Redone per image so the "parallel" batch
    #     axis stays correct when split across TensorCores. -------------------
    zrow = jnp.zeros((1, Wq, Kp), f32)
    h_ref[0:1, :, :] = zrow
    h_ref[Hp - 1:Hp, :, :] = zrow
    zcol = jnp.zeros((Hp, 1, Kp), f32)
    h_ref[:, _WL - 1:_WL, :] = zcol
    h_ref[:, _WL + W:_WL + W + 1, :] = zcol

    # --- stage 1: 1x1 expand conv + folded BN + ReLU6 -> scratch interior ----
    # ~128-pixel row blocks keep the matmul LHS at (128, Cp) and bound the
    # live values; fori_loop (not Python unroll) bounds live ranges / trace.
    r_exp = _largest_divisor_leq(H, max(1, 128 // max(W, 1)))
    nblk1 = H // r_exp

    def stage1(i, carry):
        r0 = pl.multiple_of(i * r_exp, r_exp)
        if has_expand:
            xb = x_ref[pl.ds(r0, r_exp)].astype(f32).reshape(r_exp * W, Cp)
            y = jnp.dot(xb, w1v, preferred_element_type=f32)
            y = jnp.clip(y * s1v + b1v, 0.0, 6.0)
            h_ref[pl.ds(1 + r0, r_exp), _WL:_WL + W, :] = y.reshape(r_exp, W, Kp)
        else:
            # expand_ratio == 1: hidden == inp, just stage the input rows.
            h_ref[pl.ds(1 + r0, r_exp), _WL:_WL + W, :] = \
                x_ref[pl.ds(r0, r_exp)].astype(f32)
        return carry

    lax.fori_loop(0, nblk1, stage1, 0, unroll=nblk1 <= 4)

    # --- stages 2+3: depthwise 3x3 + BN + ReLU6, then 1x1 project + BN
    #     (+ fused residual), one ~128-pixel block of output rows at a time ---
    if stride == 1:
        r_out = _largest_divisor_leq(out_h, max(1, 128 // max(W, 1)))
        nblk = out_h // r_out

        def stage23(i, carry):
            o0 = pl.multiple_of(i * r_out, r_out)
            acc = jnp.zeros((r_out, W, Kp), f32)
            for kh in range(3):
                for kw in range(3):
                    patch = h_ref[pl.ds(o0 + kh, r_out),
                                  _WL - 1 + kw:_WL - 1 + kw + W, :]
                    acc = acc + patch * taps[kh * 3 + kw]
            y2 = jnp.clip(acc.reshape(r_out * W, Kp) * s2v + b2v, 0.0, 6.0)
            y3 = jnp.dot(y2, w3v, preferred_element_type=f32) * s3v + b3v
            if use_res:  # stride == 1 and Cin == Cout
                xr = x_ref[pl.ds(o0, r_out)].astype(f32)[:, :, :oup]
                y3 = y3 + xr.reshape(r_out * W, oup)
            o_ref[pl.ds(o0, r_out)] = y3.reshape(r_out, W, oup).astype(o_ref.dtype)
            return carry

        lax.fori_loop(0, nblk, stage23, 0, unroll=nblk <= 4)
    else:
        # stride == 2: batch `rows` output rows per block so the projection
        # matmul sees M = rows*W (~128) instead of M = W (review item).  Row
        # selection uses static scalar indices (no strided loads); the rows
        # are stacked and projected in one MXU call.  W stays full width here
        # (stride-1 along W); the wrapper subsamples the small unpadded output.
        r_out = min(out_h, max(1, 128 // max(W, 1)))
        for o0 in range(0, out_h, r_out):
            rows = min(r_out, out_h - o0)
            row_acc = []
            for r in range(rows):
                src = 2 * (o0 + r)            # h_ref row of tap kh=0
                a = jnp.zeros((W, Kp), f32)
                for kh in range(3):
                    for kw in range(3):
                        a = a + (h_ref[src + kh,
                                       _WL - 1 + kw:_WL - 1 + kw + W, :]
                                 * taps[kh * 3 + kw])
                row_acc.append(a[None])
            acc = jnp.concatenate(row_acc, axis=0)          # (rows, W, Kp)
            y2 = jnp.clip(acc.reshape(rows * W, Kp) * s2v + b2v, 0.0, 6.0)
            y3 = jnp.dot(y2, w3v, preferred_element_type=f32) * s3v + b3v
            o_ref[o0:o0 + rows] = y3.reshape(rows, W, oup).astype(o_ref.dtype)


# ---------------------------------------------------------------------------
# Parameter init (deterministic, PyTorch OIHW layout) and BN folding.
# ---------------------------------------------------------------------------
def init_params(key, inp, oup, expand_ratio):
    hidden = int(round(inp * expand_ratio))
    ks = jax.random.split(key, 16)
    p = {"hidden": hidden}
    p["w_exp"] = 0.2 * jax.random.normal(ks[0], (hidden, inp, 1, 1), jnp.float32)
    p["w_dw"] = 0.2 * jax.random.normal(ks[1], (hidden, 1, 3, 3), jnp.float32)
    p["w_proj"] = 0.2 * jax.random.normal(ks[2], (oup, hidden, 1, 1), jnp.float32)

    def bn(i, c):
        return dict(
            gamma=1.0 + 0.1 * jax.random.normal(ks[i], (c,), jnp.float32),
            beta=0.1 * jax.random.normal(ks[i + 1], (c,), jnp.float32),
            mean=0.1 * jax.random.normal(ks[i + 2], (c,), jnp.float32),
            var=jnp.abs(jax.random.normal(ks[i + 3], (c,), jnp.float32)) + 0.5,
        )

    p["bn_exp"] = bn(3, hidden)
    p["bn_dw"] = bn(7, hidden)
    p["bn_proj"] = bn(11, oup)
    return p


def fold_bn(bn, eps=1e-5):
    scale = bn["gamma"] / jnp.sqrt(bn["var"] + eps)
    bias = bn["beta"] - bn["mean"] * scale
    return scale, bias


# ---------------------------------------------------------------------------
# InvertedResidual forward (wrapper: NCHW in / NCHW out).
# ---------------------------------------------------------------------------
def inverted_residual_forward(x_nchw, p, *, inp, oup, stride, expand_ratio):
    assert stride in (1, 2)
    hidden = p["hidden"]
    has_expand = expand_ratio != 1
    use_res = stride == 1 and inp == oup
    if not has_expand:
        assert hidden == inp

    N, _, H, W = x_nchw.shape
    Cp = _round_up(inp, _LANE)
    Kp = _round_up(hidden, _LANE)
    out_h = (H + 2 - 3) // stride + 1
    f32 = jnp.float32

    # NCHW -> NHWC + channel pad to 128 lanes (kept lane-dense; a full network
    # would carry this padded layout between blocks so the pad is one-time).
    x = jnp.transpose(x_nchw, (0, 2, 3, 1)).astype(f32)
    x = jnp.pad(x, ((0, 0), (0, 0), (0, 0), (0, Cp - inp)))

    def pad2(a, r, c):
        a = a.astype(f32)
        return jnp.pad(a, ((0, r - a.shape[0]), (0, c - a.shape[1])))

    args = [x]
    in_specs = [pl.BlockSpec((None, H, W, Cp), lambda n: (n, 0, 0, 0))]

    if has_expand:
        s1, b1 = fold_bn(p["bn_exp"])
        w1 = pad2(jnp.transpose(p["w_exp"][:, :, 0, 0]), Cp, Kp)       # (Cp, Kp)
        args += [w1, pad2(s1.reshape(1, -1), 1, Kp), pad2(b1.reshape(1, -1), 1, Kp)]
        in_specs += [pl.BlockSpec((Cp, Kp), lambda n: (0, 0)),
                     pl.BlockSpec((1, Kp), lambda n: (0, 0)),
                     pl.BlockSpec((1, Kp), lambda n: (0, 0))]

    s2, b2 = fold_bn(p["bn_dw"])
    wdw = jnp.transpose(p["w_dw"][:, 0], (1, 2, 0)).reshape(9, hidden)  # (9, hid)
    args += [pad2(wdw, 9, Kp),
             pad2(s2.reshape(1, -1), 1, Kp), pad2(b2.reshape(1, -1), 1, Kp)]
    in_specs += [pl.BlockSpec((9, Kp), lambda n: (0, 0)),
                 pl.BlockSpec((1, Kp), lambda n: (0, 0)),
                 pl.BlockSpec((1, Kp), lambda n: (0, 0))]

    s3, b3 = fold_bn(p["bn_proj"])
    # Projection: K padded to Kp with zero rows, output channels UNPADDED so
    # the kernel writes only the useful bytes to HBM.
    w3 = pad2(jnp.transpose(p["w_proj"][:, :, 0, 0]), Kp, oup)          # (Kp, oup)
    args += [w3, s3.reshape(1, -1).astype(f32), b3.reshape(1, -1).astype(f32)]
    in_specs += [pl.BlockSpec((Kp, oup), lambda n: (0, 0)),
                 pl.BlockSpec((1, oup), lambda n: (0, 0)),
                 pl.BlockSpec((1, oup), lambda n: (0, 0))]

    kernel = functools.partial(
        _inverted_residual_kernel,
        H=H, W=W, out_h=out_h, stride=stride,
        has_expand=has_expand, use_res=use_res)

    # Kernel output: NHWC, UNPADDED channels; stride-2 keeps full W columns
    # (subsampled below on this small unpadded array).
    out_p = pl.pallas_call(
        kernel,
        out_shape=jax.ShapeDtypeStruct((N, out_h, W, oup), x.dtype),
        grid_spec=pltpu.PrefetchScalarGridSpec(
            num_scalar_prefetch=0,
            grid=(N,),
            in_specs=in_specs,
            out_specs=pl.BlockSpec((None, out_h, W, oup), lambda n: (n, 0, 0, 0)),
            scratch_shapes=[pltpu.VMEM((H + 2, W + 2 * _WL, Kp), jnp.float32)],
        ),
        compiler_params=pltpu.CompilerParams(dimension_semantics=("parallel",)),
    )(*args)

    if stride == 2:
        out_p = out_p[:, :, ::2, :]
    return jnp.transpose(out_p, (0, 3, 1, 2))                           # -> NCHW


# ---------------------------------------------------------------------------
# Pure-JAX reference (eval-mode BatchNorm) for verification.
# ---------------------------------------------------------------------------
def ref_inverted_residual(x, p, *, inp, oup, stride, expand_ratio, eps=1e-5):
    hidden = p["hidden"]

    def bn_apply(y, bn):
        sh = (1, -1, 1, 1)
        return ((y - bn["mean"].reshape(sh))
                / jnp.sqrt(bn["var"].reshape(sh) + eps)
                * bn["gamma"].reshape(sh) + bn["beta"].reshape(sh))

    def conv(y, w, stride=1, pad=0, groups=1):
        return lax.conv_general_dilated(
            y, w, window_strides=(stride, stride),
            padding=[(pad, pad), (pad, pad)],
            dimension_numbers=("NCHW", "OIHW", "NCHW"),
            feature_group_count=groups)

    h = x
    if expand_ratio != 1:
        h = jnp.clip(bn_apply(conv(h, p["w_exp"]), p["bn_exp"]), 0.0, 6.0)
    h = jnp.clip(bn_apply(conv(h, p["w_dw"], stride=stride, pad=1, groups=hidden),
                          p["bn_dw"]), 0.0, 6.0)
    h = bn_apply(conv(h, p["w_proj"]), p["bn_proj"])
    if stride == 1 and inp == oup:
        h = x + h
    return h


if __name__ == "__main__":
    N, H, W = 2, 16, 16
    configs = [
        # Matches the spec's default usage: residual active, expand_ratio=6.
        dict(inp=4, oup=4, stride=1, expand_ratio=6),
        # stride-2 path (no residual), different oup.
        dict(inp=4, oup=8, stride=2, expand_ratio=6),
        # expand_ratio=1 path (no expansion conv), residual active.
        dict(inp=8, oup=8, stride=1, expand_ratio=1),
    ]

    key = jax.random.PRNGKey(0)
    for cfg in configs:
        key, kx, kp = jax.random.split(key, 3)
        x = jax.random.normal(kx, (N, cfg["inp"], H, W), jnp.float32)
        params = init_params(kp, cfg["inp"], cfg["oup"], cfg["expand_ratio"])

        out = inverted_residual_forward(x, params, **cfg)
        out = jax.block_until_ready(out)

        ref = ref_inverted_residual(x, params, **cfg)
        assert out.shape == ref.shape, (cfg, out.shape, ref.shape)
        max_err = float(jnp.max(jnp.abs(out - ref)))
        assert jnp.allclose(out, ref, atol=3e-3, rtol=3e-3), (cfg, max_err)

    print("KERNEL_OK")
</pallas_src>

<mosaic_0001>
module attributes {stable_mosaic.version = 11 : i64} {
  func.func @_inverted_residual_kernel(%arg0: i32, %arg1: memref<1x16x16x128xf32, #tpu.memory_space<vmem>>, %arg2: memref<128x128xf32, #tpu.memory_space<vmem>>, %arg3: memref<1x128xf32, #tpu.memory_space<vmem>>, %arg4: memref<1x128xf32, #tpu.memory_space<vmem>>, %arg5: memref<9x128xf32, #tpu.memory_space<vmem>>, %arg6: memref<1x128xf32, #tpu.memory_space<vmem>>, %arg7: memref<1x128xf32, #tpu.memory_space<vmem>>, %arg8: memref<128x4xf32, #tpu.memory_space<vmem>>, %arg9: memref<1x4xf32, #tpu.memory_space<vmem>>, %arg10: memref<1x4xf32, #tpu.memory_space<vmem>>, %arg11: memref<1x16x16x4xf32, #tpu.memory_space<vmem>>, %arg12: memref<18x32x128xf32, #tpu.memory_space<vmem>>) attributes {dimension_semantics = [#tpu.dimension_semantics<parallel>], iteration_bounds = array<i64: 2>, scalar_prefetch = 0 : i64, scratch_operands = 1 : i64, tpu.core_type = #tpu.core_type<tc>, window_params = [{transform_indices = @transform_0, window_bounds = array<i64: 1, 16, 16, 128>}, {pipeline_mode = #tpu.pipeline_mode<synchronous>, transform_indices = @transform_1, window_bounds = array<i64: 128, 128>}, {pipeline_mode = #tpu.pipeline_mode<synchronous>, transform_indices = @transform_2, window_bounds = array<i64: 1, 128>}, {pipeline_mode = #tpu.pipeline_mode<synchronous>, transform_indices = @transform_3, window_bounds = array<i64: 1, 128>}, {pipeline_mode = #tpu.pipeline_mode<synchronous>, transform_indices = @transform_4, window_bounds = array<i64: 9, 128>}, {pipeline_mode = #tpu.pipeline_mode<synchronous>, transform_indices = @transform_5, window_bounds = array<i64: 1, 128>}, {pipeline_mode = #tpu.pipeline_mode<synchronous>, transform_indices = @transform_6, window_bounds = array<i64: 1, 128>}, {pipeline_mode = #tpu.pipeline_mode<synchronous>, transform_indices = @transform_7, window_bounds = array<i64: 128, 4>}, {pipeline_mode = #tpu.pipeline_mode<synchronous>, transform_indices = @transform_8, window_bounds = array<i64: 1, 4>}, {pipeline_mode = #tpu.pipeline_mode<synchronous>, transform_indices = @transform_9, window_bounds = array<i64: 1, 4>}, {transform_indices = @transform_10, window_bounds = array<i64: 1, 16, 16, 4>}]} {
    %c0 = arith.constant 0 : index
    %c0_0 = arith.constant 0 : index
    %0 = vector.load %arg5[%c0, %c0_0] : memref<9x128xf32, #tpu.memory_space<vmem>>, vector<1x128xf32>
    %c1 = arith.constant 1 : index
    %c0_1 = arith.constant 0 : index
    %1 = vector.load %arg5[%c1, %c0_1] : memref<9x128xf32, #tpu.memory_space<vmem>>, vector<1x128xf32>
    %c2 = arith.constant 2 : index
    %c0_2 = arith.constant 0 : index
    %2 = vector.load %arg5[%c2, %c0_2] : memref<9x128xf32, #tpu.memory_space<vmem>>, vector<1x128xf32>
    %c3 = arith.constant 3 : index
    %c0_3 = arith.constant 0 : index
    %3 = vector.load %arg5[%c3, %c0_3] : memref<9x128xf32, #tpu.memory_space<vmem>>, vector<1x128xf32>
    %c4 = arith.constant 4 : index
    %c0_4 = arith.constant 0 : index
    %4 = vector.load %arg5[%c4, %c0_4] : memref<9x128xf32, #tpu.memory_space<vmem>>, vector<1x128xf32>
    %c5 = arith.constant 5 : index
    %c0_5 = arith.constant 0 : index
    %5 = vector.load %arg5[%c5, %c0_5] : memref<9x128xf32, #tpu.memory_space<vmem>>, vector<1x128xf32>
    %c6 = arith.constant 6 : index
    %c0_6 = arith.constant 0 : index
    %6 = vector.load %arg5[%c6, %c0_6] : memref<9x128xf32, #tpu.memory_space<vmem>>, vector<1x128xf32>
    %c7 = arith.constant 7 : index
    %c0_7 = arith.constant 0 : index
    %7 = vector.load %arg5[%c7, %c0_7] : memref<9x128xf32, #tpu.memory_space<vmem>>, vector<1x128xf32>
    %c8 = arith.constant 8 : index
    %c0_8 = arith.constant 0 : index
    %8 = vector.load %arg5[%c8, %c0_8] : memref<9x128xf32, #tpu.memory_space<vmem>>, vector<1x128xf32>
    %c0_9 = arith.constant 0 : index
    %c0_10 = arith.constant 0 : index
    %9 = vector.load %arg6[%c0_9, %c0_10] : memref<1x128xf32, #tpu.memory_space<vmem>>, vector<1x128xf32>
    %c0_11 = arith.constant 0 : index
    %c0_12 = arith.constant 0 : index
    %10 = vector.load %arg7[%c0_11, %c0_12] : memref<1x128xf32, #tpu.memory_space<vmem>>, vector<1x128xf32>
    %c0_13 = arith.constant 0 : index
    %c0_14 = arith.constant 0 : index
    %11 = vector.load %arg8[%c0_13, %c0_14] : memref<128x4xf32, #tpu.memory_space<vmem>>, vector<128x4xf32>
    %c0_15 = arith.constant 0 : index
    %c0_16 = arith.constant 0 : index
    %12 = vector.load %arg9[%c0_15, %c0_16] : memref<1x4xf32, #tpu.memory_space<vmem>>, vector<1x4xf32>
    %c0_17 = arith.constant 0 : index
    %c0_18 = arith.constant 0 : index
    %13 = vector.load %arg10[%c0_17, %c0_18] : memref<1x4xf32, #tpu.memory_space<vmem>>, vector<1x4xf32>
    %c0_19 = arith.constant 0 : index
    %c0_20 = arith.constant 0 : index
    %14 = vector.load %arg2[%c0_19, %c0_20] : memref<128x128xf32, #tpu.memory_space<vmem>>, vector<128x128xf32>
    %c0_21 = arith.constant 0 : index
    %c0_22 = arith.constant 0 : index
    %15 = vector.load %arg3[%c0_21, %c0_22] : memref<1x128xf32, #tpu.memory_space<vmem>>, vector<1x128xf32>
    %c0_23 = arith.constant 0 : index
    %c0_24 = arith.constant 0 : index
    %16 = vector.load %arg4[%c0_23, %c0_24] : memref<1x128xf32, #tpu.memory_space<vmem>>, vector<1x128xf32>
    %cst = arith.constant 0.000000e+00 : f32
    %17 = vector.broadcast %cst : f32 to vector<1x32x128xf32>
    %c0_25 = arith.constant 0 : index
    %c0_26 = arith.constant 0 : index
    %c0_27 = arith.constant 0 : index
    %18 = vector.load %arg12[%c0_25, %c0_26, %c0_27] : memref<18x32x128xf32, #tpu.memory_space<vmem>>, vector<1x32x128xf32>
    tpu.vector_store %arg12[%c0_25, %c0_26, %c0_27], %17 {strides = array<i32>} : memref<18x32x128xf32, #tpu.memory_space<vmem>>, vector<1x32x128xf32>,
    %c17 = arith.constant 17 : index
    %c0_28 = arith.constant 0 : index
    %c0_29 = arith.constant 0 : index
    %19 = vector.load %arg12[%c17, %c0_28, %c0_29] : memref<18x32x128xf32, #tpu.memory_space<vmem>>, vector<1x32x128xf32>
    tpu.vector_store %arg12[%c17, %c0_28, %c0_29], %17 {strides = array<i32>} : memref<18x32x128xf32, #tpu.memory_space<vmem>>, vector<1x32x128xf32>,
    %cst_30 = arith.constant 0.000000e+00 : f32
    %20 = vector.broadcast %cst_30 : f32 to vector<18x1x128xf32>
    %c0_31 = arith.constant 0 : index
    %c7_32 = arith.constant 7 : index
    %c0_33 = arith.constant 0 : index
    %21 = vector.load %arg12[%c0_31, %c7_32, %c0_33] : memref<18x32x128xf32, #tpu.memory_space<vmem>>, vector<18x1x128xf32>
    tpu.vector_store %arg12[%c0_31, %c7_32, %c0_33], %20 {strides = array<i32>} : memref<18x32x128xf32, #tpu.memory_space<vmem>>, vector<18x1x128xf32>,
    %c0_34 = arith.constant 0 : index
    %c24 = arith.constant 24 : index
    %c0_35 = arith.constant 0 : index
    %22 = vector.load %arg12[%c0_34, %c24, %c0_35] : memref<18x32x128xf32, #tpu.memory_space<vmem>>, vector<18x1x128xf32>
    tpu.vector_store %arg12[%c0_34, %c24, %c0_35], %20 {strides = array<i32>} : memref<18x32x128xf32, #tpu.memory_space<vmem>>, vector<18x1x128xf32>,
    %c0_i32 = arith.constant 0 : i32
    %c8_i32 = arith.constant 8 : i32
    %23 = arith.muli %c0_i32, %c8_i32 : i32
    %24 = tpu.assume_multiple %23, 8 : i32
    %c0_36 = arith.constant 0 : index
    %25 = arith.index_cast %24 : i32 to index
    %c0_37 = arith.constant 0 : index
    %c0_38 = arith.constant 0 : index
    %26 = vector.load %arg1[%c0_36, %25, %c0_37, %c0_38] : memref<1x16x16x128xf32, #tpu.memory_space<vmem>>, vector<1x8x16x128xf32>
    %27 = vector.shape_cast %26 : vector<1x8x16x128xf32> to vector<8x16x128xf32>
    %28 = vector.shape_cast %27 : vector<8x16x128xf32> to vector<128x128xf32>
    %cst_39 = arith.constant dense<0.000000e+00> : vector<128x128xf32>
    %29 = tpu.matmul %28, %14, %cst_39 {dimension_numbers = #tpu.dot_dimension_numbers<[1], [0], [0], [1], [0, 0, 1, 1], [], []>} : vector<128x128xf32>, vector<128x128xf32>, vector<128x128xf32> -> vector<128x128xf32>
    %30 = vector.broadcast %15 : vector<1x128xf32> to vector<128x128xf32>
    %31 = arith.mulf %29, %30 : vector<128x128xf32>
    %32 = vector.broadcast %16 : vector<1x128xf32> to vector<128x128xf32>
    %33 = arith.addf %31, %32 : vector<128x128xf32>
    %cst_40 = arith.constant 0.000000e+00 : f32
    %cst_41 = arith.constant 6.000000e+00 : f32
    %34 = vector.broadcast %cst_40 : f32 to vector<128x128xf32>
    %35 = arith.maximumf %34, %33 : vector<128x128xf32>
    %36 = vector.broadcast %cst_41 : f32 to vector<128x128xf32>
    %37 = arith.minimumf %36, %35 : vector<128x128xf32>
    %38 = vector.shape_cast %37 : vector<128x128xf32> to vector<8x16x128xf32>
    %c1_i32 = arith.constant 1 : i32
    %39 = arith.addi %c1_i32, %24 : i32
    %40 = arith.index_cast %39 : i32 to index
    %c8_42 = arith.constant 8 : index
    %c0_43 = arith.constant 0 : index
    %41 = vector.load %arg12[%40, %c8_42, %c0_43] : memref<18x32x128xf32, #tpu.memory_space<vmem>>, vector<8x16x128xf32>
    tpu.vector_store %arg12[%40, %c8_42, %c0_43], %38 {strides = array<i32>} : memref<18x32x128xf32, #tpu.memory_space<vmem>>, vector<8x16x128xf32>,
    %c1_i32_44 = arith.constant 1 : i32
    %c8_i32_45 = arith.constant 8 : i32
    %42 = arith.muli %c1_i32_44, %c8_i32_45 : i32
    %43 = tpu.assume_multiple %42, 8 : i32
    %c0_46 = arith.constant 0 : index
    %44 = arith.index_cast %43 : i32 to index
    %c0_47 = arith.constant 0 : index
    %c0_48 = arith.constant 0 : index
    %45 = vector.load %arg1[%c0_46, %44, %c0_47, %c0_48] : memref<1x16x16x128xf32, #tpu.memory_space<vmem>>, vector<1x8x16x128xf32>
    %46 = vector.shape_cast %45 : vector<1x8x16x128xf32> to vector<8x16x128xf32>
    %47 = vector.shape_cast %46 : vector<8x16x128xf32> to vector<128x128xf32>
    %cst_49 = arith.constant dense<0.000000e+00> : vector<128x128xf32>
    %48 = tpu.matmul %47, %14, %cst_49 {dimension_numbers = #tpu.dot_dimension_numbers<[1], [0], [0], [1], [0, 0, 1, 1], [], []>} : vector<128x128xf32>, vector<128x128xf32>, vector<128x128xf32> -> vector<128x128xf32>
    %49 = vector.broadcast %15 : vector<1x128xf32> to vector<128x128xf32>
    %50 = arith.mulf %48, %49 : vector<128x128xf32>
    %51 = vector.broadcast %16 : vector<1x128xf32> to vector<128x128xf32>
    %52 = arith.addf %50, %51 : vector<128x128xf32>
    %cst_50 = arith.constant 0.000000e+00 : f32
    %cst_51 = arith.constant 6.000000e+00 : f32
    %53 = vector.broadcast %cst_50 : f32 to vector<128x128xf32>
    %54 = arith.maximumf %53, %52 : vector<128x128xf32>
    %55 = vector.broadcast %cst_51 : f32 to vector<128x128xf32>
    %56 = arith.minimumf %55, %54 : vector<128x128xf32>
    %57 = vector.shape_cast %56 : vector<128x128xf32> to vector<8x16x128xf32>
    %c1_i32_52 = arith.constant 1 : i32
    %58 = arith.addi %c1_i32_52, %43 : i32
    %59 = arith.index_cast %58 : i32 to index
    %c8_53 = arith.constant 8 : index
    %c0_54 = arith.constant 0 : index
    %60 = vector.load %arg12[%59, %c8_53, %c0_54] : memref<18x32x128xf32, #tpu.memory_space<vmem>>, vector<8x16x128xf32>
    tpu.vector_store %arg12[%59, %c8_53, %c0_54], %57 {strides = array<i32>} : memref<18x32x128xf32, #tpu.memory_space<vmem>>, vector<8x16x128xf32>,
    %c2_i32 = arith.constant 2 : i32
    %c0_i32_55 = arith.constant 0 : i32
    %c8_i32_56 = arith.constant 8 : i32
    %61 = arith.muli %c0_i32_55, %c8_i32_56 : i32
    %62 = tpu.assume_multiple %61, 8 : i32
    %cst_57 = arith.constant 0.000000e+00 : f32
    %63 = vector.broadcast %cst_57 : f32 to vector<8x16x128xf32>
    %c0_i32_58 = arith.constant 0 : i32
    %64 = arith.addi %62, %c0_i32_58 : i32
    %65 = arith.index_cast %64 : i32 to index
    %c7_59 = arith.constant 7 : index
    %c0_60 = arith.constant 0 : index
    %66 = vector.load %arg12[%65, %c7_59, %c0_60] : memref<18x32x128xf32, #tpu.memory_space<vmem>>, vector<8x16x128xf32>
    %67 = vector.shape_cast %0 : vector<1x128xf32> to vector<1x1x128xf32>
    %68 = vector.broadcast %67 : vector<1x1x128xf32> to vector<8x16x128xf32>
    %69 = arith.mulf %66, %68 : vector<8x16x128xf32>
    %70 = arith.addf %63, %69 : vector<8x16x128xf32>
    %c0_i32_61 = arith.constant 0 : i32
    %71 = arith.addi %62, %c0_i32_61 : i32
    %72 = arith.index_cast %71 : i32 to index
    %c8_62 = arith.constant 8 : index
    %c0_63 = arith.constant 0 : index
    %73 = vector.load %arg12[%72, %c8_62, %c0_63] : memref<18x32x128xf32, #tpu.memory_space<vmem>>, vector<8x16x128xf32>
    %74 = vector.shape_cast %1 : vector<1x128xf32> to vector<1x1x128xf32>
    %75 = vector.broadcast %74 : vector<1x1x128xf32> to vector<8x16x128xf32>
    %76 = arith.mulf %73, %75 : vector<8x16x128xf32>
    %77 = arith.addf %70, %76 : vector<8x16x128xf32>
    %c0_i32_64 = arith.constant 0 : i32
    %78 = arith.addi %62, %c0_i32_64 : i32
    %79 = arith.index_cast %78 : i32 to index
    %c9 = arith.constant 9 : index
    %c0_65 = arith.constant 0 : index
    %80 = vector.load %arg12[%79, %c9, %c0_65] : memref<18x32x128xf32, #tpu.memory_space<vmem>>, vector<8x16x128xf32>
    %81 = vector.shape_cast %2 : vector<1x128xf32> to vector<1x1x128xf32>
    %82 = vector.broadcast %81 : vector<1x1x128xf32> to vector<8x16x128xf32>
    %83 = arith.mulf %80, %82 : vector<8x16x128xf32>
    %84 = arith.addf %77, %83 : vector<8x16x128xf32>
    %c1_i32_66 = arith.constant 1 : i32
    %85 = arith.addi %62, %c1_i32_66 : i32
    %86 = arith.index_cast %85 : i32 to index
    %c7_67 = arith.constant 7 : index
    %c0_68 = arith.constant 0 : index
    %87 = vector.load %arg12[%86, %c7_67, %c0_68] : memref<18x32x128xf32, #tpu.memory_space<vmem>>, vector<8x16x128xf32>
    %88 = vector.shape_cast %3 : vector<1x128xf32> to vector<1x1x128xf32>
    %89 = vector.broadcast %88 : vector<1x1x128xf32> to vector<8x16x128xf32>
    %90 = arith.mulf %87, %89 : vector<8x16x128xf32>
    %91 = arith.addf %84, %90 : vector<8x16x128xf32>
    %c1_i32_69 = arith.constant 1 : i32
    %92 = arith.addi %62, %c1_i32_69 : i32
    %93 = arith.index_cast %92 : i32 to index
    %c8_70 = arith.constant 8 : index
    %c0_71 = arith.constant 0 : index
    %94 = vector.load %arg12[%93, %c8_70, %c0_71] : memref<18x32x128xf32, #tpu.memory_space<vmem>>, vector<8x16x128xf32>
    %95 = vector.shape_cast %4 : vector<1x128xf32> to vector<1x1x128xf32>
    %96 = vector.broadcast %95 : vector<1x1x128xf32> to vector<8x16x128xf32>
    %97 = arith.mulf %94, %96 : vector<8x16x128xf32>
    %98 = arith.addf %91, %97 : vector<8x16x128xf32>
    %c1_i32_72 = arith.constant 1 : i32
    %99 = arith.addi %62, %c1_i32_72 : i32
    %100 = arith.index_cast %99 : i32 to index
    %c9_73 = arith.constant 9 : index
    %c0_74 = arith.constant 0 : index
    %101 = vector.load %arg12[%100, %c9_73, %c0_74] : memref<18x32x128xf32, #tpu.memory_space<vmem>>, vector<8x16x128xf32>
    %102 = vector.shape_cast %5 : vector<1x128xf32> to vector<1x1x128xf32>
    %103 = vector.broadcast %102 : vector<1x1x128xf32> to vector<8x16x128xf32>
    %104 = arith.mulf %101, %103 : vector<8x16x128xf32>
    %105 = arith.addf %98, %104 : vector<8x16x128xf32>
    %c2_i32_75 = arith.constant 2 : i32
    %106 = arith.addi %62, %c2_i32_75 : i32
    %107 = arith.index_cast %106 : i32 to index
    %c7_76 = arith.constant 7 : index
    %c0_77 = arith.constant 0 : index
    %108 = vector.load %arg12[%107, %c7_76, %c0_77] : memref<18x32x128xf32, #tpu.memory_space<vmem>>, vector<8x16x128xf32>
    %109 = vector.shape_cast %6 : vector<1x128xf32> to vector<1x1x128xf32>
    %110 = vector.broadcast %109 : vector<1x1x128xf32> to vector<8x16x128xf32>
    %111 = arith.mulf %108, %110 : vector<8x16x128xf32>
    %112 = arith.addf %105, %111 : vector<8x16x128xf32>
    %c2_i32_78 = arith.constant 2 : i32
    %113 = arith.addi %62, %c2_i32_78 : i32
    %114 = arith.index_cast %113 : i32 to index
    %c8_79 = arith.constant 8 : index
    %c0_80 = arith.constant 0 : index
    %115 = vector.load %arg12[%114, %c8_79, %c0_80] : memref<18x32x128xf32, #tpu.memory_space<vmem>>, vector<8x16x128xf32>
    %116 = vector.shape_cast %7 : vector<1x128xf32> to vector<1x1x128xf32>
    %117 = vector.broadcast %116 : vector<1x1x128xf32> to vector<8x16x128xf32>
    %118 = arith.mulf %115, %117 : vector<8x16x128xf32>
    %119 = arith.addf %112, %118 : vector<8x16x128xf32>
    %c2_i32_81 = arith.constant 2 : i32
    %120 = arith.addi %62, %c2_i32_81 : i32
    %121 = arith.index_cast %120 : i32 to index
    %c9_82 = arith.constant 9 : index
    %c0_83 = arith.constant 0 : index
    %122 = vector.load %arg12[%121, %c9_82, %c0_83] : memref<18x32x128xf32, #tpu.memory_space<vmem>>, vector<8x16x128xf32>
    %123 = vector.shape_cast %8 : vector<1x128xf32> to vector<1x1x128xf32>
    %124 = vector.broadcast %123 : vector<1x1x128xf32> to vector<8x16x128xf32>
    %125 = arith.mulf %122, %124 : vector<8x16x128xf32>
    %126 = arith.addf %119, %125 : vector<8x16x128xf32>
    %127 = vector.shape_cast %126 : vector<8x16x128xf32> to vector<128x128xf32>
    %128 = vector.broadcast %9 : vector<1x128xf32> to vector<128x128xf32>
    %129 = arith.mulf %127, %128 : vector<128x128xf32>
    %130 = vector.broadcast %10 : vector<1x128xf32> to vector<128x128xf32>
    %131 = arith.addf %129, %130 : vector<128x128xf32>
    %cst_84 = arith.constant 0.000000e+00 : f32
    %cst_85 = arith.constant 6.000000e+00 : f32
    %132 = vector.broadcast %cst_84 : f32 to vector<128x128xf32>
    %133 = arith.maximumf %132, %131 : vector<128x128xf32>
    %134 = vector.broadcast %cst_85 : f32 to vector<128x128xf32>
    %135 = arith.minimumf %134, %133 : vector<128x128xf32>
    %cst_86 = arith.constant dense<0.000000e+00> : vector<128x4xf32>
    %136 = tpu.matmul %135, %11, %cst_86 {dimension_numbers = #tpu.dot_dimension_numbers<[1], [0], [0], [1], [0, 0, 1, 1], [], []>} : vector<128x128xf32>, vector<128x4xf32>, vector<128x4xf32> -> vector<128x4xf32>
    %137 = vector.broadcast %12 : vector<1x4xf32> to vector<128x4xf32>
    %138 = arith.mulf %136, %137 : vector<128x4xf32>
    %139 = vector.broadcast %13 : vector<1x4xf32> to vector<128x4xf32>
    %140 = arith.addf %138, %139 : vector<128x4xf32>
    %c0_87 = arith.constant 0 : index
    %141 = arith.index_cast %62 : i32 to index
    %c0_88 = arith.constant 0 : index
    %c0_89 = arith.constant 0 : index
    %142 = vector.load %arg1[%c0_87, %141, %c0_88, %c0_89] : memref<1x16x16x128xf32, #tpu.memory_space<vmem>>, vector<1x8x16x128xf32>
    %143 = vector.shape_cast %142 : vector<1x8x16x128xf32> to vector<8x16x128xf32>
    %144 = vector.extract_strided_slice %143 {offsets = [0, 0, 0], sizes = [8, 16, 4], strides = [1, 1, 1]} : vector<8x16x128xf32> to vector<8x16x4xf32>
    %145 = vector.shape_cast %144 : vector<8x16x4xf32> to vector<128x4xf32>
    %146 = arith.addf %140, %145 : vector<128x4xf32>
    %147 = vector.shape_cast %146 : vector<128x4xf32> to vector<8x16x4xf32>
    %c0_90 = arith.constant 0 : index
    %148 = arith.index_cast %62 : i32 to index
    %c0_91 = arith.constant 0 : index
    %c0_92 = arith.constant 0 : index
    %149 = vector.load %arg11[%c0_90, %148, %c0_91, %c0_92] : memref<1x16x16x4xf32, #tpu.memory_space<vmem>>, vector<1x8x16x4xf32>
    %150 = vector.shape_cast %149 : vector<1x8x16x4xf32> to vector<8x16x4xf32>
    %151 = vector.shape_cast %147 : vector<8x16x4xf32> to vector<1x8x16x4xf32>
    tpu.vector_store %arg11[%c0_90, %148, %c0_91, %c0_92], %151 {strides = array<i32>} : memref<1x16x16x4xf32, #tpu.memory_space<vmem>>, vector<1x8x16x4xf32>,
    %c1_i32_93 = arith.constant 1 : i32
    %c8_i32_94 = arith.constant 8 : i32
    %152 = arith.muli %c1_i32_93, %c8_i32_94 : i32
    %153 = tpu.assume_multiple %152, 8 : i32
    %cst_95 = arith.constant 0.000000e+00 : f32
    %154 = vector.broadcast %cst_95 : f32 to vector<8x16x128xf32>
    %c0_i32_96 = arith.constant 0 : i32
    %155 = arith.addi %153, %c0_i32_96 : i32
    %156 = arith.index_cast %155 : i32 to index
    %c7_97 = arith.constant 7 : index
    %c0_98 = arith.constant 0 : index
    %157 = vector.load %arg12[%156, %c7_97, %c0_98] : memref<18x32x128xf32, #tpu.memory_space<vmem>>, vector<8x16x128xf32>
    %158 = vector.shape_cast %0 : vector<1x128xf32> to vector<1x1x128xf32>
    %159 = vector.broadcast %158 : vector<1x1x128xf32> to vector<8x16x128xf32>
    %160 = arith.mulf %157, %159 : vector<8x16x128xf32>
    %161 = arith.addf %154, %160 : vector<8x16x128xf32>
    %c0_i32_99 = arith.constant 0 : i32
    %162 = arith.addi %153, %c0_i32_99 : i32
    %163 = arith.index_cast %162 : i32 to index
    %c8_100 = arith.constant 8 : index
    %c0_101 = arith.constant 0 : index
    %164 = vector.load %arg12[%163, %c8_100, %c0_101] : memref<18x32x128xf32, #tpu.memory_space<vmem>>, vector<8x16x128xf32>
    %165 = vector.shape_cast %1 : vector<1x128xf32> to vector<1x1x128xf32>
    %166 = vector.broadcast %165 : vector<1x1x128xf32> to vector<8x16x128xf32>
    %167 = arith.mulf %164, %166 : vector<8x16x128xf32>
    %168 = arith.addf %161, %167 : vector<8x16x128xf32>
    %c0_i32_102 = arith.constant 0 : i32
    %169 = arith.addi %153, %c0_i32_102 : i32
    %170 = arith.index_cast %169 : i32 to index
    %c9_103 = arith.constant 9 : index
    %c0_104 = arith.constant 0 : index
    %171 = vector.load %arg12[%170, %c9_103, %c0_104] : memref<18x32x128xf32, #tpu.memory_space<vmem>>, vector<8x16x128xf32>
    %172 = vector.shape_cast %2 : vector<1x128xf32> to vector<1x1x128xf32>
    %173 = vector.broadcast %172 : vector<1x1x128xf32> to vector<8x16x128xf32>
    %174 = arith.mulf %171, %173 : vector<8x16x128xf32>
    %175 = arith.addf %168, %174 : vector<8x16x128xf32>
    %c1_i32_105 = arith.constant 1 : i32
    %176 = arith.addi %153, %c1_i32_105 : i32
    %177 = arith.index_cast %176 : i32 to index
    %c7_106 = arith.constant 7 : index
    %c0_107 = arith.constant 0 : index
    %178 = vector.load %arg12[%177, %c7_106, %c0_107] : memref<18x32x128xf32, #tpu.memory_space<vmem>>, vector<8x16x128xf32>
    %179 = vector.shape_cast %3 : vector<1x128xf32> to vector<1x1x128xf32>
    %180 = vector.broadcast %179 : vector<1x1x128xf32> to vector<8x16x128xf32>
    %181 = arith.mulf %178, %180 : vector<8x16x128xf32>
    %182 = arith.addf %175, %181 : vector<8x16x128xf32>
    %c1_i32_108 = arith.constant 1 : i32
    %183 = arith.addi %153, %c1_i32_108 : i32
    %184 = arith.index_cast %183 : i32 to index
    %c8_109 = arith.constant 8 : index
    %c0_110 = arith.constant 0 : index
    %185 = vector.load %arg12[%184, %c8_109, %c0_110] : memref<18x32x128xf32, #tpu.memory_space<vmem>>, vector<8x16x128xf32>
    %186 = vector.shape_cast %4 : vector<1x128xf32> to vector<1x1x128xf32>
    %187 = vector.broadcast %186 : vector<1x1x128xf32> to vector<8x16x128xf32>
    %188 = arith.mulf %185, %187 : vector<8x16x128xf32>
    %189 = arith.addf %182, %188 : vector<8x16x128xf32>
    %c1_i32_111 = arith.constant 1 : i32
    %190 = arith.addi %153, %c1_i32_111 : i32
    %191 = arith.index_cast %190 : i32 to index
    %c9_112 = arith.constant 9 : index
    %c0_113 = arith.constant 0 : index
    %192 = vector.load %arg12[%191, %c9_112, %c0_113] : memref<18x32x128xf32, #tpu.memory_space<vmem>>, vector<8x16x128xf32>
    %193 = vector.shape_cast %5 : vector<1x128xf32> to vector<1x1x128xf32>
    %194 = vector.broadcast %193 : vector<1x1x128xf32> to vector<8x16x128xf32>
    %195 = arith.mulf %192, %194 : vector<8x16x128xf32>
    %196 = arith.addf %189, %195 : vector<8x16x128xf32>
    %c2_i32_114 = arith.constant 2 : i32
    %197 = arith.addi %153, %c2_i32_114 : i32
    %198 = arith.index_cast %197 : i32 to index
    %c7_115 = arith.constant 7 : index
    %c0_116 = arith.constant 0 : index
    %199 = vector.load %arg12[%198, %c7_115, %c0_116] : memref<18x32x128xf32, #tpu.memory_space<vmem>>, vector<8x16x128xf32>
    %200 = vector.shape_cast %6 : vector<1x128xf32> to vector<1x1x128xf32>
    %201 = vector.broadcast %200 : vector<1x1x128xf32> to vector<8x16x128xf32>
    %202 = arith.mulf %199, %201 : vector<8x16x128xf32>
    %203 = arith.addf %196, %202 : vector<8x16x128xf32>
    %c2_i32_117 = arith.constant 2 : i32
    %204 = arith.addi %153, %c2_i32_117 : i32
    %205 = arith.index_cast %204 : i32 to index
    %c8_118 = arith.constant 8 : index
    %c0_119 = arith.constant 0 : index
    %206 = vector.load %arg12[%205, %c8_118, %c0_119] : memref<18x32x128xf32, #tpu.memory_space<vmem>>, vector<8x16x128xf32>
    %207 = vector.shape_cast %7 : vector<1x128xf32> to vector<1x1x128xf32>
    %208 = vector.broadcast %207 : vector<1x1x128xf32> to vector<8x16x128xf32>
    %209 = arith.mulf %206, %208 : vector<8x16x128xf32>
    %210 = arith.addf %203, %209 : vector<8x16x128xf32>
    %c2_i32_120 = arith.constant 2 : i32
    %211 = arith.addi %153, %c2_i32_120 : i32
    %212 = arith.index_cast %211 : i32 to index
    %c9_121 = arith.constant 9 : index
    %c0_122 = arith.constant 0 : index
    %213 = vector.load %arg12[%212, %c9_121, %c0_122] : memref<18x32x128xf32, #tpu.memory_space<vmem>>, vector<8x16x128xf32>
    %214 = vector.shape_cast %8 : vector<1x128xf32> to vector<1x1x128xf32>
    %215 = vector.broadcast %214 : vector<1x1x128xf32> to vector<8x16x128xf32>
    %216 = arith.mulf %213, %215 : vector<8x16x128xf32>
    %217 = arith.addf %210, %216 : vector<8x16x128xf32>
    %218 = vector.shape_cast %217 : vector<8x16x128xf32> to vector<128x128xf32>
    %219 = vector.broadcast %9 : vector<1x128xf32> to vector<128x128xf32>
    %220 = arith.mulf %218, %219 : vector<128x128xf32>
    %221 = vector.broadcast %10 : vector<1x128xf32> to vector<128x128xf32>
    %222 = arith.addf %220, %221 : vector<128x128xf32>
    %cst_123 = arith.constant 0.000000e+00 : f32
    %cst_124 = arith.constant 6.000000e+00 : f32
    %223 = vector.broadcast %cst_123 : f32 to vector<128x128xf32>
    %224 = arith.maximumf %223, %222 : vector<128x128xf32>
    %225 = vector.broadcast %cst_124 : f32 to vector<128x128xf32>
    %226 = arith.minimumf %225, %224 : vector<128x128xf32>
    %cst_125 = arith.constant dense<0.000000e+00> : vector<128x4xf32>
    %227 = tpu.matmul %226, %11, %cst_125 {dimension_numbers = #tpu.dot_dimension_numbers<[1], [0], [0], [1], [0, 0, 1, 1], [], []>} : vector<128x128xf32>, vector<128x4xf32>, vector<128x4xf32> -> vector<128x4xf32>
    %228 = vector.broadcast %12 : vector<1x4xf32> to vector<128x4xf32>
    %229 = arith.mulf %227, %228 : vector<128x4xf32>
    %230 = vector.broadcast %13 : vector<1x4xf32> to vector<128x4xf32>
    %231 = arith.addf %229, %230 : vector<128x4xf32>
    %c0_126 = arith.constant 0 : index
    %232 = arith.index_cast %153 : i32 to index
    %c0_127 = arith.constant 0 : index
    %c0_128 = arith.constant 0 : index
    %233 = vector.load %arg1[%c0_126, %232, %c0_127, %c0_128] : memref<1x16x16x128xf32, #tpu.memory_space<vmem>>, vector<1x8x16x128xf32>
    %234 = vector.shape_cast %233 : vector<1x8x16x128xf32> to vector<8x16x128xf32>
    %235 = vector.extract_strided_slice %234 {offsets = [0, 0, 0], sizes = [8, 16, 4], strides = [1, 1, 1]} : vector<8x16x128xf32> to vector<8x16x4xf32>
    %236 = vector.shape_cast %235 : vector<8x16x4xf32> to vector<128x4xf32>
    %237 = arith.addf %231, %236 : vector<128x4xf32>
    %238 = vector.shape_cast %237 : vector<128x4xf32> to vector<8x16x4xf32>
    %c0_129 = arith.constant 0 : index
    %239 = arith.index_cast %153 : i32 to index
    %c0_130 = arith.constant 0 : index
    %c0_131 = arith.constant 0 : index
    %240 = vector.load %arg11[%c0_129, %239, %c0_130, %c0_131] : memref<1x16x16x4xf32, #tpu.memory_space<vmem>>, vector<1x8x16x4xf32>
    %241 = vector.shape_cast %240 : vector<1x8x16x4xf32> to vector<8x16x4xf32>
    %242 = vector.shape_cast %238 : vector<8x16x4xf32> to vector<1x8x16x4xf32>
    tpu.vector_store %arg11[%c0_129, %239, %c0_130, %c0_131], %242 {strides = array<i32>} : memref<1x16x16x4xf32, #tpu.memory_space<vmem>>, vector<1x8x16x4xf32>,
    %c2_i32_132 = arith.constant 2 : i32
    return
  }
  func.func @transform_0(%arg0: i32) -> (i32, i32, i32, i32) {
    %c0_i32 = arith.constant 0 : i32
    %c0_i32_0 = arith.constant 0 : i32
    %c0_i32_1 = arith.constant 0 : i32
    %c0_i32_2 = arith.constant 0 : i32
    return %arg0, %c0_i32, %c0_i32_0, %c0_i32_1 : i32, i32, i32, i32
  }
  func.func @transform_1(%arg0: i32) -> (i32, i32) {
    %c0_i32 = arith.constant 0 : i32
    %c0_i32_0 = arith.constant 0 : i32
    %c0_i32_1 = arith.constant 0 : i32
    return %c0_i32, %c0_i32_0 : i32, i32
  }
  func.func @transform_2(%arg0: i32) -> (i32, i32) {
    %c0_i32 = arith.constant 0 : i32
    %c0_i32_0 = arith.constant 0 : i32
    %c0_i32_1 = arith.constant 0 : i32
    return %c0_i32, %c0_i32_0 : i32, i32
  }
  func.func @transform_3(%arg0: i32) -> (i32, i32) {
    %c0_i32 = arith.constant 0 : i32
    %c0_i32_0 = arith.constant 0 : i32
    %c0_i32_1 = arith.constant 0 : i32
    return %c0_i32, %c0_i32_0 : i32, i32
  }
  func.func @transform_4(%arg0: i32) -> (i32, i32) {
    %c0_i32 = arith.constant 0 : i32
    %c0_i32_0 = arith.constant 0 : i32
    %c0_i32_1 = arith.constant 0 : i32
    return %c0_i32, %c0_i32_0 : i32, i32
  }
  func.func @transform_5(%arg0: i32) -> (i32, i32) {
    %c0_i32 = arith.constant 0 : i32
    %c0_i32_0 = arith.constant 0 : i32
    %c0_i32_1 = arith.constant 0 : i32
    return %c0_i32, %c0_i32_0 : i32, i32
  }
  func.func @transform_6(%arg0: i32) -> (i32, i32) {
    %c0_i32 = arith.constant 0 : i32
    %c0_i32_0 = arith.constant 0 : i32
    %c0_i32_1 = arith.constant 0 : i32
    return %c0_i32, %c0_i32_0 : i32, i32
  }
  func.func @transform_7(%arg0: i32) -> (i32, i32) {
    %c0_i32 = arith.constant 0 : i32
    %c0_i32_0 = arith.constant 0 : i32
    %c0_i32_1 = arith.constant 0 : i32
    return %c0_i32, %c0_i32_0 : i32, i32
  }
  func.func @transform_8(%arg0: i32) -> (i32, i32) {
    %c0_i32 = arith.constant 0 : i32
    %c0_i32_0 = arith.constant 0 : i32
    %c0_i32_1 = arith.constant 0 : i32
    return %c0_i32, %c0_i32_0 : i32, i32
  }
  func.func @transform_9(%arg0: i32) -> (i32, i32) {
    %c0_i32 = arith.constant 0 : i32
    %c0_i32_0 = arith.constant 0 : i32
    %c0_i32_1 = arith.constant 0 : i32
    return %c0_i32, %c0_i32_0 : i32, i32
  }
  func.func @transform_10(%arg0: i32) -> (i32, i32, i32, i32) {
    %c0_i32 = arith.constant 0 : i32
    %c0_i32_0 = arith.constant 0 : i32
    %c0_i32_1 = arith.constant 0 : i32
    %c0_i32_2 = arith.constant 0 : i32
    return %arg0, %c0_i32, %c0_i32_0, %c0_i32_1 : i32, i32, i32, i32
  }
}

</mosaic_0001>

<llo_original>
// kernel: tpu_custom_call.1
$region0: #{tpu_custom_call.1}
  #allocation0 [shape = 'u32[]', space=smem, size = 0x4, offset = 0x4, fixed_abs, tag = 'smem constant byte address 0x4 - core index']
  #allocation1 [shape = 'u32[144,128]{1,0:T(1,128)}', space=vmem, size = 0x12000, scoped, tag = 'internal scratch']
  #allocation2 [shape = 'f32[18,32,128]{2,1,0:T(8,128)}', space=vmem, size = 0x48000, scoped, tag = 'scratch operand']
  %s0 = inlined_call_operand.hbm [shape: f32[2,16,16,128], index: 0, kind: input, shape index: {}]
  %s1 = inlined_call_operand.vmem [shape: f32[128,128], index: 1, kind: input, shape index: {}]
  %s2 = inlined_call_operand.vmem [shape: f32[1,128], index: 2, kind: input, shape index: {}]
  %s3 = inlined_call_operand.vmem [shape: f32[1,128], index: 3, kind: input, shape index: {}]
  %s4 = inlined_call_operand.vmem [shape: f32[9,128], index: 4, kind: input, shape index: {}]
  %s5 = inlined_call_operand.hbm [shape: f32[1,128], index: 5, kind: input, shape index: {}]
  %s6 = inlined_call_operand.vmem [shape: f32[1,128], index: 6, kind: input, shape index: {}]
  %s7 = inlined_call_operand.vmem [shape: f32[128,4], index: 7, kind: input, shape index: {}]
  %s8 = inlined_call_operand.vmem [shape: f32[1,4], index: 8, kind: input, shape index: {}]
  %s9 = inlined_call_operand.vmem [shape: f32[1,4], index: 9, kind: input, shape index: {}]
  %s10 = inlined_call_operand.vmem [shape: f32[2,16,16,4], index: 10, kind: output, shape index: {}]
  %s11 = sld [smem:[#allocation0]]
  $region81: #{tpu_custom_call.1} parent=0
    _
  %s13 = ssub.s32 1, %s11
  %s14 = scalar_select 0, %s13, %s11
  $region1: #{tpu_custom_call.1} parent=0
    #allocation3 [shape = 'u8[262144]{0}', space=vmem, size = 0x40000, scoped, tag = 'input window, operand 0']
    #allocation4 [shape = 's32[2]{0}', space=sflag, size = 0x8, scoped, tag = 'scoped memory for tpu_custom_call.1']
    #allocation5 [shape = 'u8[512]{0}', space=vmem, size = 0x400, scoped, tag = 'input window, operand 5, single buffered']
    #allocation6 [shape = 's32[1]{0}', space=sflag, size = 0x4, scoped, tag = 'scoped memory for tpu_custom_call.1']
    %15 = vsyncpa [#allocation4], 0
    %s16 = scalar_lea.sflag [#allocation4], 1
    %17 = vsyncpa %s16, 0
    %18 = vsyncpa [#allocation6], 0
    loop: start=0, step=1, limit=4
    $region2: #{tpu_custom_call.1} parent=1 // loop_pre_header
      _
    $region3: #{tpu_custom_call.1} parent=1 // loop_header
      %s20 = sphi 0, %s24
      %p21 = scmp.ge.s32.totalorder %s20, 4
      %s30 = sphi 0, %s32
      %s33 = sphi 0, %s30
      %s34 = sphi 0, %s33
      %s50 = sphi 0, %s34
      %s54 = sphi 0, %s54
      %s56 = sphi 0, %s54
      %s57 = sphi 0, %s56
      %s71 = sphi 0, %s57
      %s75 = sphi 0, %s75
      %s77 = sphi 0, %s75
      %s78 = sphi 0, %s77
      %s92 = sphi 0, %s78
      %s96 = sphi 0, %s96
      %s98 = sphi 0, %s96
      %s99 = sphi 0, %s98
      %s113 = sphi 0, %s99
      %s117 = sphi 0, %s117
      %s119 = sphi 0, %s117
      %s120 = sphi 0, %s119
      %s134 = sphi 0, %s120
      %s138 = sphi 0, %s138
      %s140 = sphi 0, %s138
      %s141 = sphi 0, %s140
      %s155 = sphi 0, %s141
      %s159 = sphi 0, %s159
      %s161 = sphi 0, %s159
      %s162 = sphi 0, %s161
      %s176 = sphi 0, %s162
      %s180 = sphi 0, %s180
      %s182 = sphi 0, %s180
      %s183 = sphi 0, %s182
      %s197 = sphi 0, %s183
      %s201 = sphi 0, %s201
      %s203 = sphi 0, %s201
      %s204 = sphi 0, %s203
      %s218 = sphi 0, %s204
      %s222 = sphi 0, %s222
      %s224 = sphi 0, %s222
      %s225 = sphi 0, %s224
      %s239 = sphi 0, %s225
      %s245 = sphi 0, %s247
      %s248 = sphi 0, %s245
      %s249 = sphi 0, %s248
      %s265 = sphi 0, %s249
    $region4: #{tpu_custom_call.1} parent=1 // loop_header_branch
      %23 = sbr.rel (%p21) target = $region8
    $region5: #{tpu_custom_call.1} parent=1 // loop_body
      %s25 = ssub.s32 %s20, 1
      %s26 = ssub.s32 %s20, 2
      %s27 = sadd.s32 %s20, 1
      %s28 = ssub.s32 %s20, %s27
      %p29 = scmp.eq.s32.totalorder %s28, 0
      %s31 = sadd.s32 %s30, 1
      %s32 = scalar_select %p29, %s30, %s31
      %p35 = pneg %p29
      %p36 = scmp.eq.s32.totalorder %s20, 1
      %p37 = por %p35, %p36
      %p38 = scmp.ne.s32.totalorder %s30, %s33
      %p39 = scmp.eq.s32.totalorder %s20, 0
      %p40 = por %p38, %p39
      %p41 = scmp.ne.s32.totalorder %s30, %s33
      %p42 = scmp.eq.s32.totalorder %s25, 1
      %p43 = por %p41, %p42
      %p44 = scmp.ne.s32.totalorder %s33, %s34
      %p45 = scmp.eq.s32.totalorder %s25, 0
      %p46 = por %p44, %p45
      %p47 = scmp.ne.s32.totalorder %s33, %s34
      %p48 = scmp.eq.s32.totalorder %s26, 1
      %p49 = por %p47, %p48
      %p51 = scmp.ne.s32.totalorder %s34, %s50
      %p52 = scmp.eq.s32.totalorder %s26, 0
      %p53 = por %p51, %p52
      %s55 = sadd.s32 %s54, 1
      %p58 = scmp.eq.s32.totalorder %s20, 1
      %p59 = scmp.ne.s32.totalorder %s54, %s56
      %p60 = scmp.eq.s32.totalorder %s20, 0
      %p61 = por %p59, %p60
      %p62 = scmp.ne.s32.totalorder %s54, %s56
      %p63 = scmp.eq.s32.totalorder %s25, 1
      %p64 = por %p62, %p63
      %p65 = scmp.ne.s32.totalorder %s56, %s57
      %p66 = scmp.eq.s32.totalorder %s25, 0
      %p67 = por %p65, %p66
      %p68 = scmp.ne.s32.totalorder %s56, %s57
      %p69 = scmp.eq.s32.totalorder %s26, 1
      %p70 = por %p68, %p69
      %p72 = scmp.ne.s32.totalorder %s57, %s71
      %p73 = scmp.eq.s32.totalorder %s26, 0
      %p74 = por %p72, %p73
      %s76 = sadd.s32 %s75, 1
      %p79 = scmp.eq.s32.totalorder %s20, 1
      %p80 = scmp.ne.s32.totalorder %s75, %s77
      %p81 = scmp.eq.s32.totalorder %s20, 0
      %p82 = por %p80, %p81
      %p83 = scmp.ne.s32.totalorder %s75, %s77
      %p84 = scmp.eq.s32.totalorder %s25, 1
      %p85 = por %p83, %p84
      %p86 = scmp.ne.s32.totalorder %s77, %s78
      %p87 = scmp.eq.s32.totalorder %s25, 0
      %p88 = por %p86, %p87
      %p89 = scmp.ne.s32.totalorder %s77, %s78
      %p90 = scmp.eq.s32.totalorder %s26, 1
      %p91 = por %p89, %p90
      %p93 = scmp.ne.s32.totalorder %s78, %s92
      %p94 = scmp.eq.s32.totalorder %s26, 0
      %p95 = por %p93, %p94
      %s97 = sadd.s32 %s96, 1
      %p100 = scmp.eq.s32.totalorder %s20, 1
      %p101 = scmp.ne.s32.totalorder %s96, %s98
      %p102 = scmp.eq.s32.totalorder %s20, 0
      %p103 = por %p101, %p102
      %p104 = scmp.ne.s32.totalorder %s96, %s98
      %p105 = scmp.eq.s32.totalorder %s25, 1
      %p106 = por %p104, %p105
      %p107 = scmp.ne.s32.totalorder %s98, %s99
      %p108 = scmp.eq.s32.totalorder %s25, 0
      %p109 = por %p107, %p108
      %p110 = scmp.ne.s32.totalorder %s98, %s99
      %p111 = scmp.eq.s32.totalorder %s26, 1
      %p112 = por %p110, %p111
      %p114 = scmp.ne.s32.totalorder %s99, %s113
      %p115 = scmp.eq.s32.totalorder %s26, 0
      %p116 = por %p114, %p115
      %s118 = sadd.s32 %s117, 1
      %p121 = scmp.eq.s32.totalorder %s20, 1
      %p122 = scmp.ne.s32.totalorder %s117, %s119
      %p123 = scmp.eq.s32.totalorder %s20, 0
      %p124 = por %p122, %p123
      %p125 = scmp.ne.s32.totalorder %s117, %s119
      %p126 = scmp.eq.s32.totalorder %s25, 1
      %p127 = por %p125, %p126
      %p128 = scmp.ne.s32.totalorder %s119, %s120
      %p129 = scmp.eq.s32.totalorder %s25, 0
      %p130 = por %p128, %p129
      %p131 = scmp.ne.s32.totalorder %s119, %s120
      %p132 = scmp.eq.s32.totalorder %s26, 1
      %p133 = por %p131, %p132
      %p135 = scmp.ne.s32.totalorder %s120, %s134
      %p136 = scmp.eq.s32.totalorder %s26, 0
      %p137 = por %p135, %p136
      %s139 = sadd.s32 %s138, 1
      %p142 = scmp.eq.s32.totalorder %s20, 1
      %p143 = scmp.ne.s32.totalorder %s138, %s140
      %p144 = scmp.eq.s32.totalorder %s20, 0
      %p145 = por %p143, %p144
      %p146 = scmp.ne.s32.totalorder %s138, %s140
      %p147 = scmp.eq.s32.totalorder %s25, 1
      %p148 = por %p146, %p147
      %p149 = scmp.ne.s32.totalorder %s140, %s141
      %p150 = scmp.eq.s32.totalorder %s25, 0
      %p151 = por %p149, %p150
      %p152 = scmp.ne.s32.totalorder %s140, %s141
      %p153 = scmp.eq.s32.totalorder %s26, 1
      %p154 = por %p152, %p153
      %p156 = scmp.ne.s32.totalorder %s141, %s155
      %p157 = scmp.eq.s32.totalorder %s26, 0
      %p158 = por %p156, %p157
      %s160 = sadd.s32 %s159, 1
      %p163 = scmp.eq.s32.totalorder %s20, 1
      %p164 = scmp.ne.s32.totalorder %s159, %s161
      %p165 = scmp.eq.s32.totalorder %s20, 0
      %p166 = por %p164, %p165
      %p167 = scmp.ne.s32.totalorder %s159, %s161
      %p168 = scmp.eq.s32.totalorder %s25, 1
      %p169 = por %p167, %p168
      %p170 = scmp.ne.s32.totalorder %s161, %s162
      %p171 = scmp.eq.s32.totalorder %s25, 0
      %p172 = por %p170, %p171
      %p173 = scmp.ne.s32.totalorder %s161, %s162
      %p174 = scmp.eq.s32.totalorder %s26, 1
      %p175 = por %p173, %p174
      %p177 = scmp.ne.s32.totalorder %s162, %s176
      %p178 = scmp.eq.s32.totalorder %s26, 0
      %p179 = por %p177, %p178
      %s181 = sadd.s32 %s180, 1
      %p184 = scmp.eq.s32.totalorder %s20, 1
      %p185 = scmp.ne.s32.totalorder %s180, %s182
      %p186 = scmp.eq.s32.totalorder %s20, 0
      %p187 = por %p185, %p186
      %p188 = scmp.ne.s32.totalorder %s180, %s182
      %p189 = scmp.eq.s32.totalorder %s25, 1
      %p190 = por %p188, %p189
      %p191 = scmp.ne.s32.totalorder %s182, %s183
      %p192 = scmp.eq.s32.totalorder %s25, 0
      %p193 = por %p191, %p192
      %p194 = scmp.ne.s32.totalorder %s182, %s183
      %p195 = scmp.eq.s32.totalorder %s26, 1
      %p196 = por %p194, %p195
      %p198 = scmp.ne.s32.totalorder %s183, %s197
      %p199 = scmp.eq.s32.totalorder %s26, 0
      %p200 = por %p198, %p199
      %s202 = sadd.s32 %s201, 1
      %p205 = scmp.eq.s32.totalorder %s20, 1
      %p206 = scmp.ne.s32.totalorder %s201, %s203
      %p207 = scmp.eq.s32.totalorder %s20, 0
      %p208 = por %p206, %p207
      %p209 = scmp.ne.s32.totalorder %s201, %s203
      %p210 = scmp.eq.s32.totalorder %s25, 1
      %p211 = por %p209, %p210
      %p212 = scmp.ne.s32.totalorder %s203, %s204
      %p213 = scmp.eq.s32.totalorder %s25, 0
      %p214 = por %p212, %p213
      %p215 = scmp.ne.s32.totalorder %s203, %s204
      %p216 = scmp.eq.s32.totalorder %s26, 1
      %p217 = por %p215, %p216
      %p219 = scmp.ne.s32.totalorder %s204, %s218
      %p220 = scmp.eq.s32.totalorder %s26, 0
      %p221 = por %p219, %p220
      %s223 = sadd.s32 %s222, 1
      %p226 = scmp.eq.s32.totalorder %s20, 1
      %p227 = scmp.ne.s32.totalorder %s222, %s224
      %p228 = scmp.eq.s32.totalorder %s20, 0
      %p229 = por %p227, %p228
      %p230 = scmp.ne.s32.totalorder %s222, %s224
      %p231 = scmp.eq.s32.totalorder %s25, 1
      %p232 = por %p230, %p231
      %p233 = scmp.ne.s32.totalorder %s224, %s225
      %p234 = scmp.eq.s32.totalorder %s25, 0
      %p235 = por %p233, %p234
      %p236 = scmp.ne.s32.totalorder %s224, %s225
      %p237 = scmp.eq.s32.totalorder %s26, 1
      %p238 = por %p236, %p237
      %p240 = scmp.ne.s32.totalorder %s225, %s239
      %p241 = scmp.eq.s32.totalorder %s26, 0
      %p242 = por %p240, %p241
      %s243 = ssub.s32 %s20, %s27
      %p244 = scmp.eq.s32.totalorder %s243, 0
      %s246 = sadd.s32 %s245, 1
      %s247 = scalar_select %p244, %s245, %s246
      %p250 = pneg %p244
      %p251 = scmp.eq.s32.totalorder %s20, 1
      %p252 = por %p250, %p251
      %p253 = scmp.ne.s32.totalorder %s245, %s248
      %p254 = scmp.eq.s32.totalorder %s20, 0
      %p255 = por %p253, %p254
      %p256 = scmp.ne.s32.totalorder %s245, %s248
      %p257 = scmp.eq.s32.totalorder %s25, 1
      %p258 = por %p256, %p257
      %p259 = scmp.ne.s32.totalorder %s248, %s249
      %p260 = scmp.eq.s32.totalorder %s25, 0
      %p261 = por %p259, %p260
      %p262 = scmp.ne.s32.totalorder %s248, %s249
      %p263 = scmp.eq.s32.totalorder %s26, 1
      %p264 = por %p262, %p263
      %p266 = scmp.ne.s32.totalorder %s249, %s265
      %p267 = scmp.eq.s32.totalorder %s26, 0
      %p268 = por %p266, %p267
      %p269 = scmp.le.s32.totalorder 1, %s20
      %p270 = scmp.lt.s32.totalorder %s20, 3
      %p271 = pnand %p269, %p270
      %p272 = pneg %p271
      // Predicated region
      $region9: #{tpu_custom_call.1} parent=5 // pred_check
        _
      $region10: #{tpu_custom_call.1} parent=5 // pred_check_branch
        %274 = sbr.rel (%p271) target = $region12
      $region11: #{tpu_custom_call.1} parent=5 // pred_region
        %s275 = ssub.s32 %s20, 1
        // Predicated region
        $region13: #{tpu_custom_call.1} parent=11 // pred_check
          %p276 = pneg %p67
        $region14: #{tpu_custom_call.1} parent=11 // pred_check_branch
          %278 = sbr.rel (%p276) target = $region16
        $region15: #{tpu_custom_call.1} parent=11 // pred_region
          _
        $region16: #{tpu_custom_call.1} parent=11 // pred_fallthru
          _
        // Predicated region
        $region17: #{tpu_custom_call.1} parent=11 // pred_check
          %p279 = pneg %p88
        $region18: #{tpu_custom_call.1} parent=11 // pred_check_branch
          %281 = sbr.rel (%p279) target = $region20
        $region19: #{tpu_custom_call.1} parent=11 // pred_region
          _
        $region20: #{tpu_custom_call.1} parent=11 // pred_fallthru
          _
        // Predicated region
        $region21: #{tpu_custom_call.1} parent=11 // pred_check
          %p282 = pneg %p109
        $region22: #{tpu_custom_call.1} parent=11 // pred_check_branch
          %284 = sbr.rel (%p282) target = $region24
        $region23: #{tpu_custom_call.1} parent=11 // pred_region
          _
        $region24: #{tpu_custom_call.1} parent=11 // pred_fallthru
          _
        // Predicated region
        $region25: #{tpu_custom_call.1} parent=11 // pred_check
          %p285 = pneg %p130
        $region26: #{tpu_custom_call.1} parent=11 // pred_check_branch
          %287 = sbr.rel (%p285) target = $region28
        $region27: #{tpu_custom_call.1} parent=11 // pred_region
          _
        $region28: #{tpu_custom_call.1} parent=11 // pred_fallthru
          _
        // Predicated region
        $region29: #{tpu_custom_call.1} parent=11 // pred_check
          %p288 = pneg %p151
        $region30: #{tpu_custom_call.1} parent=11 // pred_check_branch
          %290 = sbr.rel (%p288) target = $region32
        $region31: #{tpu_custom_call.1} parent=11 // pred_region
          %s292 = ssub.s32 16, 16
          %293 = vsyncadd [#allocation6], %s292
          %s295 = sshll.u32 [#allocation5], 4
          %s296 = int_to_ptr.vmem [resolvable:$true] %s295
          %298 = dma.hbm_to_vmem [thread:$0]  %s5, 16, %s296, [#allocation6]
        $region32: #{tpu_custom_call.1} parent=11 // pred_fallthru
          _
        // Predicated region
        $region33: #{tpu_custom_call.1} parent=11 // pred_check
          %p299 = pneg %p172
        $region34: #{tpu_custom_call.1} parent=11 // pred_check_branch
          %301 = sbr.rel (%p299) target = $region36
        $region35: #{tpu_custom_call.1} parent=11 // pred_region
          _
        $region36: #{tpu_custom_call.1} parent=11 // pred_fallthru
          _
        // Predicated region
        $region37: #{tpu_custom_call.1} parent=11 // pred_check
          %p302 = pneg %p193
        $region38: #{tpu_custom_call.1} parent=11 // pred_check_branch
          %304 = sbr.rel (%p302) target = $region40
        $region39: #{tpu_custom_call.1} parent=11 // pred_region
          _
        $region40: #{tpu_custom_call.1} parent=11 // pred_fallthru
          _
        // Predicated region
        $region41: #{tpu_custom_call.1} parent=11 // pred_check
          %p305 = pneg %p214
        $region42: #{tpu_custom_call.1} parent=11 // pred_check_branch
          %307 = sbr.rel (%p305) target = $region44
        $region43: #{tpu_custom_call.1} parent=11 // pred_region
          _
        $region44: #{tpu_custom_call.1} parent=11 // pred_fallthru
          _
        // Predicated region
        $region45: #{tpu_custom_call.1} parent=11 // pred_check
          %p308 = pneg %p235
        $region46: #{tpu_custom_call.1} parent=11 // pred_check_branch
          %310 = sbr.rel (%p308) target = $region48
        $region47: #{tpu_custom_call.1} parent=11 // pred_region
          _
        $region48: #{tpu_custom_call.1} parent=11 // pred_fallthru
          _
      $region12: #{tpu_custom_call.1} parent=5 // pred_fallthru
        _
      %p311 = scmp.lt.s32.totalorder %s20, 2
      // Predicated region
      $region49: #{tpu_custom_call.1} parent=5 // pred_check
        %p312 = pneg %p311
      $region50: #{tpu_custom_call.1} parent=5 // pred_check_branch
        %314 = sbr.rel (%p312) target = $region52
      $region51: #{tpu_custom_call.1} parent=5 // pred_region
        // Predicated region
        $region53: #{tpu_custom_call.1} parent=51 // pred_check
          %p315 = pneg %p40
        $region54: #{tpu_custom_call.1} parent=51 // pred_check_branch
          %317 = sbr.rel (%p315) target = $region56
        $region55: #{tpu_custom_call.1} parent=51 // pred_region
          %s318 = sand.u32 %s30, 1
          %s319 = scalar_lea.sflag [#allocation4], %s318
          %s320 = sand.u32 %s30, 1
          %s321 = smul.addr %s320, 256
          %s322 = scalar_lea.vmem [#allocation3], %s321
          %s324 = ssub.s32 4096, 4096
          %325 = vsyncadd %s319, %s324
          %s326 = smul.addr %s20, 32
          %s327 = smul.addr %s326, 128
          %s328 = scalar_lea.hbm %s0, %s327
          %s329 = sshll.u32 %s322, 4
          %s330 = int_to_ptr.vmem [resolvable:$true] %s329
          %335 = dma.hbm_to_vmem [thread:$0]  %s328, 4096, %s330, %s319, 128, 128, 8
        $region56: #{tpu_custom_call.1} parent=51 // pred_fallthru
          _
      $region52: #{tpu_custom_call.1} parent=5 // pred_fallthru
        _
      %p336 = scmp.le.s32.totalorder 1, %s20
      %p337 = scmp.lt.s32.totalorder %s20, 3
      %p338 = pnand %p336, %p337
      %p339 = pneg %p338
      // Predicated region
      $region57: #{tpu_custom_call.1} parent=5 // pred_check
        _
      $region58: #{tpu_custom_call.1} parent=5 // pred_check_branch
        %341 = sbr.rel (%p338) target = $region60
      $region59: #{tpu_custom_call.1} parent=5 // pred_region
        %s342 = ssub.s32 %s20, 1
        %s343 = sand.u32 %s33, 1
        %s344 = scalar_lea.sflag [#allocation4], %s343
        %s345 = sand.u32 %s33, 1
        %s346 = smul.addr %s345, 256
        %s347 = scalar_lea.vmem [#allocation3], %s346
        // Predicated region
        $region61: #{tpu_custom_call.1} parent=59 // pred_check
          %p348 = pneg %p46
        $region62: #{tpu_custom_call.1} parent=59 // pred_check_branch
          %350 = sbr.rel (%p348) target = $region64
        $region63: #{tpu_custom_call.1} parent=59 // pred_region
          %351 = dma.done %s344, 4096
        $region64: #{tpu_custom_call.1} parent=59 // pred_fallthru
          _
        // Predicated region
        $region65: #{tpu_custom_call.1} parent=59 // pred_check
          %p352 = pneg %p151
        $region66: #{tpu_custom_call.1} parent=59 // pred_check_branch
          %354 = sbr.rel (%p352) target = $region68
        $region67: #{tpu_custom_call.1} parent=59 // pred_region
          %355 = dma.done [#allocation6], 16
        $region68: #{tpu_custom_call.1} parent=59 // pred_fallthru
          _
        %s356 = sand.u32 %s33, 1
        %s357 = scalar_lea.sflag [#allocation4], %s356
        %s358 = sand.u32 %s33, 1
        %s359 = smul.addr %s358, 256
        %s360 = scalar_lea.vmem [#allocation3], %s359
        %p361 = pneg %p46
        %p362 = pneg %p43
        %p363 = pneg %p67
        %p364 = pneg %p64
        %p365 = pneg %p88
        %p366 = pneg %p85
        %p367 = pneg %p109
        %p368 = pneg %p106
        %p369 = pneg %p130
        %p370 = pneg %p127
        %p371 = pneg %p151
        %p372 = pneg %p148
        %p373 = pneg %p172
        %p374 = pneg %p169
        %p375 = pneg %p193
        %p376 = pneg %p190
        %p377 = pneg %p214
        %p378 = pneg %p211
        %p379 = pneg %p235
        %p380 = pneg %p232
        %p381 = pneg %p261
        %p382 = pneg %p258
        %p383 = scmp.lt.s32.totalorder %s25, 1
        %s384 = scalar_select %p383, %s25, 1
        %s385 = smul.addr %s384, 32
        %s386 = smul.addr %s385, 8
        %s387 = scalar_lea.vmem %s10, %s386
        %p388 = scmp.lt.s32.totalorder %s25, 1
        %s389 = scalar_select %p388, %s25, 1
        %s390 = smul.addr %s389, 32
        %s391 = smul.addr %s390, 8
        %s392 = scalar_lea.vmem %s10, %s391
        %v393 = vld [vmem:[%s4] sm:$0x1]
        %v394 = vld [vmem:[%s4 + $0x1] sm:$0x1]
        %v395 = vld [vmem:[%s4 + $0x2] sm:$0x1]
        %v396 = vld [vmem:[%s4 + $0x3] sm:$0x1]
        %v397 = vld [vmem:[%s4 + $0x4] sm:$0x1]
        %v398 = vld [vmem:[%s4 + $0x5] sm:$0x1]
        %v399 = vld [vmem:[%s4 + $0x6] sm:$0x1]
        %v400 = vld [vmem:[%s4 + $0x7] sm:$0x1]
        %v401 = vld [vmem:[%s4 + $0x8] sm:$0x1]
        %v402 = vld [vmem:[#allocation5] sm:$0x1]
        %v403 = vld [vmem:[%s6] sm:$0x1]
        %v404 = vld [vmem:[%s7] sm:$0xff]
        %v405 = vld [vmem:[%s7 + $0x8] sm:$0xff]
        %v406 = vld [vmem:[%s7 + $0x10] sm:$0xff]
        %v407 = vld [vmem:[%s7 + $0x18] sm:$0xff]
        %v408 = vld [vmem:[%s7 + $0x20] sm:$0xff]
        %v409 = vld [vmem:[%s7 + $0x28] sm:$0xff]
        %v410 = vld [vmem:[%s7 + $0x30] sm:$0xff]
        %v411 = vld [vmem:[%s7 + $0x38] sm:$0xff]
        %v412 = vld [vmem:[%s7 + $0x40] sm:$0xff]
        %v413 = vld [vmem:[%s7 + $0x48] sm:$0xff]
        %v414 = vld [vmem:[%s7 + $0x50] sm:$0xff]
        %v415 = vld [vmem:[%s7 + $0x58] sm:$0xff]
        %v416 = vld [vmem:[%s7 + $0x60] sm:$0xff]
        %v417 = vld [vmem:[%s7 + $0x68] sm:$0xff]
        %v418 = vld [vmem:[%s7 + $0x70] sm:$0xff]
        %v419 = vld [vmem:[%s7 + $0x78] sm:$0xff]
        %v420 = vld [vmem:[%s8] sm:$0x1]
        %v421 = vld [vmem:[%s9] sm:$0x1]
        %v422 = vld [vmem:[%s1] sm:$0xff]
        %v423 = vld [vmem:[%s1 + $0x8] sm:$0xff]
        %v424 = vld [vmem:[%s1 + $0x10] sm:$0xff]
        %v425 = vld [vmem:[%s1 + $0x18] sm:$0xff]
        %v426 = vld [vmem:[%s1 + $0x20] sm:$0xff]
        %v427 = vld [vmem:[%s1 + $0x28] sm:$0xff]
        %v428 = vld [vmem:[%s1 + $0x30] sm:$0xff]
        %v429 = vld [vmem:[%s1 + $0x38] sm:$0xff]
        %v430 = vld [vmem:[%s1 + $0x40] sm:$0xff]
        %v431 = vld [vmem:[%s1 + $0x48] sm:$0xff]
        %v432 = vld [vmem:[%s1 + $0x50] sm:$0xff]
        %v433 = vld [vmem:[%s1 + $0x58] sm:$0xff]
        %v434 = vld [vmem:[%s1 + $0x60] sm:$0xff]
        %v435 = vld [vmem:[%s1 + $0x68] sm:$0xff]
        %v436 = vld [vmem:[%s1 + $0x70] sm:$0xff]
        %v437 = vld [vmem:[%s1 + $0x78] sm:$0xff]
        %v438 = vld [vmem:[%s2] sm:$0x1]
        %v439 = vld [vmem:[%s3] sm:$0x1]
        %440 = vst [vmem:[#allocation2] sm:$0xff] 0.0
        %441 = vst [vmem:[#allocation2 + $0x8] sm:$0xff] 0.0
        %442 = vst [vmem:[#allocation2 + $0x10] sm:$0xff] 0.0
        %443 = vst [vmem:[#allocation2 + $0x18] sm:$0xff] 0.0
        %s444 = scalar_lea.vmem [#allocation2], 544
        %445 = vst [vmem:[%s444] sm:$0xff] 0.0
        %446 = vst [vmem:[%s444 + $0x8] sm:$0xff] 0.0
        %447 = vst [vmem:[%s444 + $0x10] sm:$0xff] 0.0
        %448 = vst [vmem:[%s444 + $0x18] sm:$0xff] 0.0
        %449 = vst [vmem:[#allocation2 + $0x7] sm:$0x1] 0.0
        %450 = vst [vmem:[#allocation2 + $0x27] sm:$0x1] 0.0
        %451 = vst [vmem:[#allocation2 + $0x47] sm:$0x1] 0.0
        %452 = vst [vmem:[#allocation2 + $0x67] sm:$0x1] 0.0
        %453 = vst [vmem:[#allocation2 + $0x87] sm:$0x1] 0.0
        %454 = vst [vmem:[#allocation2 + $0xa7] sm:$0x1] 0.0
        %455 = vst [vmem:[#allocation2 + $0xc7] sm:$0x1] 0.0
        %456 = vst [vmem:[#allocation2 + $0xe7] sm:$0x1] 0.0
        %457 = vst [vmem:[#allocation2 + $0x107] sm:$0x1] 0.0
        %458 = vst [vmem:[#allocation2 + $0x127] sm:$0x1] 0.0
        %459 = vst [vmem:[#allocation2 + $0x147] sm:$0x1] 0.0
        %460 = vst [vmem:[#allocation2 + $0x167] sm:$0x1] 0.0
        %461 = vst [vmem:[#allocation2 + $0x187] sm:$0x1] 0.0
        %462 = vst [vmem:[#allocation2 + $0x1a7] sm:$0x1] 0.0
        %463 = vst [vmem:[#allocation2 + $0x1c7] sm:$0x1] 0.0
        %464 = vst [vmem:[#allocation2 + $0x1e7] sm:$0x1] 0.0
        %465 = vst [vmem:[#allocation2 + $0x207] sm:$0x1] 0.0
        %466 = vst [vmem:[#allocation2 + $0x227] sm:$0x1] 0.0
        %467 = vst [vmem:[#allocation2 + $0x18] sm:$0x1] 0.0
        %468 = vst [vmem:[#allocation2 + $0x38] sm:$0x1] 0.0
        %469 = vst [vmem:[#allocation2 + $0x58] sm:$0x1] 0.0
        %470 = vst [vmem:[#allocation2 + $0x78] sm:$0x1] 0.0
        %471 = vst [vmem:[#allocation2 + $0x98] sm:$0x1] 0.0
        %472 = vst [vmem:[#allocation2 + $0xb8] sm:$0x1] 0.0
        %473 = vst [vmem:[#allocation2 + $0xd8] sm:$0x1] 0.0
        %474 = vst [vmem:[#allocation2 + $0xf8] sm:$0x1] 0.0
        %475 = vst [vmem:[#allocation2 + $0x118] sm:$0x1] 0.0
        %476 = vst [vmem:[#allocation2 + $0x138] sm:$0x1] 0.0
        %477 = vst [vmem:[#allocation2 + $0x158] sm:$0x1] 0.0
        %478 = vst [vmem:[#allocation2 + $0x178] sm:$0x1] 0.0
        %479 = vst [vmem:[#allocation2 + $0x198] sm:$0x1] 0.0
        %480 = vst [vmem:[#allocation2 + $0x1b8] sm:$0x1] 0.0
        %481 = vst [vmem:[#allocation2 + $0x1d8] sm:$0x1] 0.0
        %482 = vst [vmem:[#allocation2 + $0x1f8] sm:$0x1] 0.0
        %483 = vst [vmem:[#allocation2 + $0x218] sm:$0x1] 0.0
        %484 = vst [vmem:[#allocation2 + $0x238] sm:$0x1] 0.0
        %s485 = smul.u32 0, 16
        %s486 = scalar_lea.vmem %s347, %s485 [#allocation3]
        %v487 = vld [vmem:[%s486] sm:$0xff]
        %v488 = vld [vmem:[%s486 + $0x8] sm:$0xff]
        %v489 = vld [vmem:[%s486 + $0x10] sm:$0xff]
        %v490 = vld [vmem:[%s486 + $0x18] sm:$0xff]
        %v491 = vld [vmem:[%s486 + $0x20] sm:$0xff]
        %v492 = vld [vmem:[%s486 + $0x28] sm:$0xff]
        %v493 = vld [vmem:[%s486 + $0x30] sm:$0xff]
        %v494 = vld [vmem:[%s486 + $0x38] sm:$0xff]
        %v495 = vld [vmem:[%s486 + $0x40] sm:$0xff]
        %v496 = vld [vmem:[%s486 + $0x48] sm:$0xff]
        %v497 = vld [vmem:[%s486 + $0x50] sm:$0xff]
        %v498 = vld [vmem:[%s486 + $0x58] sm:$0xff]
        %v499 = vld [vmem:[%s486 + $0x60] sm:$0xff]
        %v500 = vld [vmem:[%s486 + $0x68] sm:$0xff]
        %v501 = vld [vmem:[%s486 + $0x70] sm:$0xff]
        %v502 = vld [vmem:[%s486 + $0x78] sm:$0xff]
        %503 = vmatprep.subr.mxu0 0.0
        %504 = vmatpush1.msra.mxu0 %v422
        %505 = vmatprep.subr.mxu0 0.0
        %506 = vmatpush1.msra.mxu0 %v423
        %507 = vmatprep.subr.mxu0 0.0
        %508 = vmatpush1.msra.mxu0 %v424
        %509 = vmatprep.subr.mxu0 0.0
        %510 = vmatpush1.msra.mxu0 %v425
        %511 = vmatprep.subr.mxu0 0.0
        %512 = vmatpush1.msra.mxu0 %v426
        %513 = vmatprep.subr.mxu0 0.0
        %514 = vmatpush1.msra.mxu0 %v427
        %515 = vmatprep.subr.mxu0 0.0
        %516 = vmatpush1.msra.mxu0 %v428
        %517 = vmatprep.subr.mxu0 0.0
        %518 = vmatpush1.msra.mxu0 %v429
        %519 = vmatprep.subr.mxu0 0.0
        %520 = vmatpush1.msra.mxu0 %v430
        %521 = vmatprep.subr.mxu0 0.0
        %522 = vmatpush1.msra.mxu0 %v431
        %523 = vmatprep.subr.mxu0 0.0
        %524 = vmatpush1.msra.mxu0 %v432
        %525 = vmatprep.subr.mxu0 0.0
        %526 = vmatpush1.msra.mxu0 %v433
        %527 = vmatprep.subr.mxu0 0.0
        %528 = vmatpush1.msra.mxu0 %v434
        %529 = vmatprep.subr.mxu0 0.0
        %530 = vmatpush1.msra.mxu0 %v435
        %531 = vmatprep.subr.mxu0 0.0
        %532 = vmatpush1.msra.mxu0 %v436
        %533 = vmatprep.subr.mxu0 0.0
        %534 = vmatpush1.msra.mxu0 %v437
        %535 = vmatprep.subr.mxu0 0.0
        %536 = vmatpush1.msra.mxu0 0.0
        %537 = vmatprep.subr.mxu0 0.0
        %538 = vmatpush1.msra.mxu0 0.0
        %539 = vmatprep.subr.mxu0 0.0
        %540 = vmatpush1.msra.mxu0 0.0
        %541 = vmatprep.subr.mxu0 0.0
        %542 = vmatpush1.msra.mxu0 0.0
        %543 = vmatprep.subr.mxu0 0.0
        %544 = vmatpush1.msra.mxu0 0.0
        %545 = vmatprep.subr.mxu0 0.0
        %546 = vmatpush1.msra.mxu0 0.0
        %547 = vmatprep.subr.mxu0 0.0
        %548 = vmatpush1.msra.mxu0 0.0
        %549 = vmatprep.subr.mxu0 0.0
        %550 = vmatpush1.msra.mxu0 0.0
        %551 = vmatprep.subr.mxu0 0.0
        %552 = vmatpush1.msra.mxu0 0.0
        %553 = vmatprep.subr.mxu0 0.0
        %554 = vmatpush1.msra.mxu0 0.0
        %555 = vmatprep.subr.mxu0 0.0
        %556 = vmatpush1.msra.mxu0 0.0
        %557 = vmatprep.subr.mxu0 0.0
        %558 = vmatpush1.msra.mxu0 0.0
        %559 = vmatprep.subr.mxu0 0.0
        %560 = vmatpush1.msra.mxu0 0.0
        %561 = vmatprep.subr.mxu0 0.0
        %562 = vmatpush1.msra.mxu0 0.0
        %563 = vmatprep.subr.mxu0 0.0
        %564 = vmatpush1.msra.mxu0 0.0
        %565 = vmatprep.subr.mxu0 0.0
        %566 = vmatpush1.msra.mxu0 0.0
        %567 = vmatprep.mubr.f32.mxu0 0.0
        %568 = vmatmul.mubr.f32.gmra.mrb[0].mxu0 %v487
        %v569 = vpop.f32.mrb[0].mxu0
        %v570 = vadd.f32 0.0, %v569
        %v571 = vpop.f32.mrb[0].mxu0
        %572 = vmatprep.mubr.f32.mxu0 0.0
        %573 = vmatmul.mubr.f32.gmra.mrb[0].mxu0 %v488
        %v574 = vpop.f32.mrb[0].mxu0
        %v575 = vadd.f32 0.0, %v574
        %v576 = vpop.f32.mrb[0].mxu0
        %577 = vmatprep.mubr.f32.mxu0 0.0
        %578 = vmatmul.mubr.f32.gmra.mrb[0].mxu0 %v489
        %v579 = vpop.f32.mrb[0].mxu0
        %v580 = vadd.f32 0.0, %v579
        %v581 = vpop.f32.mrb[0].mxu0
        %582 = vmatprep.mubr.f32.mxu0 0.0
        %583 = vmatmul.mubr.f32.gmra.mrb[0].mxu0 %v490
        %v584 = vpop.f32.mrb[0].mxu0
        %v585 = vadd.f32 0.0, %v584
        %v586 = vpop.f32.mrb[0].mxu0
        %587 = vmatprep.mubr.f32.mxu0 0.0
        %588 = vmatmul.mubr.f32.gmra.mrb[0].mxu0 %v491
        %v589 = vpop.f32.mrb[0].mxu0
        %v590 = vadd.f32 0.0, %v589
        %v591 = vpop.f32.mrb[0].mxu0
        %592 = vmatprep.mubr.f32.mxu0 0.0
        %593 = vmatmul.mubr.f32.gmra.mrb[0].mxu0 %v492
        %v594 = vpop.f32.mrb[0].mxu0
        %v595 = vadd.f32 0.0, %v594
        %v596 = vpop.f32.mrb[0].mxu0
        %597 = vmatprep.mubr.f32.mxu0 0.0
        %598 = vmatmul.mubr.f32.gmra.mrb[0].mxu0 %v493
        %v599 = vpop.f32.mrb[0].mxu0
        %v600 = vadd.f32 0.0, %v599
        %v601 = vpop.f32.mrb[0].mxu0
        %602 = vmatprep.mubr.f32.mxu0 0.0
        %603 = vmatmul.mubr.f32.gmra.mrb[0].mxu0 %v494
        %v604 = vpop.f32.mrb[0].mxu0
        %v605 = vadd.f32 0.0, %v604
        %v606 = vpop.f32.mrb[0].mxu0
        %607 = vmatprep.mubr.f32.mxu0 0.0
        %608 = vmatmul.mubr.f32.gmra.mrb[0].mxu0 %v495
        %v609 = vpop.f32.mrb[0].mxu0
        %v610 = vadd.f32 0.0, %v609
        %v611 = vpop.f32.mrb[0].mxu0
        %612 = vmatprep.mubr.f32.mxu0 0.0
        %613 = vmatmul.mubr.f32.gmra.mrb[0].mxu0 %v496
        %v614 = vpop.f32.mrb[0].mxu0
        %v615 = vadd.f32 0.0, %v614
        %v616 = vpop.f32.mrb[0].mxu0
        %617 = vmatprep.mubr.f32.mxu0 0.0
        %618 = vmatmul.mubr.f32.gmra.mrb[0].mxu0 %v497
        %v619 = vpop.f32.mrb[0].mxu0
        %v620 = vadd.f32 0.0, %v619
        %v621 = vpop.f32.mrb[0].mxu0
        %622 = vmatprep.mubr.f32.mxu0 0.0
        %623 = vmatmul.mubr.f32.gmra.mrb[0].mxu0 %v498
        %v624 = vpop.f32.mrb[0].mxu0
        %v625 = vadd.f32 0.0, %v624
        %v626 = vpop.f32.mrb[0].mxu0
        %627 = vmatprep.mubr.f32.mxu0 0.0
        %628 = vmatmul.mubr.f32.gmra.mrb[0].mxu0 %v499
        %v629 = vpop.f32.mrb[0].mxu0
        %v630 = vadd.f32 0.0, %v629
        %v631 = vpop.f32.mrb[0].mxu0
        %632 = vmatprep.mubr.f32.mxu0 0.0
        %633 = vmatmul.mubr.f32.gmra.mrb[0].mxu0 %v500
        %v634 = vpop.f32.mrb[0].mxu0
        %v635 = vadd.f32 0.0, %v634
        %v636 = vpop.f32.mrb[0].mxu0
        %637 = vmatprep.mubr.f32.mxu0 0.0
        %638 = vmatmul.mubr.f32.gmra.mrb[0].mxu0 %v501
        %v639 = vpop.f32.mrb[0].mxu0
        %v640 = vadd.f32 0.0, %v639
        %v641 = vpop.f32.mrb[0].mxu0
        %642 = vmatprep.mubr.f32.mxu0 0.0
        %643 = vmatmul.mubr.f32.gmra.mrb[0].mxu0 %v502
        %v644 = vpop.f32.mrb[0].mxu0
        %v645 = vadd.f32 0.0, %v644
        %v646 = vpop.f32.mrb[0].mxu0
        %647 = vdwg.mxu0
        %v649 = vlaneseq
        %v650 = vshrl.u32 %v649, 7
        %v651 = vsub.s32 0, %v650
        %v652 = vrot.slane %v438, %v651
        %v654 = vmul.f32 %v570, %v652
        %v655 = vmul.f32 %v575, %v652
        %v656 = vmul.f32 %v580, %v652
        %v657 = vmul.f32 %v585, %v652
        %v658 = vmul.f32 %v590, %v652
        %v659 = vmul.f32 %v595, %v652
        %v660 = vmul.f32 %v600, %v652
        %v661 = vmul.f32 %v605, %v652
        %v662 = vmul.f32 %v610, %v652
        %v663 = vmul.f32 %v615, %v652
        %v664 = vmul.f32 %v620, %v652
        %v665 = vmul.f32 %v625, %v652
        %v666 = vmul.f32 %v630, %v652
        %v667 = vmul.f32 %v635, %v652
        %v668 = vmul.f32 %v640, %v652
        %v669 = vmul.f32 %v645, %v652
        %v671 = vlaneseq
        %v672 = vshrl.u32 %v671, 7
        %v673 = vsub.s32 0, %v672
        %v674 = vrot.slane %v439, %v673
        %v676 = vadd.f32 %v654, %v674
        %v677 = vadd.f32 %v655, %v674
        %v678 = vadd.f32 %v656, %v674
        %v679 = vadd.f32 %v657, %v674
        %v680 = vadd.f32 %v658, %v674
        %v681 = vadd.f32 %v659, %v674
        %v682 = vadd.f32 %v660, %v674
        %v683 = vadd.f32 %v661, %v674
        %v684 = vadd.f32 %v662, %v674
        %v685 = vadd.f32 %v663, %v674
        %v686 = vadd.f32 %v664, %v674
        %v687 = vadd.f32 %v665, %v674
        %v688 = vadd.f32 %v666, %v674
        %v689 = vadd.f32 %v667, %v674
        %v690 = vadd.f32 %v668, %v674
        %v691 = vadd.f32 %v669, %v674
        %v692 = vmax.f32 %v676, 0.0
        %v693 = vmax.f32 %v677, 0.0
        %v694 = vmax.f32 %v678, 0.0
        %v695 = vmax.f32 %v679, 0.0
        %v696 = vmax.f32 %v680, 0.0
        %v697 = vmax.f32 %v681, 0.0
        %v698 = vmax.f32 %v682, 0.0
        %v699 = vmax.f32 %v683, 0.0
        %v700 = vmax.f32 %v684, 0.0
        %v701 = vmax.f32 %v685, 0.0
        %v702 = vmax.f32 %v686, 0.0
        %v703 = vmax.f32 %v687, 0.0
        %v704 = vmax.f32 %v688, 0.0
        %v705 = vmax.f32 %v689, 0.0
        %v706 = vmax.f32 %v690, 0.0
        %v707 = vmax.f32 %v691, 0.0
        %v708 = vmin.f32 %v692, 6.0
        %v709 = vmin.f32 %v693, 6.0
        %v710 = vmin.f32 %v694, 6.0
        %v711 = vmin.f32 %v695, 6.0
        %v712 = vmin.f32 %v696, 6.0
        %v713 = vmin.f32 %v697, 6.0
        %v714 = vmin.f32 %v698, 6.0
        %v715 = vmin.f32 %v699, 6.0
        %v716 = vmin.f32 %v700, 6.0
        %v717 = vmin.f32 %v701, 6.0
        %v718 = vmin.f32 %v702, 6.0
        %v719 = vmin.f32 %v703, 6.0
        %v720 = vmin.f32 %v704, 6.0
        %v721 = vmin.f32 %v705, 6.0
        %v722 = vmin.f32 %v706, 6.0
        %v723 = vmin.f32 %v707, 6.0
        %s724 = sadd.s32 0, 1
        %s725 = smul.u32 %s724, 32
        %s726 = scalar_lea.vmem [#allocation2], %s725
        %727 = vst [vmem:[%s726 + $0x8] sm:$0xff] %v708
        %728 = vst [vmem:[%s726 + $0x10] sm:$0xff] %v709
        %729 = vst [vmem:[%s726 + $0x28] sm:$0xff] %v710
        %730 = vst [vmem:[%s726 + $0x30] sm:$0xff] %v711
        %731 = vst [vmem:[%s726 + $0x48] sm:$0xff] %v712
        %732 = vst [vmem:[%s726 + $0x50] sm:$0xff] %v713
        %733 = vst [vmem:[%s726 + $0x68] sm:$0xff] %v714
        %734 = vst [vmem:[%s726 + $0x70] sm:$0xff] %v715
        %735 = vst [vmem:[%s726 + $0x88] sm:$0xff] %v716
        %736 = vst [vmem:[%s726 + $0x90] sm:$0xff] %v717
        %737 = vst [vmem:[%s726 + $0xa8] sm:$0xff] %v718
        %738 = vst [vmem:[%s726 + $0xb0] sm:$0xff] %v719
        %739 = vst [vmem:[%s726 + $0xc8] sm:$0xff] %v720
        %740 = vst [vmem:[%s726 + $0xd0] sm:$0xff] %v721
        %741 = vst [vmem:[%s726 + $0xe8] sm:$0xff] %v722
        %742 = vst [vmem:[%s726 + $0xf0] sm:$0xff] %v723
        %s743 = smul.u32 8, 16
        %s744 = scalar_lea.vmem %s347, %s743 [#allocation3]
        %v745 = vld [vmem:[%s744] sm:$0xff]
        %v746 = vld [vmem:[%s744 + $0x8] sm:$0xff]
        %v747 = vld [vmem:[%s744 + $0x10] sm:$0xff]
        %v748 = vld [vmem:[%s744 + $0x18] sm:$0xff]
        %v749 = vld [vmem:[%s744 + $0x20] sm:$0xff]
        %v750 = vld [vmem:[%s744 + $0x28] sm:$0xff]
        %v751 = vld [vmem:[%s744 + $0x30] sm:$0xff]
        %v752 = vld [vmem:[%s744 + $0x38] sm:$0xff]
        %v753 = vld [vmem:[%s744 + $0x40] sm:$0xff]
        %v754 = vld [vmem:[%s744 + $0x48] sm:$0xff]
        %v755 = vld [vmem:[%s744 + $0x50] sm:$0xff]
        %v756 = vld [vmem:[%s744 + $0x58] sm:$0xff]
        %v757 = vld [vmem:[%s744 + $0x60] sm:$0xff]
        %v758 = vld [vmem:[%s744 + $0x68] sm:$0xff]
        %v759 = vld [vmem:[%s744 + $0x70] sm:$0xff]
        %v760 = vld [vmem:[%s744 + $0x78] sm:$0xff]
        %761 = vmatprep.subr.mxu0 0.0
        %762 = vmatpush1.msra.mxu0 %v422
        %763 = vmatprep.subr.mxu0 0.0
        %764 = vmatpush1.msra.mxu0 %v423
        %765 = vmatprep.subr.mxu0 0.0
        %766 = vmatpush1.msra.mxu0 %v424
        %767 = vmatprep.subr.mxu0 0.0
        %768 = vmatpush1.msra.mxu0 %v425
        %769 = vmatprep.subr.mxu0 0.0
        %770 = vmatpush1.msra.mxu0 %v426
        %771 = vmatprep.subr.mxu0 0.0
        %772 = vmatpush1.msra.mxu0 %v427
        %773 = vmatprep.subr.mxu0 0.0
        %774 = vmatpush1.msra.mxu0 %v428
        %775 = vmatprep.subr.mxu0 0.0
        %776 = vmatpush1.msra.mxu0 %v429
        %777 = vmatprep.subr.mxu0 0.0
        %778 = vmatpush1.msra.mxu0 %v430
        %779 = vmatprep.subr.mxu0 0.0
        %780 = vmatpush1.msra.mxu0 %v431
        %781 = vmatprep.subr.mxu0 0.0
        %782 = vmatpush1.msra.mxu0 %v432
        %783 = vmatprep.subr.mxu0 0.0
        %784 = vmatpush1.msra.mxu0 %v433
        %785 = vmatprep.subr.mxu0 0.0
        %786 = vmatpush1.msra.mxu0 %v434
        %787 = vmatprep.subr.mxu0 0.0
        %788 = vmatpush1.msra.mxu0 %v435
        %789 = vmatprep.subr.mxu0 0.0
        %790 = vmatpush1.msra.mxu0 %v436
        %791 = vmatprep.subr.mxu0 0.0
        %792 = vmatpush1.msra.mxu0 %v437
        %793 = vmatprep.subr.mxu0 0.0
        %794 = vmatpush1.msra.mxu0 0.0
        %795 = vmatprep.subr.mxu0 0.0
        %796 = vmatpush1.msra.mxu0 0.0
        %797 = vmatprep.subr.mxu0 0.0
        %798 = vmatpush1.msra.mxu0 0.0
        %799 = vmatprep.subr.mxu0 0.0
        %800 = vmatpush1.msra.mxu0 0.0
        %801 = vmatprep.subr.mxu0 0.0
        %802 = vmatpush1.msra.mxu0 0.0
        %803 = vmatprep.subr.mxu0 0.0
        %804 = vmatpush1.msra.mxu0 0.0
        %805 = vmatprep.subr.mxu0 0.0
        %806 = vmatpush1.msra.mxu0 0.0
        %807 = vmatprep.subr.mxu0 0.0
        %808 = vmatpush1.msra.mxu0 0.0
        %809 = vmatprep.subr.mxu0 0.0
        %810 = vmatpush1.msra.mxu0 0.0
        %811 = vmatprep.subr.mxu0 0.0
        %812 = vmatpush1.msra.mxu0 0.0
        %813 = vmatprep.subr.mxu0 0.0
        %814 = vmatpush1.msra.mxu0 0.0
        %815 = vmatprep.subr.mxu0 0.0
        %816 = vmatpush1.msra.mxu0 0.0
        %817 = vmatprep.subr.mxu0 0.0
        %818 = vmatpush1.msra.mxu0 0.0
        %819 = vmatprep.subr.mxu0 0.0
        %820 = vmatpush1.msra.mxu0 0.0
        %821 = vmatprep.subr.mxu0 0.0
        %822 = vmatpush1.msra.mxu0 0.0
        %823 = vmatprep.subr.mxu0 0.0
        %824 = vmatpush1.msra.mxu0 0.0
        %825 = vmatprep.mubr.f32.mxu0 0.0
        %826 = vmatmul.mubr.f32.gmra.mrb[0].mxu0 %v745
        %v827 = vpop.f32.mrb[0].mxu0
        %v828 = vadd.f32 0.0, %v827
        %v829 = vpop.f32.mrb[0].mxu0
        %830 = vmatprep.mubr.f32.mxu0 0.0
        %831 = vmatmul.mubr.f32.gmra.mrb[0].mxu0 %v746
        %v832 = vpop.f32.mrb[0].mxu0
        %v833 = vadd.f32 0.0, %v832
        %v834 = vpop.f32.mrb[0].mxu0
        %835 = vmatprep.mubr.f32.mxu0 0.0
        %836 = vmatmul.mubr.f32.gmra.mrb[0].mxu0 %v747
        %v837 = vpop.f32.mrb[0].mxu0
        %v838 = vadd.f32 0.0, %v837
        %v839 = vpop.f32.mrb[0].mxu0
        %840 = vmatprep.mubr.f32.mxu0 0.0
        %841 = vmatmul.mubr.f32.gmra.mrb[0].mxu0 %v748
        %v842 = vpop.f32.mrb[0].mxu0
        %v843 = vadd.f32 0.0, %v842
        %v844 = vpop.f32.mrb[0].mxu0
        %845 = vmatprep.mubr.f32.mxu0 0.0
        %846 = vmatmul.mubr.f32.gmra.mrb[0].mxu0 %v749
        %v847 = vpop.f32.mrb[0].mxu0
        %v848 = vadd.f32 0.0, %v847
        %v849 = vpop.f32.mrb[0].mxu0
        %850 = vmatprep.mubr.f32.mxu0 0.0
        %851 = vmatmul.mubr.f32.gmra.mrb[0].mxu0 %v750
        %v852 = vpop.f32.mrb[0].mxu0
        %v853 = vadd.f32 0.0, %v852
        %v854 = vpop.f32.mrb[0].mxu0
        %855 = vmatprep.mubr.f32.mxu0 0.0
        %856 = vmatmul.mubr.f32.gmra.mrb[0].mxu0 %v751
        %v857 = vpop.f32.mrb[0].mxu0
        %v858 = vadd.f32 0.0, %v857
        %v859 = vpop.f32.mrb[0].mxu0
        %860 = vmatprep.mubr.f32.mxu0 0.0
        %861 = vmatmul.mubr.f32.gmra.mrb[0].mxu0 %v752
        %v862 = vpop.f32.mrb[0].mxu0
        %v863 = vadd.f32 0.0, %v862
        %v864 = vpop.f32.mrb[0].mxu0
        %865 = vmatprep.mubr.f32.mxu0 0.0
        %866 = vmatmul.mubr.f32.gmra.mrb[0].mxu0 %v753
        %v867 = vpop.f32.mrb[0].mxu0
        %v868 = vadd.f32 0.0, %v867
        %v869 = vpop.f32.mrb[0].mxu0
        %870 = vmatprep.mubr.f32.mxu0 0.0
        %871 = vmatmul.mubr.f32.gmra.mrb[0].mxu0 %v754
        %v872 = vpop.f32.mrb[0].mxu0
        %v873 = vadd.f32 0.0, %v872
        %v874 = vpop.f32.mrb[0].mxu0
        %875 = vmatprep.mubr.f32.mxu0 0.0
        %876 = vmatmul.mubr.f32.gmra.mrb[0].mxu0 %v755
        %v877 = vpop.f32.mrb[0].mxu0
        %v878 = vadd.f32 0.0, %v877
        %v879 = vpop.f32.mrb[0].mxu0
        %880 = vmatprep.mubr.f32.mxu0 0.0
        %881 = vmatmul.mubr.f32.gmra.mrb[0].mxu0 %v756
        %v882 = vpop.f32.mrb[0].mxu0
        %v883 = vadd.f32 0.0, %v882
        %v884 = vpop.f32.mrb[0].mxu0
        %885 = vmatprep.mubr.f32.mxu0 0.0
        %886 = vmatmul.mubr.f32.gmra.mrb[0].mxu0 %v757
        %v887 = vpop.f32.mrb[0].mxu0
        %v888 = vadd.f32 0.0, %v887
        %v889 = vpop.f32.mrb[0].mxu0
        %890 = vmatprep.mubr.f32.mxu0 0.0
        %891 = vmatmul.mubr.f32.gmra.mrb[0].mxu0 %v758
        %v892 = vpop.f32.mrb[0].mxu0
        %v893 = vadd.f32 0.0, %v892
        %v894 = vpop.f32.mrb[0].mxu0
        %895 = vmatprep.mubr.f32.mxu0 0.0
        %896 = vmatmul.mubr.f32.gmra.mrb[0].mxu0 %v759
        %v897 = vpop.f32.mrb[0].mxu0
        %v898 = vadd.f32 0.0, %v897
        %v899 = vpop.f32.mrb[0].mxu0
        %900 = vmatprep.mubr.f32.mxu0 0.0
        %901 = vmatmul.mubr.f32.gmra.mrb[0].mxu0 %v760
        %v902 = vpop.f32.mrb[0].mxu0
        %v903 = vadd.f32 0.0, %v902
        %v904 = vpop.f32.mrb[0].mxu0
        %905 = vdwg.mxu0
        %v906 = vmul.f32 %v828, %v652
        %v907 = vmul.f32 %v833, %v652
        %v908 = vmul.f32 %v838, %v652
        %v909 = vmul.f32 %v843, %v652
        %v910 = vmul.f32 %v848, %v652
        %v911 = vmul.f32 %v853, %v652
        %v912 = vmul.f32 %v858, %v652
        %v913 = vmul.f32 %v863, %v652
        %v914 = vmul.f32 %v868, %v652
        %v915 = vmul.f32 %v873, %v652
        %v916 = vmul.f32 %v878, %v652
        %v917 = vmul.f32 %v883, %v652
        %v918 = vmul.f32 %v888, %v652
        %v919 = vmul.f32 %v893, %v652
        %v920 = vmul.f32 %v898, %v652
        %v921 = vmul.f32 %v903, %v652
        %v922 = vadd.f32 %v906, %v674
        %v923 = vadd.f32 %v907, %v674
        %v924 = vadd.f32 %v908, %v674
        %v925 = vadd.f32 %v909, %v674
        %v926 = vadd.f32 %v910, %v674
        %v927 = vadd.f32 %v911, %v674
        %v928 = vadd.f32 %v912, %v674
        %v929 = vadd.f32 %v913, %v674
        %v930 = vadd.f32 %v914, %v674
        %v931 = vadd.f32 %v915, %v674
        %v932 = vadd.f32 %v916, %v674
        %v933 = vadd.f32 %v917, %v674
        %v934 = vadd.f32 %v918, %v674
        %v935 = vadd.f32 %v919, %v674
        %v936 = vadd.f32 %v920, %v674
        %v937 = vadd.f32 %v921, %v674
        %v938 = vmax.f32 %v922, 0.0
        %v939 = vmax.f32 %v923, 0.0
        %v940 = vmax.f32 %v924, 0.0
        %v941 = vmax.f32 %v925, 0.0
        %v942 = vmax.f32 %v926, 0.0
        %v943 = vmax.f32 %v927, 0.0
        %v944 = vmax.f32 %v928, 0.0
        %v945 = vmax.f32 %v929, 0.0
        %v946 = vmax.f32 %v930, 0.0
        %v947 = vmax.f32 %v931, 0.0
        %v948 = vmax.f32 %v932, 0.0
        %v949 = vmax.f32 %v933, 0.0
        %v950 = vmax.f32 %v934, 0.0
        %v951 = vmax.f32 %v935, 0.0
        %v952 = vmax.f32 %v936, 0.0
        %v953 = vmax.f32 %v937, 0.0
        %v954 = vmin.f32 %v938, 6.0
        %v955 = vmin.f32 %v939, 6.0
        %v956 = vmin.f32 %v940, 6.0
        %v957 = vmin.f32 %v941, 6.0
        %v958 = vmin.f32 %v942, 6.0
        %v959 = vmin.f32 %v943, 6.0
        %v960 = vmin.f32 %v944, 6.0
        %v961 = vmin.f32 %v945, 6.0
        %v962 = vmin.f32 %v946, 6.0
        %v963 = vmin.f32 %v947, 6.0
        %v964 = vmin.f32 %v948, 6.0
        %v965 = vmin.f32 %v949, 6.0
        %v966 = vmin.f32 %v950, 6.0
        %v967 = vmin.f32 %v951, 6.0
        %v968 = vmin.f32 %v952, 6.0
        %v969 = vmin.f32 %v953, 6.0
        %s970 = sadd.s32 8, 1
        %s971 = smul.u32 %s970, 32
        %s972 = scalar_lea.vmem [#allocation2], %s971
        %973 = vst [vmem:[%s972 + $0x8] sm:$0xff] %v954
        %974 = vst [vmem:[%s972 + $0x10] sm:$0xff] %v955
        %975 = vst [vmem:[%s972 + $0x28] sm:$0xff] %v956
        %976 = vst [vmem:[%s972 + $0x30] sm:$0xff] %v957
        %977 = vst [vmem:[%s972 + $0x48] sm:$0xff] %v958
        %978 = vst [vmem:[%s972 + $0x50] sm:$0xff] %v959
        %979 = vst [vmem:[%s972 + $0x68] sm:$0xff] %v960
        %980 = vst [vmem:[%s972 + $0x70] sm:$0xff] %v961
        %981 = vst [vmem:[%s972 + $0x88] sm:$0xff] %v962
        %982 = vst [vmem:[%s972 + $0x90] sm:$0xff] %v963
        %983 = vst [vmem:[%s972 + $0xa8] sm:$0xff] %v964
        %984 = vst [vmem:[%s972 + $0xb0] sm:$0xff] %v965
        %985 = vst [vmem:[%s972 + $0xc8] sm:$0xff] %v966
        %986 = vst [vmem:[%s972 + $0xd0] sm:$0xff] %v967
        %987 = vst [vmem:[%s972 + $0xe8] sm:$0xff] %v968
        %988 = vst [vmem:[%s972 + $0xf0] sm:$0xff] %v969
        %s989 = smul.u32 0, 32
        %s990 = scalar_lea.vmem [#allocation2], %s989
        %v991 = vld [vmem:[%s990 + $0x7] sm:$0xff]
        %v992 = vld [vmem:[%s990 + $0xf] sm:$0xff]
        %v993 = vld [vmem:[%s990 + $0x27] sm:$0xff]
        %v994 = vld [vmem:[%s990 + $0x2f] sm:$0xff]
        %v995 = vld [vmem:[%s990 + $0x47] sm:$0xff]
        %v996 = vld [vmem:[%s990 + $0x4f] sm:$0xff]
        %v997 = vld [vmem:[%s990 + $0x67] sm:$0xff]
        %v998 = vld [vmem:[%s990 + $0x6f] sm:$0xff]
        %v999 = vld [vmem:[%s990 + $0x87] sm:$0xff]
        %v1000 = vld [vmem:[%s990 + $0x8f] sm:$0xff]
        %v1001 = vld [vmem:[%s990 + $0xa7] sm:$0xff]
        %v1002 = vld [vmem:[%s990 + $0xaf] sm:$0xff]
        %v1003 = vld [vmem:[%s990 + $0xc7] sm:$0xff]
        %v1004 = vld [vmem:[%s990 + $0xcf] sm:$0xff]
        %v1005 = vld [vmem:[%s990 + $0xe7] sm:$0xff]
        %v1006 = vld [vmem:[%s990 + $0xef] sm:$0xff]
        %v1007 = vlaneseq
        %v1008 = vshrl.u32 %v1007, 7
        %v1009 = vsub.s32 0, %v1008
        %v1010 = vrot.slane %v393, %v1009
        %v1011 = vmul.f32 %v991, %v1010
        %v1012 = vmul.f32 %v992, %v1010
        %v1013 = vmul.f32 %v993, %v1010
        %v1014 = vmul.f32 %v994, %v1010
        %v1015 = vmul.f32 %v995, %v1010
        %v1016 = vmul.f32 %v996, %v1010
        %v1017 = vmul.f32 %v997, %v1010
        %v1018 = vmul.f32 %v998, %v1010
        %v1019 = vmul.f32 %v999, %v1010
        %v1020 = vmul.f32 %v1000, %v1010
        %v1021 = vmul.f32 %v1001, %v1010
        %v1022 = vmul.f32 %v1002, %v1010
        %v1023 = vmul.f32 %v1003, %v1010
        %v1024 = vmul.f32 %v1004, %v1010
        %v1025 = vmul.f32 %v1005, %v1010
        %v1026 = vmul.f32 %v1006, %v1010
        %v1027 = vadd.f32 %v1011, 0.0
        %v1028 = vadd.f32 %v1012, 0.0
        %v1029 = vadd.f32 %v1013, 0.0
        %v1030 = vadd.f32 %v1014, 0.0
        %v1031 = vadd.f32 %v1015, 0.0
        %v1032 = vadd.f32 %v1016, 0.0
        %v1033 = vadd.f32 %v1017, 0.0
        %v1034 = vadd.f32 %v1018, 0.0
        %v1035 = vadd.f32 %v1019, 0.0
        %v1036 = vadd.f32 %v1020, 0.0
        %v1037 = vadd.f32 %v1021, 0.0
        %v1038 = vadd.f32 %v1022, 0.0
        %v1039 = vadd.f32 %v1023, 0.0
        %v1040 = vadd.f32 %v1024, 0.0
        %v1041 = vadd.f32 %v1025, 0.0
        %v1042 = vadd.f32 %v1026, 0.0
        %v1043 = vld [vmem:[%s990 + $0x8] sm:$0xff]
        %v1044 = vld [vmem:[%s990 + $0x10] sm:$0xff]
        %v1045 = vld [vmem:[%s990 + $0x28] sm:$0xff]
        %v1046 = vld [vmem:[%s990 + $0x30] sm:$0xff]
        %v1047 = vld [vmem:[%s990 + $0x48] sm:$0xff]
        %v1048 = vld [vmem:[%s990 + $0x50] sm:$0xff]
        %v1049 = vld [vmem:[%s990 + $0x68] sm:$0xff]
        %v1050 = vld [vmem:[%s990 + $0x70] sm:$0xff]
        %v1051 = vld [vmem:[%s990 + $0x88] sm:$0xff]
        %v1052 = vld [vmem:[%s990 + $0x90] sm:$0xff]
        %v1053 = vld [vmem:[%s990 + $0xa8] sm:$0xff]
        %v1054 = vld [vmem:[%s990 + $0xb0] sm:$0xff]
        %v1055 = vld [vmem:[%s990 + $0xc8] sm:$0xff]
        %v1056 = vld [vmem:[%s990 + $0xd0] sm:$0xff]
        %v1057 = vld [vmem:[%s990 + $0xe8] sm:$0xff]
        %v1058 = vld [vmem:[%s990 + $0xf0] sm:$0xff]
        %v1059 = vlaneseq
        %v1060 = vshrl.u32 %v1059, 7
        %v1061 = vsub.s32 0, %v1060
        %v1062 = vrot.slane %v394, %v1061
        %v1063 = vmul.f32 %v1043, %v1062
        %v1064 = vmul.f32 %v1044, %v1062
        %v1065 = vmul.f32 %v1045, %v1062
        %v1066 = vmul.f32 %v1046, %v1062
        %v1067 = vmul.f32 %v1047, %v1062
        %v1068 = vmul.f32 %v1048, %v1062
        %v1069 = vmul.f32 %v1049, %v1062
        %v1070 = vmul.f32 %v1050, %v1062
        %v1071 = vmul.f32 %v1051, %v1062
        %v1072 = vmul.f32 %v1052, %v1062
        %v1073 = vmul.f32 %v1053, %v1062
        %v1074 = vmul.f32 %v1054, %v1062
        %v1075 = vmul.f32 %v1055, %v1062
        %v1076 = vmul.f32 %v1056, %v1062
        %v1077 = vmul.f32 %v1057, %v1062
        %v1078 = vmul.f32 %v1058, %v1062
        %v1079 = vadd.f32 %v1027, %v1063
        %v1080 = vadd.f32 %v1028, %v1064
        %v1081 = vadd.f32 %v1029, %v1065
        %v1082 = vadd.f32 %v1030, %v1066
        %v1083 = vadd.f32 %v1031, %v1067
        %v1084 = vadd.f32 %v1032, %v1068
        %v1085 = vadd.f32 %v1033, %v1069
        %v1086 = vadd.f32 %v1034, %v1070
        %v1087 = vadd.f32 %v1035, %v1071
        %v1088 = vadd.f32 %v1036, %v1072
        %v1089 = vadd.f32 %v1037, %v1073
        %v1090 = vadd.f32 %v1038, %v1074
        %v1091 = vadd.f32 %v1039, %v1075
        %v1092 = vadd.f32 %v1040, %v1076
        %v1093 = vadd.f32 %v1041, %v1077
        %v1094 = vadd.f32 %v1042, %v1078
        %v1095 = vld [vmem:[%s990 + $0x9] sm:$0xff]
        %v1096 = vld [vmem:[%s990 + $0x11] sm:$0xff]
        %v1097 = vld [vmem:[%s990 + $0x29] sm:$0xff]
        %v1098 = vld [vmem:[%s990 + $0x31] sm:$0xff]
        %v1099 = vld [vmem:[%s990 + $0x49] sm:$0xff]
        %v1100 = vld [vmem:[%s990 + $0x51] sm:$0xff]
        %v1101 = vld [vmem:[%s990 + $0x69] sm:$0xff]
        %v1102 = vld [vmem:[%s990 + $0x71] sm:$0xff]
        %v1103 = vld [vmem:[%s990 + $0x89] sm:$0xff]
        %v1104 = vld [vmem:[%s990 + $0x91] sm:$0xff]
        %v1105 = vld [vmem:[%s990 + $0xa9] sm:$0xff]
        %v1106 = vld [vmem:[%s990 + $0xb1] sm:$0xff]
        %v1107 = vld [vmem:[%s990 + $0xc9] sm:$0xff]
        %v1108 = vld [vmem:[%s990 + $0xd1] sm:$0xff]
        %v1109 = vld [vmem:[%s990 + $0xe9] sm:$0xff]
        %v1110 = vld [vmem:[%s990 + $0xf1] sm:$0xff]
        %v1111 = vlaneseq
        %v1112 = vshrl.u32 %v1111, 7
        %v1113 = vsub.s32 0, %v1112
        %v1114 = vrot.slane %v395, %v1113
        %v1115 = vmul.f32 %v1095, %v1114
        %v1116 = vmul.f32 %v1096, %v1114
        %v1117 = vmul.f32 %v1097, %v1114
        %v1118 = vmul.f32 %v1098, %v1114
        %v1119 = vmul.f32 %v1099, %v1114
        %v1120 = vmul.f32 %v1100, %v1114
        %v1121 = vmul.f32 %v1101, %v1114
        %v1122 = vmul.f32 %v1102, %v1114
        %v1123 = vmul.f32 %v1103, %v1114
        %v1124 = vmul.f32 %v1104, %v1114
        %v1125 = vmul.f32 %v1105, %v1114
        %v1126 = vmul.f32 %v1106, %v1114
        %v1127 = vmul.f32 %v1107, %v1114
        %v1128 = vmul.f32 %v1108, %v1114
        %v1129 = vmul.f32 %v1109, %v1114
        %v1130 = vmul.f32 %v1110, %v1114
        %v1131 = vadd.f32 %v1079, %v1115
        %v1132 = vadd.f32 %v1080, %v1116
        %v1133 = vadd.f32 %v1081, %v1117
        %v1134 = vadd.f32 %v1082, %v1118
        %v1135 = vadd.f32 %v1083, %v1119
        %v1136 = vadd.f32 %v1084, %v1120
        %v1137 = vadd.f32 %v1085, %v1121
        %v1138 = vadd.f32 %v1086, %v1122
        %v1139 = vadd.f32 %v1087, %v1123
        %v1140 = vadd.f32 %v1088, %v1124
        %v1141 = vadd.f32 %v1089, %v1125
        %v1142 = vadd.f32 %v1090, %v1126
        %v1143 = vadd.f32 %v1091, %v1127
        %v1144 = vadd.f32 %v1092, %v1128
        %v1145 = vadd.f32 %v1093, %v1129
        %v1146 = vadd.f32 %v1094, %v1130
        %v1147 = vld [vmem:[%s726 + $0x7] sm:$0xff]
        %v1148 = vld [vmem:[%s726 + $0xf] sm:$0xff]
        %v1149 = vld [vmem:[%s726 + $0x27] sm:$0xff]
        %v1150 = vld [vmem:[%s726 + $0x2f] sm:$0xff]
        %v1151 = vld [vmem:[%s726 + $0x47] sm:$0xff]
        %v1152 = vld [vmem:[%s726 + $0x4f] sm:$0xff]
        %v1153 = vld [vmem:[%s726 + $0x67] sm:$0xff]
        %v1154 = vld [vmem:[%s726 + $0x6f] sm:$0xff]
        %v1155 = vld [vmem:[%s726 + $0x87] sm:$0xff]
        %v1156 = vld [vmem:[%s726 + $0x8f] sm:$0xff]
        %v1157 = vld [vmem:[%s726 + $0xa7] sm:$0xff]
        %v1158 = vld [vmem:[%s726 + $0xaf] sm:$0xff]
        %v1159 = vld [vmem:[%s726 + $0xc7] sm:$0xff]
        %v1160 = vld [vmem:[%s726 + $0xcf] sm:$0xff]
        %v1161 = vld [vmem:[%s726 + $0xe7] sm:$0xff]
        %v1162 = vld [vmem:[%s726 + $0xef] sm:$0xff]
        %v1163 = vlaneseq
        %v1164 = vshrl.u32 %v1163, 7
        %v1165 = vsub.s32 0, %v1164
        %v1166 = vrot.slane %v396, %v1165
        %v1167 = vmul.f32 %v1147, %v1166
        %v1168 = vmul.f32 %v1148, %v1166
        %v1169 = vmul.f32 %v1149, %v1166
        %v1170 = vmul.f32 %v1150, %v1166
        %v1171 = vmul.f32 %v1151, %v1166
        %v1172 = vmul.f32 %v1152, %v1166
        %v1173 = vmul.f32 %v1153, %v1166
        %v1174 = vmul.f32 %v1154, %v1166
        %v1175 = vmul.f32 %v1155, %v1166
        %v1176 = vmul.f32 %v1156, %v1166
        %v1177 = vmul.f32 %v1157, %v1166
        %v1178 = vmul.f32 %v1158, %v1166
        %v1179 = vmul.f32 %v1159, %v1166
        %v1180 = vmul.f32 %v1160, %v1166
        %v1181 = vmul.f32 %v1161, %v1166
        %v1182 = vmul.f32 %v1162, %v1166
        %v1183 = vadd.f32 %v1131, %v1167
        %v1184 = vadd.f32 %v1132, %v1168
        %v1185 = vadd.f32 %v1133, %v1169
        %v1186 = vadd.f32 %v1134, %v1170
        %v1187 = vadd.f32 %v1135, %v1171
        %v1188 = vadd.f32 %v1136, %v1172
        %v1189 = vadd.f32 %v1137, %v1173
        %v1190 = vadd.f32 %v1138, %v1174
        %v1191 = vadd.f32 %v1139, %v1175
        %v1192 = vadd.f32 %v1140, %v1176
        %v1193 = vadd.f32 %v1141, %v1177
        %v1194 = vadd.f32 %v1142, %v1178
        %v1195 = vadd.f32 %v1143, %v1179
        %v1196 = vadd.f32 %v1144, %v1180
        %v1197 = vadd.f32 %v1145, %v1181
        %v1198 = vadd.f32 %v1146, %v1182
        %v1199 = vld [vmem:[%s726 + $0x8] sm:$0xff]
        %v1200 = vld [vmem:[%s726 + $0x10] sm:$0xff]
        %v1201 = vld [vmem:[%s726 + $0x28] sm:$0xff]
        %v1202 = vld [vmem:[%s726 + $0x30] sm:$0xff]
        %v1203 = vld [vmem:[%s726 + $0x48] sm:$0xff]
        %v1204 = vld [vmem:[%s726 + $0x50] sm:$0xff]
        %v1205 = vld [vmem:[%s726 + $0x68] sm:$0xff]
        %v1206 = vld [vmem:[%s726 + $0x70] sm:$0xff]
        %v1207 = vld [vmem:[%s726 + $0x88] sm:$0xff]
        %v1208 = vld [vmem:[%s726 + $0x90] sm:$0xff]
        %v1209 = vld [vmem:[%s726 + $0xa8] sm:$0xff]
        %v1210 = vld [vmem:[%s726 + $0xb0] sm:$0xff]
        %v1211 = vld [vmem:[%s726 + $0xc8] sm:$0xff]
        %v1212 = vld [vmem:[%s726 + $0xd0] sm:$0xff]
        %v1213 = vld [vmem:[%s726 + $0xe8] sm:$0xff]
        %v1214 = vld [vmem:[%s726 + $0xf0] sm:$0xff]
        %v1215 = vlaneseq
        %v1216 = vshrl.u32 %v1215, 7
        %v1217 = vsub.s32 0, %v1216
        %v1218 = vrot.slane %v397, %v1217
        %v1219 = vmul.f32 %v1199, %v1218
        %v1220 = vmul.f32 %v1200, %v1218
        %v1221 = vmul.f32 %v1201, %v1218
        %v1222 = vmul.f32 %v1202, %v1218
        %v1223 = vmul.f32 %v1203, %v1218
        %v1224 = vmul.f32 %v1204, %v1218
        %v1225 = vmul.f32 %v1205, %v1218
        %v1226 = vmul.f32 %v1206, %v1218
        %v1227 = vmul.f32 %v1207, %v1218
        %v1228 = vmul.f32 %v1208, %v1218
        %v1229 = vmul.f32 %v1209, %v1218
        %v1230 = vmul.f32 %v1210, %v1218
        %v1231 = vmul.f32 %v1211, %v1218
        %v1232 = vmul.f32 %v1212, %v1218
        %v1233 = vmul.f32 %v1213, %v1218
        %v1234 = vmul.f32 %v1214, %v1218
        %v1235 = vadd.f32 %v1183, %v1219
        %v1236 = vadd.f32 %v1184, %v1220
        %v1237 = vadd.f32 %v1185, %v1221
        %v1238 = vadd.f32 %v1186, %v1222
        %v1239 = vadd.f32 %v1187, %v1223
        %v1240 = vadd.f32 %v1188, %v1224
        %v1241 = vadd.f32 %v1189, %v1225
        %v1242 = vadd.f32 %v1190, %v1226
        %v1243 = vadd.f32 %v1191, %v1227
        %v1244 = vadd.f32 %v1192, %v1228
        %v1245 = vadd.f32 %v1193, %v1229
        %v1246 = vadd.f32 %v1194, %v1230
        %v1247 = vadd.f32 %v1195, %v1231
        %v1248 = vadd.f32 %v1196, %v1232
        %v1249 = vadd.f32 %v1197, %v1233
        %v1250 = vadd.f32 %v1198, %v1234
        %v1251 = vld [vmem:[%s726 + $0x9] sm:$0xff]
        %v1252 = vld [vmem:[%s726 + $0x11] sm:$0xff]
        %v1253 = vld [vmem:[%s726 + $0x29] sm:$0xff]
        %v1254 = vld [vmem:[%s726 + $0x31] sm:$0xff]
        %v1255 = vld [vmem:[%s726 + $0x49] sm:$0xff]
        %v1256 = vld [vmem:[%s726 + $0x51] sm:$0xff]
        %v1257 = vld [vmem:[%s726 + $0x69] sm:$0xff]
        %v1258 = vld [vmem:[%s726 + $0x71] sm:$0xff]
        %v1259 = vld [vmem:[%s726 + $0x89] sm:$0xff]
        %v1260 = vld [vmem:[%s726 + $0x91] sm:$0xff]
        %v1261 = vld [vmem:[%s726 + $0xa9] sm:$0xff]
        %v1262 = vld [vmem:[%s726 + $0xb1] sm:$0xff]
        %v1263 = vld [vmem:[%s726 + $0xc9] sm:$0xff]
        %v1264 = vld [vmem:[%s726 + $0xd1] sm:$0xff]
        %v1265 = vld [vmem:[%s726 + $0xe9] sm:$0xff]
        %v1266 = vld [vmem:[%s726 + $0xf1] sm:$0xff]
        %v1267 = vlaneseq
        %v1268 = vshrl.u32 %v1267, 7
        %v1269 = vsub.s32 0, %v1268
        %v1270 = vrot.slane %v398, %v1269
        %v1271 = vmul.f32 %v1251, %v1270
        %v1272 = vmul.f32 %v1252, %v1270
        %v1273 = vmul.f32 %v1253, %v1270
        %v1274 = vmul.f32 %v1254, %v1270
        %v1275 = vmul.f32 %v1255, %v1270
        %v1276 = vmul.f32 %v1256, %v1270
        %v1277 = vmul.f32 %v1257, %v1270
        %v1278 = vmul.f32 %v1258, %v1270
        %v1279 = vmul.f32 %v1259, %v1270
        %v1280 = vmul.f32 %v1260, %v1270
        %v1281 = vmul.f32 %v1261, %v1270
        %v1282 = vmul.f32 %v1262, %v1270
        %v1283 = vmul.f32 %v1263, %v1270
        %v1284 = vmul.f32 %v1264, %v1270
        %v1285 = vmul.f32 %v1265, %v1270
        %v1286 = vmul.f32 %v1266, %v1270
        %v1287 = vadd.f32 %v1235, %v1271
        %v1288 = vadd.f32 %v1236, %v1272
        %v1289 = vadd.f32 %v1237, %v1273
        %v1290 = vadd.f32 %v1238, %v1274
        %v1291 = vadd.f32 %v1239, %v1275
        %v1292 = vadd.f32 %v1240, %v1276
        %v1293 = vadd.f32 %v1241, %v1277
        %v1294 = vadd.f32 %v1242, %v1278
        %v1295 = vadd.f32 %v1243, %v1279
        %v1296 = vadd.f32 %v1244, %v1280
        %v1297 = vadd.f32 %v1245, %v1281
        %v1298 = vadd.f32 %v1246, %v1282
        %v1299 = vadd.f32 %v1247, %v1283
        %v1300 = vadd.f32 %v1248, %v1284
        %v1301 = vadd.f32 %v1249, %v1285
        %v1302 = vadd.f32 %v1250, %v1286
        %s1303 = sadd.s32 0, 2
        %s1304 = smul.u32 %s1303, 32
        %s1305 = scalar_lea.vmem [#allocation2], %s1304
        %v1306 = vld [vmem:[%s1305 + $0x7] sm:$0xff]
        %v1307 = vld [vmem:[%s1305 + $0xf] sm:$0xff]
        %v1308 = vld [vmem:[%s1305 + $0x27] sm:$0xff]
        %v1309 = vld [vmem:[%s1305 + $0x2f] sm:$0xff]
        %v1310 = vld [vmem:[%s1305 + $0x47] sm:$0xff]
        %v1311 = vld [vmem:[%s1305 + $0x4f] sm:$0xff]
        %v1312 = vld [vmem:[%s1305 + $0x67] sm:$0xff]
        %v1313 = vld [vmem:[%s1305 + $0x6f] sm:$0xff]
        %v1314 = vld [vmem:[%s1305 + $0x87] sm:$0xff]
        %v1315 = vld [vmem:[%s1305 + $0x8f] sm:$0xff]
        %v1316 = vld [vmem:[%s1305 + $0xa7] sm:$0xff]
        %v1317 = vld [vmem:[%s1305 + $0xaf] sm:$0xff]
        %v1318 = vld [vmem:[%s1305 + $0xc7] sm:$0xff]
        %v1319 = vld [vmem:[%s1305 + $0xcf] sm:$0xff]
        %v1320 = vld [vmem:[%s1305 + $0xe7] sm:$0xff]
        %v1321 = vld [vmem:[%s1305 + $0xef] sm:$0xff]
        %v1322 = vlaneseq
        %v1323 = vshrl.u32 %v1322, 7
        %v1324 = vsub.s32 0, %v1323
        %v1325 = vrot.slane %v399, %v1324
        %v1326 = vmul.f32 %v1306, %v1325
        %v1327 = vmul.f32 %v1307, %v1325
        %v1328 = vmul.f32 %v1308, %v1325
        %v1329 = vmul.f32 %v1309, %v1325
        %v1330 = vmul.f32 %v1310, %v1325
        %v1331 = vmul.f32 %v1311, %v1325
        %v1332 = vmul.f32 %v1312, %v1325
        %v1333 = vmul.f32 %v1313, %v1325
        %v1334 = vmul.f32 %v1314, %v1325
        %v1335 = vmul.f32 %v1315, %v1325
        %v1336 = vmul.f32 %v1316, %v1325
        %v1337 = vmul.f32 %v1317, %v1325
        %v1338 = vmul.f32 %v1318, %v1325
        %v1339 = vmul.f32 %v1319, %v1325
        %v1340 = vmul.f32 %v1320, %v1325
        %v1341 = vmul.f32 %v1321, %v1325
        %v1342 = vadd.f32 %v1287, %v1326
        %v1343 = vadd.f32 %v1288, %v1327
        %v1344 = vadd.f32 %v1289, %v1328
        %v1345 = vadd.f32 %v1290, %v1329
        %v1346 = vadd.f32 %v1291, %v1330
        %v1347 = vadd.f32 %v1292, %v1331
        %v1348 = vadd.f32 %v1293, %v1332
        %v1349 = vadd.f32 %v1294, %v1333
        %v1350 = vadd.f32 %v1295, %v1334
        %v1351 = vadd.f32 %v1296, %v1335
        %v1352 = vadd.f32 %v1297, %v1336
        %v1353 = vadd.f32 %v1298, %v1337
        %v1354 = vadd.f32 %v1299, %v1338
        %v1355 = vadd.f32 %v1300, %v1339
        %v1356 = vadd.f32 %v1301, %v1340
        %v1357 = vadd.f32 %v1302, %v1341
        %v1358 = vld [vmem:[%s1305 + $0x8] sm:$0xff]
        %v1359 = vld [vmem:[%s1305 + $0x10] sm:$0xff]
        %v1360 = vld [vmem:[%s1305 + $0x28] sm:$0xff]
        %v1361 = vld [vmem:[%s1305 + $0x30] sm:$0xff]
        %v1362 = vld [vmem:[%s1305 + $0x48] sm:$0xff]
        %v1363 = vld [vmem:[%s1305 + $0x50] sm:$0xff]
        %v1364 = vld [vmem:[%s1305 + $0x68] sm:$0xff]
        %v1365 = vld [vmem:[%s1305 + $0x70] sm:$0xff]
        %v1366 = vld [vmem:[%s1305 + $0x88] sm:$0xff]
        %v1367 = vld [vmem:[%s1305 + $0x90] sm:$0xff]
        %v1368 = vld [vmem:[%s1305 + $0xa8] sm:$0xff]
        %v1369 = vld [vmem:[%s1305 + $0xb0] sm:$0xff]
        %v1370 = vld [vmem:[%s1305 + $0xc8] sm:$0xff]
        %v1371 = vld [vmem:[%s1305 + $0xd0] sm:$0xff]
        %v1372 = vld [vmem:[%s1305 + $0xe8] sm:$0xff]
        %v1373 = vld [vmem:[%s1305 + $0xf0] sm:$0xff]
        %v1374 = vlaneseq
        %v1375 = vshrl.u32 %v1374, 7
        %v1376 = vsub.s32 0, %v1375
        %v1377 = vrot.slane %v400, %v1376
        %v1378 = vmul.f32 %v1358, %v1377
        %v1379 = vmul.f32 %v1359, %v1377
        %v1380 = vmul.f32 %v1360, %v1377
        %v1381 = vmul.f32 %v1361, %v1377
        %v1382 = vmul.f32 %v1362, %v1377
        %v1383 = vmul.f32 %v1363, %v1377
        %v1384 = vmul.f32 %v1364, %v1377
        %v1385 = vmul.f32 %v1365, %v1377
        %v1386 = vmul.f32 %v1366, %v1377
        %v1387 = vmul.f32 %v1367, %v1377
        %v1388 = vmul.f32 %v1368, %v1377
        %v1389 = vmul.f32 %v1369, %v1377
        %v1390 = vmul.f32 %v1370, %v1377
        %v1391 = vmul.f32 %v1371, %v1377
        %v1392 = vmul.f32 %v1372, %v1377
        %v1393 = vmul.f32 %v1373, %v1377
        %v1394 = vadd.f32 %v1342, %v1378
        %v1395 = vadd.f32 %v1343, %v1379
        %v1396 = vadd.f32 %v1344, %v1380
        %v1397 = vadd.f32 %v1345, %v1381
        %v1398 = vadd.f32 %v1346, %v1382
        %v1399 = vadd.f32 %v1347, %v1383
        %v1400 = vadd.f32 %v1348, %v1384
        %v1401 = vadd.f32 %v1349, %v1385
        %v1402 = vadd.f32 %v1350, %v1386
        %v1403 = vadd.f32 %v1351, %v1387
        %v1404 = vadd.f32 %v1352, %v1388
        %v1405 = vadd.f32 %v1353, %v1389
        %v1406 = vadd.f32 %v1354, %v1390
        %v1407 = vadd.f32 %v1355, %v1391
        %v1408 = vadd.f32 %v1356, %v1392
        %v1409 = vadd.f32 %v1357, %v1393
        %v1410 = vld [vmem:[%s1305 + $0x9] sm:$0xff]
        %v1411 = vld [vmem:[%s1305 + $0x11] sm:$0xff]
        %v1412 = vld [vmem:[%s1305 + $0x29] sm:$0xff]
        %v1413 = vld [vmem:[%s1305 + $0x31] sm:$0xff]
        %v1414 = vld [vmem:[%s1305 + $0x49] sm:$0xff]
        %v1415 = vld [vmem:[%s1305 + $0x51] sm:$0xff]
        %v1416 = vld [vmem:[%s1305 + $0x69] sm:$0xff]
        %v1417 = vld [vmem:[%s1305 + $0x71] sm:$0xff]
        %v1418 = vld [vmem:[%s1305 + $0x89] sm:$0xff]
        %v1419 = vld [vmem:[%s1305 + $0x91] sm:$0xff]
        %v1420 = vld [vmem:[%s1305 + $0xa9] sm:$0xff]
        %v1421 = vld [vmem:[%s1305 + $0xb1] sm:$0xff]
        %v1422 = vld [vmem:[%s1305 + $0xc9] sm:$0xff]
        %v1423 = vld [vmem:[%s1305 + $0xd1] sm:$0xff]
        %v1424 = vld [vmem:[%s1305 + $0xe9] sm:$0xff]
        %v1425 = vld [vmem:[%s1305 + $0xf1] sm:$0xff]
        %v1426 = vlaneseq
        %v1427 = vshrl.u32 %v1426, 7
        %v1428 = vsub.s32 0, %v1427
        %v1429 = vrot.slane %v401, %v1428
        %v1430 = vmul.f32 %v1410, %v1429
        %v1431 = vmul.f32 %v1411, %v1429
        %v1432 = vmul.f32 %v1412, %v1429
        %v1433 = vmul.f32 %v1413, %v1429
        %v1434 = vmul.f32 %v1414, %v1429
        %v1435 = vmul.f32 %v1415, %v1429
        %v1436 = vmul.f32 %v1416, %v1429
        %v1437 = vmul.f32 %v1417, %v1429
        %v1438 = vmul.f32 %v1418, %v1429
        %v1439 = vmul.f32 %v1419, %v1429
        %v1440 = vmul.f32 %v1420, %v1429
        %v1441 = vmul.f32 %v1421, %v1429
        %v1442 = vmul.f32 %v1422, %v1429
        %v1443 = vmul.f32 %v1423, %v1429
        %v1444 = vmul.f32 %v1424, %v1429
        %v1445 = vmul.f32 %v1425, %v1429
        %v1446 = vadd.f32 %v1394, %v1430
        %v1447 = vadd.f32 %v1395, %v1431
        %v1448 = vadd.f32 %v1396, %v1432
        %v1449 = vadd.f32 %v1397, %v1433
        %v1450 = vadd.f32 %v1398, %v1434
        %v1451 = vadd.f32 %v1399, %v1435
        %v1452 = vadd.f32 %v1400, %v1436
        %v1453 = vadd.f32 %v1401, %v1437
        %v1454 = vadd.f32 %v1402, %v1438
        %v1455 = vadd.f32 %v1403, %v1439
        %v1456 = vadd.f32 %v1404, %v1440
        %v1457 = vadd.f32 %v1405, %v1441
        %v1458 = vadd.f32 %v1406, %v1442
        %v1459 = vadd.f32 %v1407, %v1443
        %v1460 = vadd.f32 %v1408, %v1444
        %v1461 = vadd.f32 %v1409, %v1445
        %v1463 = vlaneseq
        %v1464 = vshrl.u32 %v1463, 7
        %v1465 = vsub.s32 0, %v1464
        %v1466 = vrot.slane %v402, %v1465
        %v1468 = vmul.f32 %v1446, %v1466
        %v1469 = vmul.f32 %v1447, %v1466
        %v1470 = vmul.f32 %v1448, %v1466
        %v1471 = vmul.f32 %v1449, %v1466
        %v1472 = vmul.f32 %v1450, %v1466
        %v1473 = vmul.f32 %v1451, %v1466
        %v1474 = vmul.f32 %v1452, %v1466
        %v1475 = vmul.f32 %v1453, %v1466
        %v1476 = vmul.f32 %v1454, %v1466
        %v1477 = vmul.f32 %v1455, %v1466
        %v1478 = vmul.f32 %v1456, %v1466
        %v1479 = vmul.f32 %v1457, %v1466
        %v1480 = vmul.f32 %v1458, %v1466
        %v1481 = vmul.f32 %v1459, %v1466
        %v1482 = vmul.f32 %v1460, %v1466
        %v1483 = vmul.f32 %v1461, %v1466
        %v1485 = vlaneseq
        %v1486 = vshrl.u32 %v1485, 7
        %v1487 = vsub.s32 0, %v1486
        %v1488 = vrot.slane %v403, %v1487
        %v1490 = vadd.f32 %v1468, %v1488
        %v1491 = vadd.f32 %v1469, %v1488
        %v1492 = vadd.f32 %v1470, %v1488
        %v1493 = vadd.f32 %v1471, %v1488
        %v1494 = vadd.f32 %v1472, %v1488
        %v1495 = vadd.f32 %v1473, %v1488
        %v1496 = vadd.f32 %v1474, %v1488
        %v1497 = vadd.f32 %v1475, %v1488
        %v1498 = vadd.f32 %v1476, %v1488
        %v1499 = vadd.f32 %v1477, %v1488
        %v1500 = vadd.f32 %v1478, %v1488
        %v1501 = vadd.f32 %v1479, %v1488
        %v1502 = vadd.f32 %v1480, %v1488
        %v1503 = vadd.f32 %v1481, %v1488
        %v1504 = vadd.f32 %v1482, %v1488
        %v1505 = vadd.f32 %v1483, %v1488
        %v1506 = vmax.f32 %v1490, 0.0
        %v1507 = vmax.f32 %v1491, 0.0
        %v1508 = vmax.f32 %v1492, 0.0
        %v1509 = vmax.f32 %v1493, 0.0
        %v1510 = vmax.f32 %v1494, 0.0
        %v1511 = vmax.f32 %v1495, 0.0
        %v1512 = vmax.f32 %v1496, 0.0
        %v1513 = vmax.f32 %v1497, 0.0
        %v1514 = vmax.f32 %v1498, 0.0
        %v1515 = vmax.f32 %v1499, 0.0
        %v1516 = vmax.f32 %v1500, 0.0
        %v1517 = vmax.f32 %v1501, 0.0
        %v1518 = vmax.f32 %v1502, 0.0
        %v1519 = vmax.f32 %v1503, 0.0
        %v1520 = vmax.f32 %v1504, 0.0
        %v1521 = vmax.f32 %v1505, 0.0
        %v1522 = vmin.f32 %v1506, 6.0
        %v1523 = vmin.f32 %v1507, 6.0
        %v1524 = vmin.f32 %v1508, 6.0
        %v1525 = vmin.f32 %v1509, 6.0
        %v1526 = vmin.f32 %v1510, 6.0
        %v1527 = vmin.f32 %v1511, 6.0
        %v1528 = vmin.f32 %v1512, 6.0
        %v1529 = vmin.f32 %v1513, 6.0
        %v1530 = vmin.f32 %v1514, 6.0
        %v1531 = vmin.f32 %v1515, 6.0
        %v1532 = vmin.f32 %v1516, 6.0
        %v1533 = vmin.f32 %v1517, 6.0
        %v1534 = vmin.f32 %v1518, 6.0
        %v1535 = vmin.f32 %v1519, 6.0
        %v1536 = vmin.f32 %v1520, 6.0
        %v1537 = vmin.f32 %v1521, 6.0
        %1538 = vmatprep.subr.mxu0 0.0
        %1539 = vmatpush1.msra.mxu0 %v404
        %1540 = vmatprep.subr.mxu0 0.0
        %1541 = vmatpush1.msra.mxu0 %v405
        %1542 = vmatprep.subr.mxu0 0.0
        %1543 = vmatpush1.msra.mxu0 %v406
        %1544 = vmatprep.subr.mxu0 0.0
        %1545 = vmatpush1.msra.mxu0 %v407
        %1546 = vmatprep.subr.mxu0 0.0
        %1547 = vmatpush1.msra.mxu0 %v408
        %1548 = vmatprep.subr.mxu0 0.0
        %1549 = vmatpush1.msra.mxu0 %v409
        %1550 = vmatprep.subr.mxu0 0.0
        %1551 = vmatpush1.msra.mxu0 %v410
        %1552 = vmatprep.subr.mxu0 0.0
        %1553 = vmatpush1.msra.mxu0 %v411
        %1554 = vmatprep.subr.mxu0 0.0
        %1555 = vmatpush1.msra.mxu0 %v412
        %1556 = vmatprep.subr.mxu0 0.0
        %1557 = vmatpush1.msra.mxu0 %v413
        %1558 = vmatprep.subr.mxu0 0.0
        %1559 = vmatpush1.msra.mxu0 %v414
        %1560 = vmatprep.subr.mxu0 0.0
        %1561 = vmatpush1.msra.mxu0 %v415
        %1562 = vmatprep.subr.mxu0 0.0
        %1563 = vmatpush1.msra.mxu0 %v416
        %1564 = vmatprep.subr.mxu0 0.0
        %1565 = vmatpush1.msra.mxu0 %v417
        %1566 = vmatprep.subr.mxu0 0.0
        %1567 = vmatpush1.msra.mxu0 %v418
        %1568 = vmatprep.subr.mxu0 0.0
        %1569 = vmatpush1.msra.mxu0 %v419
        %1570 = vmatprep.subr.mxu0 0.0
        %1571 = vmatpush1.msra.mxu0 0.0
        %1572 = vmatprep.subr.mxu0 0.0
        %1573 = vmatpush1.msra.mxu0 0.0
        %1574 = vmatprep.subr.mxu0 0.0
        %1575 = vmatpush1.msra.mxu0 0.0
        %1576 = vmatprep.subr.mxu0 0.0
        %1577 = vmatpush1.msra.mxu0 0.0
        %1578 = vmatprep.subr.mxu0 0.0
        %1579 = vmatpush1.msra.mxu0 0.0
        %1580 = vmatprep.subr.mxu0 0.0
        %1581 = vmatpush1.msra.mxu0 0.0
        %1582 = vmatprep.subr.mxu0 0.0
        %1583 = vmatpush1.msra.mxu0 0.0
        %1584 = vmatprep.subr.mxu0 0.0
        %1585 = vmatpush1.msra.mxu0 0.0
        %1586 = vmatprep.subr.mxu0 0.0
        %1587 = vmatpush1.msra.mxu0 0.0
        %1588 = vmatprep.subr.mxu0 0.0
        %1589 = vmatpush1.msra.mxu0 0.0
        %1590 = vmatprep.subr.mxu0 0.0
        %1591 = vmatpush1.msra.mxu0 0.0
        %1592 = vmatprep.subr.mxu0 0.0
        %1593 = vmatpush1.msra.mxu0 0.0
        %1594 = vmatprep.subr.mxu0 0.0
        %1595 = vmatpush1.msra.mxu0 0.0
        %1596 = vmatprep.subr.mxu0 0.0
        %1597 = vmatpush1.msra.mxu0 0.0
        %1598 = vmatprep.subr.mxu0 0.0
        %1599 = vmatpush1.msra.mxu0 0.0
        %1600 = vmatprep.subr.mxu0 0.0
        %1601 = vmatpush1.msra.mxu0 0.0
        %1602 = vmatprep.mubr.f32.mxu0 0.0
        %1603 = vmatmul.mubr.f32.gmra.mrb[0].mxu0 %v1522
        %v1604 = vpop.f32.mrb[0].mxu0
        %v1605 = vadd.f32 0.0, %v1604
        %v1606 = vpop.f32.mrb[0].mxu0
        %1607 = vmatprep.mubr.f32.mxu0 0.0
        %1608 = vmatmul.mubr.f32.gmra.mrb[0].mxu0 %v1523
        %v1609 = vpop.f32.mrb[0].mxu0
        %v1610 = vadd.f32 0.0, %v1609
        %v1611 = vpop.f32.mrb[0].mxu0
        %1612 = vmatprep.mubr.f32.mxu0 0.0
        %1613 = vmatmul.mubr.f32.gmra.mrb[0].mxu0 %v1524
        %v1614 = vpop.f32.mrb[0].mxu0
        %v1615 = vadd.f32 0.0, %v1614
        %v1616 = vpop.f32.mrb[0].mxu0
        %1617 = vmatprep.mubr.f32.mxu0 0.0
        %1618 = vmatmul.mubr.f32.gmra.mrb[0].mxu0 %v1525
        %v1619 = vpop.f32.mrb[0].mxu0
        %v1620 = vadd.f32 0.0, %v1619
        %v1621 = vpop.f32.mrb[0].mxu0
        %1622 = vmatprep.mubr.f32.mxu0 0.0
        %1623 = vmatmul.mubr.f32.gmra.mrb[0].mxu0 %v1526
        %v1624 = vpop.f32.mrb[0].mxu0
        %v1625 = vadd.f32 0.0, %v1624
        %v1626 = vpop.f32.mrb[0].mxu0
        %1627 = vmatprep.mubr.f32.mxu0 0.0
        %1628 = vmatmul.mubr.f32.gmra.mrb[0].mxu0 %v1527
        %v1629 = vpop.f32.mrb[0].mxu0
        %v1630 = vadd.f32 0.0, %v1629
        %v1631 = vpop.f32.mrb[0].mxu0
        %1632 = vmatprep.mubr.f32.mxu0 0.0
        %1633 = vmatmul.mubr.f32.gmra.mrb[0].mxu0 %v1528
        %v1634 = vpop.f32.mrb[0].mxu0
        %v1635 = vadd.f32 0.0, %v1634
        %v1636 = vpop.f32.mrb[0].mxu0
        %1637 = vmatprep.mubr.f32.mxu0 0.0
        %1638 = vmatmul.mubr.f32.gmra.mrb[0].mxu0 %v1529
        %v1639 = vpop.f32.mrb[0].mxu0
        %v1640 = vadd.f32 0.0, %v1639
        %v1641 = vpop.f32.mrb[0].mxu0
        %1642 = vmatprep.mubr.f32.mxu0 0.0
        %1643 = vmatmul.mubr.f32.gmra.mrb[0].mxu0 %v1530
        %v1644 = vpop.f32.mrb[0].mxu0
        %v1645 = vadd.f32 0.0, %v1644
        %v1646 = vpop.f32.mrb[0].mxu0
        %1647 = vmatprep.mubr.f32.mxu0 0.0
        %1648 = vmatmul.mubr.f32.gmra.mrb[0].mxu0 %v1531
        %v1649 = vpop.f32.mrb[0].mxu0
        %v1650 = vadd.f32 0.0, %v1649
        %v1651 = vpop.f32.mrb[0].mxu0
        %1652 = vmatprep.mubr.f32.mxu0 0.0
        %1653 = vmatmul.mubr.f32.gmra.mrb[0].mxu0 %v1532
        %v1654 = vpop.f32.mrb[0].mxu0
        %v1655 = vadd.f32 0.0, %v1654
        %v1656 = vpop.f32.mrb[0].mxu0
        %1657 = vmatprep.mubr.f32.mxu0 0.0
        %1658 = vmatmul.mubr.f32.gmra.mrb[0].mxu0 %v1533
        %v1659 = vpop.f32.mrb[0].mxu0
        %v1660 = vadd.f32 0.0, %v1659
        %v1661 = vpop.f32.mrb[0].mxu0
        %1662 = vmatprep.mubr.f32.mxu0 0.0
        %1663 = vmatmul.mubr.f32.gmra.mrb[0].mxu0 %v1534
        %v1664 = vpop.f32.mrb[0].mxu0
        %v1665 = vadd.f32 0.0, %v1664
        %v1666 = vpop.f32.mrb[0].mxu0
        %1667 = vmatprep.mubr.f32.mxu0 0.0
        %1668 = vmatmul.mubr.f32.gmra.mrb[0].mxu0 %v1535
        %v1669 = vpop.f32.mrb[0].mxu0
        %v1670 = vadd.f32 0.0, %v1669
        %v1671 = vpop.f32.mrb[0].mxu0
        %1672 = vmatprep.mubr.f32.mxu0 0.0
        %1673 = vmatmul.mubr.f32.gmra.mrb[0].mxu0 %v1536
        %v1674 = vpop.f32.mrb[0].mxu0
        %v1675 = vadd.f32 0.0, %v1674
        %v1676 = vpop.f32.mrb[0].mxu0
        %1677 = vmatprep.mubr.f32.mxu0 0.0
        %1678 = vmatmul.mubr.f32.gmra.mrb[0].mxu0 %v1537
        %v1679 = vpop.f32.mrb[0].mxu0
        %v1680 = vadd.f32 0.0, %v1679
        %v1681 = vpop.f32.mrb[0].mxu0
        %1682 = vdwg.mxu0
        %v1684 = vlaneseq
        %v1685 = vshrl.u32 %v1684, 7
        %v1686 = vsub.s32 0, %v1685
        %v1687 = vrot.slane %v420, %v1686
        %v1689 = vmul.f32 %v1605, %v1687
        %v1690 = vmul.f32 %v1610, %v1687
        %v1691 = vmul.f32 %v1615, %v1687
        %v1692 = vmul.f32 %v1620, %v1687
        %v1693 = vmul.f32 %v1625, %v1687
        %v1694 = vmul.f32 %v1630, %v1687
        %v1695 = vmul.f32 %v1635, %v1687
        %v1696 = vmul.f32 %v1640, %v1687
        %v1697 = vmul.f32 %v1645, %v1687
        %v1698 = vmul.f32 %v1650, %v1687
        %v1699 = vmul.f32 %v1655, %v1687
        %v1700 = vmul.f32 %v1660, %v1687
        %v1701 = vmul.f32 %v1665, %v1687
        %v1702 = vmul.f32 %v1670, %v1687
        %v1703 = vmul.f32 %v1675, %v1687
        %v1704 = vmul.f32 %v1680, %v1687
        %v1706 = vlaneseq
        %v1707 = vshrl.u32 %v1706, 7
        %v1708 = vsub.s32 0, %v1707
        %v1709 = vrot.slane %v421, %v1708
        %v1711 = vadd.f32 %v1689, %v1709
        %v1712 = vadd.f32 %v1690, %v1709
        %v1713 = vadd.f32 %v1691, %v1709
        %v1714 = vadd.f32 %v1692, %v1709
        %v1715 = vadd.f32 %v1693, %v1709
        %v1716 = vadd.f32 %v1694, %v1709
        %v1717 = vadd.f32 %v1695, %v1709
        %v1718 = vadd.f32 %v1696, %v1709
        %v1719 = vadd.f32 %v1697, %v1709
        %v1720 = vadd.f32 %v1698, %v1709
        %v1721 = vadd.f32 %v1699, %v1709
        %v1722 = vadd.f32 %v1700, %v1709
        %v1723 = vadd.f32 %v1701, %v1709
        %v1724 = vadd.f32 %v1702, %v1709
        %v1725 = vadd.f32 %v1703, %v1709
        %v1726 = vadd.f32 %v1704, %v1709
        %v1727 = vld [vmem:[%s486] sm:$0xff]
        %v1728 = vld [vmem:[%s486 + $0x8] sm:$0xff]
        %v1729 = vld [vmem:[%s486 + $0x10] sm:$0xff]
        %v1730 = vld [vmem:[%s486 + $0x18] sm:$0xff]
        %v1731 = vld [vmem:[%s486 + $0x20] sm:$0xff]
        %v1732 = vld [vmem:[%s486 + $0x28] sm:$0xff]
        %v1733 = vld [vmem:[%s486 + $0x30] sm:$0xff]
        %v1734 = vld [vmem:[%s486 + $0x38] sm:$0xff]
        %v1735 = vld [vmem:[%s486 + $0x40] sm:$0xff]
        %v1736 = vld [vmem:[%s486 + $0x48] sm:$0xff]
        %v1737 = vld [vmem:[%s486 + $0x50] sm:$0xff]
        %v1738 = vld [vmem:[%s486 + $0x58] sm:$0xff]
        %v1739 = vld [vmem:[%s486 + $0x60] sm:$0xff]
        %v1740 = vld [vmem:[%s486 + $0x68] sm:$0xff]
        %v1741 = vld [vmem:[%s486 + $0x70] sm:$0xff]
        %v1742 = vld [vmem:[%s486 + $0x78] sm:$0xff]
        %v1743 = vadd.f32 %v1711, %v1727
        %v1744 = vadd.f32 %v1712, %v1728
        %v1745 = vadd.f32 %v1713, %v1729
        %v1746 = vadd.f32 %v1714, %v1730
        %v1747 = vadd.f32 %v1715, %v1731
        %v1748 = vadd.f32 %v1716, %v1732
        %v1749 = vadd.f32 %v1717, %v1733
        %v1750 = vadd.f32 %v1718, %v1734
        %v1751 = vadd.f32 %v1719, %v1735
        %v1752 = vadd.f32 %v1720, %v1736
        %v1753 = vadd.f32 %v1721, %v1737
        %v1754 = vadd.f32 %v1722, %v1738
        %v1755 = vadd.f32 %v1723, %v1739
        %v1756 = vadd.f32 %v1724, %v1740
        %v1757 = vadd.f32 %v1725, %v1741
        %v1758 = vadd.f32 %v1726, %v1742
        %s1759 = scalar_lea.vmem %s392, %s485
        %vm1760 = vcmask 31744
        %1761 = vst.msk [vmem:[%s1759] sm:$0xff] %vm1760, %v1743
        %1762 = vst.msk [vmem:[%s1759 + $0x8] sm:$0xff] %vm1760, %v1744
        %1763 = vst.msk [vmem:[%s1759 + $0x10] sm:$0xff] %vm1760, %v1745
        %1764 = vst.msk [vmem:[%s1759 + $0x18] sm:$0xff] %vm1760, %v1746
        %1765 = vst.msk [vmem:[%s1759 + $0x20] sm:$0xff] %vm1760, %v1747
        %1766 = vst.msk [vmem:[%s1759 + $0x28] sm:$0xff] %vm1760, %v1748
        %1767 = vst.msk [vmem:[%s1759 + $0x30] sm:$0xff] %vm1760, %v1749
        %1768 = vst.msk [vmem:[%s1759 + $0x38] sm:$0xff] %vm1760, %v1750
        %1769 = vst.msk [vmem:[%s1759 + $0x40] sm:$0xff] %vm1760, %v1751
        %1770 = vst.msk [vmem:[%s1759 + $0x48] sm:$0xff] %vm1760, %v1752
        %1771 = vst.msk [vmem:[%s1759 + $0x50] sm:$0xff] %vm1760, %v1753
        %1772 = vst.msk [vmem:[%s1759 + $0x58] sm:$0xff] %vm1760, %v1754
        %1773 = vst.msk [vmem:[%s1759 + $0x60] sm:$0xff] %vm1760, %v1755
        %1774 = vst.msk [vmem:[%s1759 + $0x68] sm:$0xff] %vm1760, %v1756
        %1775 = vst.msk [vmem:[%s1759 + $0x70] sm:$0xff] %vm1760, %v1757
        %1776 = vst.msk [vmem:[%s1759 + $0x78] sm:$0xff] %vm1760, %v1758
        %s1777 = smul.u32 8, 32
        %s1778 = scalar_lea.vmem [#allocation2], %s1777
        %v1779 = vld [vmem:[%s1778 + $0x7] sm:$0xff]
        %v1780 = vld [vmem:[%s1778 + $0xf] sm:$0xff]
        %v1781 = vld [vmem:[%s1778 + $0x27] sm:$0xff]
        %v1782 = vld [vmem:[%s1778 + $0x2f] sm:$0xff]
        %v1783 = vld [vmem:[%s1778 + $0x47] sm:$0xff]
        %v1784 = vld [vmem:[%s1778 + $0x4f] sm:$0xff]
        %v1785 = vld [vmem:[%s1778 + $0x67] sm:$0xff]
        %v1786 = vld [vmem:[%s1778 + $0x6f] sm:$0xff]
        %v1787 = vld [vmem:[%s1778 + $0x87] sm:$0xff]
        %v1788 = vld [vmem:[%s1778 + $0x8f] sm:$0xff]
        %v1789 = vld [vmem:[%s1778 + $0xa7] sm:$0xff]
        %v1790 = vld [vmem:[%s1778 + $0xaf] sm:$0xff]
        %v1791 = vld [vmem:[%s1778 + $0xc7] sm:$0xff]
        %v1792 = vld [vmem:[%s1778 + $0xcf] sm:$0xff]
        %v1793 = vld [vmem:[%s1778 + $0xe7] sm:$0xff]
        %v1794 = vld [vmem:[%s1778 + $0xef] sm:$0xff]
        %v1795 = vmul.f32 %v1779, %v1010
        %v1796 = vmul.f32 %v1780, %v1010
        %v1797 = vmul.f32 %v1781, %v1010
        %v1798 = vmul.f32 %v1782, %v1010
        %v1799 = vmul.f32 %v1783, %v1010
        %v1800 = vmul.f32 %v1784, %v1010
        %v1801 = vmul.f32 %v1785, %v1010
        %v1802 = vmul.f32 %v1786, %v1010
        %v1803 = vmul.f32 %v1787, %v1010
        %v1804 = vmul.f32 %v1788, %v1010
        %v1805 = vmul.f32 %v1789, %v1010
        %v1806 = vmul.f32 %v1790, %v1010
        %v1807 = vmul.f32 %v1791, %v1010
        %v1808 = vmul.f32 %v1792, %v1010
        %v1809 = vmul.f32 %v1793, %v1010
        %v1810 = vmul.f32 %v1794, %v1010
        %v1811 = vadd.f32 %v1795, 0.0
        %v1812 = vadd.f32 %v1796, 0.0
        %v1813 = vadd.f32 %v1797, 0.0
        %v1814 = vadd.f32 %v1798, 0.0
        %v1815 = vadd.f32 %v1799, 0.0
        %v1816 = vadd.f32 %v1800, 0.0
        %v1817 = vadd.f32 %v1801, 0.0
        %v1818 = vadd.f32 %v1802, 0.0
        %v1819 = vadd.f32 %v1803, 0.0
        %v1820 = vadd.f32 %v1804, 0.0
        %v1821 = vadd.f32 %v1805, 0.0
        %v1822 = vadd.f32 %v1806, 0.0
        %v1823 = vadd.f32 %v1807, 0.0
        %v1824 = vadd.f32 %v1808, 0.0
        %v1825 = vadd.f32 %v1809, 0.0
        %v1826 = vadd.f32 %v1810, 0.0
        %v1827 = vld [vmem:[%s1778 + $0x8] sm:$0xff]
        %v1828 = vld [vmem:[%s1778 + $0x10] sm:$0xff]
        %v1829 = vld [vmem:[%s1778 + $0x28] sm:$0xff]
        %v1830 = vld [vmem:[%s1778 + $0x30] sm:$0xff]
        %v1831 = vld [vmem:[%s1778 + $0x48] sm:$0xff]
        %v1832 = vld [vmem:[%s1778 + $0x50] sm:$0xff]
        %v1833 = vld [vmem:[%s1778 + $0x68] sm:$0xff]
        %v1834 = vld [vmem:[%s1778 + $0x70] sm:$0xff]
        %v1835 = vld [vmem:[%s1778 + $0x88] sm:$0xff]
        %v1836 = vld [vmem:[%s1778 + $0x90] sm:$0xff]
        %v1837 = vld [vmem:[%s1778 + $0xa8] sm:$0xff]
        %v1838 = vld [vmem:[%s1778 + $0xb0] sm:$0xff]
        %v1839 = vld [vmem:[%s1778 + $0xc8] sm:$0xff]
        %v1840 = vld [vmem:[%s1778 + $0xd0] sm:$0xff]
        %v1841 = vld [vmem:[%s1778 + $0xe8] sm:$0xff]
        %v1842 = vld [vmem:[%s1778 + $0xf0] sm:$0xff]
        %v1843 = vmul.f32 %v1827, %v1062
        %v1844 = vmul.f32 %v1828, %v1062
        %v1845 = vmul.f32 %v1829, %v1062
        %v1846 = vmul.f32 %v1830, %v1062
        %v1847 = vmul.f32 %v1831, %v1062
        %v1848 = vmul.f32 %v1832, %v1062
        %v1849 = vmul.f32 %v1833, %v1062
        %v1850 = vmul.f32 %v1834, %v1062
        %v1851 = vmul.f32 %v1835, %v1062
        %v1852 = vmul.f32 %v1836, %v1062
        %v1853 = vmul.f32 %v1837, %v1062
        %v1854 = vmul.f32 %v1838, %v1062
        %v1855 = vmul.f32 %v1839, %v1062
        %v1856 = vmul.f32 %v1840, %v1062
        %v1857 = vmul.f32 %v1841, %v1062
        %v1858 = vmul.f32 %v1842, %v1062
        %v1859 = vadd.f32 %v1811, %v1843
        %v1860 = vadd.f32 %v1812, %v1844
        %v1861 = vadd.f32 %v1813, %v1845
        %v1862 = vadd.f32 %v1814, %v1846
        %v1863 = vadd.f32 %v1815, %v1847
        %v1864 = vadd.f32 %v1816, %v1848
        %v1865 = vadd.f32 %v1817, %v1849
        %v1866 = vadd.f32 %v1818, %v1850
        %v1867 = vadd.f32 %v1819, %v1851
        %v1868 = vadd.f32 %v1820, %v1852
        %v1869 = vadd.f32 %v1821, %v1853
        %v1870 = vadd.f32 %v1822, %v1854
        %v1871 = vadd.f32 %v1823, %v1855
        %v1872 = vadd.f32 %v1824, %v1856
        %v1873 = vadd.f32 %v1825, %v1857
        %v1874 = vadd.f32 %v1826, %v1858
        %v1875 = vld [vmem:[%s1778 + $0x9] sm:$0xff]
        %v1876 = vld [vmem:[%s1778 + $0x11] sm:$0xff]
        %v1877 = vld [vmem:[%s1778 + $0x29] sm:$0xff]
        %v1878 = vld [vmem:[%s1778 + $0x31] sm:$0xff]
        %v1879 = vld [vmem:[%s1778 + $0x49] sm:$0xff]
        %v1880 = vld [vmem:[%s1778 + $0x51] sm:$0xff]
        %v1881 = vld [vmem:[%s1778 + $0x69] sm:$0xff]
        %v1882 = vld [vmem:[%s1778 + $0x71] sm:$0xff]
        %v1883 = vld [vmem:[%s1778 + $0x89] sm:$0xff]
        %v1884 = vld [vmem:[%s1778 + $0x91] sm:$0xff]
        %v1885 = vld [vmem:[%s1778 + $0xa9] sm:$0xff]
        %v1886 = vld [vmem:[%s1778 + $0xb1] sm:$0xff]
        %v1887 = vld [vmem:[%s1778 + $0xc9] sm:$0xff]
        %v1888 = vld [vmem:[%s1778 + $0xd1] sm:$0xff]
        %v1889 = vld [vmem:[%s1778 + $0xe9] sm:$0xff]
        %v1890 = vld [vmem:[%s1778 + $0xf1] sm:$0xff]
        %v1891 = vmul.f32 %v1875, %v1114
        %v1892 = vmul.f32 %v1876, %v1114
        %v1893 = vmul.f32 %v1877, %v1114
        %v1894 = vmul.f32 %v1878, %v1114
        %v1895 = vmul.f32 %v1879, %v1114
        %v1896 = vmul.f32 %v1880, %v1114
        %v1897 = vmul.f32 %v1881, %v1114
        %v1898 = vmul.f32 %v1882, %v1114
        %v1899 = vmul.f32 %v1883, %v1114
        %v1900 = vmul.f32 %v1884, %v1114
        %v1901 = vmul.f32 %v1885, %v1114
        %v1902 = vmul.f32 %v1886, %v1114
        %v1903 = vmul.f32 %v1887, %v1114
        %v1904 = vmul.f32 %v1888, %v1114
        %v1905 = vmul.f32 %v1889, %v1114
        %v1906 = vmul.f32 %v1890, %v1114
        %v1907 = vadd.f32 %v1859, %v1891
        %v1908 = vadd.f32 %v1860, %v1892
        %v1909 = vadd.f32 %v1861, %v1893
        %v1910 = vadd.f32 %v1862, %v1894
        %v1911 = vadd.f32 %v1863, %v1895
        %v1912 = vadd.f32 %v1864, %v1896
        %v1913 = vadd.f32 %v1865, %v1897
        %v1914 = vadd.f32 %v1866, %v1898
        %v1915 = vadd.f32 %v1867, %v1899
        %v1916 = vadd.f32 %v1868, %v1900
        %v1917 = vadd.f32 %v1869, %v1901
        %v1918 = vadd.f32 %v1870, %v1902
        %v1919 = vadd.f32 %v1871, %v1903
        %v1920 = vadd.f32 %v1872, %v1904
        %v1921 = vadd.f32 %v1873, %v1905
        %v1922 = vadd.f32 %v1874, %v1906
        %v1923 = vld [vmem:[%s972 + $0x7] sm:$0xff]
        %v1924 = vld [vmem:[%s972 + $0xf] sm:$0xff]
        %v1925 = vld [vmem:[%s972 + $0x27] sm:$0xff]
        %v1926 = vld [vmem:[%s972 + $0x2f] sm:$0xff]
        %v1927 = vld [vmem:[%s972 + $0x47] sm:$0xff]
        %v1928 = vld [vmem:[%s972 + $0x4f] sm:$0xff]
        %v1929 = vld [vmem:[%s972 + $0x67] sm:$0xff]
        %v1930 = vld [vmem:[%s972 + $0x6f] sm:$0xff]
        %v1931 = vld [vmem:[%s972 + $0x87] sm:$0xff]
        %v1932 = vld [vmem:[%s972 + $0x8f] sm:$0xff]
        %v1933 = vld [vmem:[%s972 + $0xa7] sm:$0xff]
        %v1934 = vld [vmem:[%s972 + $0xaf] sm:$0xff]
        %v1935 = vld [vmem:[%s972 + $0xc7] sm:$0xff]
        %v1936 = vld [vmem:[%s972 + $0xcf] sm:$0xff]
        %v1937 = vld [vmem:[%s972 + $0xe7] sm:$0xff]
        %v1938 = vld [vmem:[%s972 + $0xef] sm:$0xff]
        %v1939 = vmul.f32 %v1923, %v1166
        %v1940 = vmul.f32 %v1924, %v1166
        %v1941 = vmul.f32 %v1925, %v1166
        %v1942 = vmul.f32 %v1926, %v1166
        %v1943 = vmul.f32 %v1927, %v1166
        %v1944 = vmul.f32 %v1928, %v1166
        %v1945 = vmul.f32 %v1929, %v1166
        %v1946 = vmul.f32 %v1930, %v1166
        %v1947 = vmul.f32 %v1931, %v1166
        %v1948 = vmul.f32 %v1932, %v1166
        %v1949 = vmul.f32 %v1933, %v1166
        %v1950 = vmul.f32 %v1934, %v1166
        %v1951 = vmul.f32 %v1935, %v1166
        %v1952 = vmul.f32 %v1936, %v1166
        %v1953 = vmul.f32 %v1937, %v1166
        %v1954 = vmul.f32 %v1938, %v1166
        %v1955 = vadd.f32 %v1907, %v1939
        %v1956 = vadd.f32 %v1908, %v1940
        %v1957 = vadd.f32 %v1909, %v1941
        %v1958 = vadd.f32 %v1910, %v1942
        %v1959 = vadd.f32 %v1911, %v1943
        %v1960 = vadd.f32 %v1912, %v1944
        %v1961 = vadd.f32 %v1913, %v1945
        %v1962 = vadd.f32 %v1914, %v1946
        %v1963 = vadd.f32 %v1915, %v1947
        %v1964 = vadd.f32 %v1916, %v1948
        %v1965 = vadd.f32 %v1917, %v1949
        %v1966 = vadd.f32 %v1918, %v1950
        %v1967 = vadd.f32 %v1919, %v1951
        %v1968 = vadd.f32 %v1920, %v1952
        %v1969 = vadd.f32 %v1921, %v1953
        %v1970 = vadd.f32 %v1922, %v1954
        %v1971 = vld [vmem:[%s972 + $0x8] sm:$0xff]
        %v1972 = vld [vmem:[%s972 + $0x10] sm:$0xff]
        %v1973 = vld [vmem:[%s972 + $0x28] sm:$0xff]
        %v1974 = vld [vmem:[%s972 + $0x30] sm:$0xff]
        %v1975 = vld [vmem:[%s972 + $0x48] sm:$0xff]
        %v1976 = vld [vmem:[%s972 + $0x50] sm:$0xff]
        %v1977 = vld [vmem:[%s972 + $0x68] sm:$0xff]
        %v1978 = vld [vmem:[%s972 + $0x70] sm:$0xff]
        %v1979 = vld [vmem:[%s972 + $0x88] sm:$0xff]
        %v1980 = vld [vmem:[%s972 + $0x90] sm:$0xff]
        %v1981 = vld [vmem:[%s972 + $0xa8] sm:$0xff]
        %v1982 = vld [vmem:[%s972 + $0xb0] sm:$0xff]
        %v1983 = vld [vmem:[%s972 + $0xc8] sm:$0xff]
        %v1984 = vld [vmem:[%s972 + $0xd0] sm:$0xff]
        %v1985 = vld [vmem:[%s972 + $0xe8] sm:$0xff]
        %v1986 = vld [vmem:[%s972 + $0xf0] sm:$0xff]
        %v1987 = vmul.f32 %v1971, %v1218
        %v1988 = vmul.f32 %v1972, %v1218
        %v1989 = vmul.f32 %v1973, %v1218
        %v1990 = vmul.f32 %v1974, %v1218
        %v1991 = vmul.f32 %v1975, %v1218
        %v1992 = vmul.f32 %v1976, %v1218
        %v1993 = vmul.f32 %v1977, %v1218
        %v1994 = vmul.f32 %v1978, %v1218
        %v1995 = vmul.f32 %v1979, %v1218
        %v1996 = vmul.f32 %v1980, %v1218
        %v1997 = vmul.f32 %v1981, %v1218
        %v1998 = vmul.f32 %v1982, %v1218
        %v1999 = vmul.f32 %v1983, %v1218
        %v2000 = vmul.f32 %v1984, %v1218
        %v2001 = vmul.f32 %v1985, %v1218
        %v2002 = vmul.f32 %v1986, %v1218
        %v2003 = vadd.f32 %v1955, %v1987
        %v2004 = vadd.f32 %v1956, %v1988
        %v2005 = vadd.f32 %v1957, %v1989
        %v2006 = vadd.f32 %v1958, %v1990
        %v2007 = vadd.f32 %v1959, %v1991
        %v2008 = vadd.f32 %v1960, %v1992
        %v2009 = vadd.f32 %v1961, %v1993
        %v2010 = vadd.f32 %v1962, %v1994
        %v2011 = vadd.f32 %v1963, %v1995
        %v2012 = vadd.f32 %v1964, %v1996
        %v2013 = vadd.f32 %v1965, %v1997
        %v2014 = vadd.f32 %v1966, %v1998
        %v2015 = vadd.f32 %v1967, %v1999
        %v2016 = vadd.f32 %v1968, %v2000
        %v2017 = vadd.f32 %v1969, %v2001
        %v2018 = vadd.f32 %v1970, %v2002
        %v2019 = vld [vmem:[%s972 + $0x9] sm:$0xff]
        %v2020 = vld [vmem:[%s972 + $0x11] sm:$0xff]
        %v2021 = vld [vmem:[%s972 + $0x29] sm:$0xff]
        %v2022 = vld [vmem:[%s972 + $0x31] sm:$0xff]
        %v2023 = vld [vmem:[%s972 + $0x49] sm:$0xff]
        %v2024 = vld [vmem:[%s972 + $0x51] sm:$0xff]
        %v2025 = vld [vmem:[%s972 + $0x69] sm:$0xff]
        %v2026 = vld [vmem:[%s972 + $0x71] sm:$0xff]
        %v2027 = vld [vmem:[%s972 + $0x89] sm:$0xff]
        %v2028 = vld [vmem:[%s972 + $0x91] sm:$0xff]
        %v2029 = vld [vmem:[%s972 + $0xa9] sm:$0xff]
        %v2030 = vld [vmem:[%s972 + $0xb1] sm:$0xff]
        %v2031 = vld [vmem:[%s972 + $0xc9] sm:$0xff]
        %v2032 = vld [vmem:[%s972 + $0xd1] sm:$0xff]
        %v2033 = vld [vmem:[%s972 + $0xe9] sm:$0xff]
        %v2034 = vld [vmem:[%s972 + $0xf1] sm:$0xff]
        %v2035 = vmul.f32 %v2019, %v1270
        %v2036 = vmul.f32 %v2020, %v1270
        %v2037 = vmul.f32 %v2021, %v1270
        %v2038 = vmul.f32 %v2022, %v1270
        %v2039 = vmul.f32 %v2023, %v1270
        %v2040 = vmul.f32 %v2024, %v1270
        %v2041 = vmul.f32 %v2025, %v1270
        %v2042 = vmul.f32 %v2026, %v1270
        %v2043 = vmul.f32 %v2027, %v1270
        %v2044 = vmul.f32 %v2028, %v1270
        %v2045 = vmul.f32 %v2029, %v1270
        %v2046 = vmul.f32 %v2030, %v1270
        %v2047 = vmul.f32 %v2031, %v1270
        %v2048 = vmul.f32 %v2032, %v1270
        %v2049 = vmul.f32 %v2033, %v1270
        %v2050 = vmul.f32 %v2034, %v1270
        %v2051 = vadd.f32 %v2003, %v2035
        %v2052 = vadd.f32 %v2004, %v2036
        %v2053 = vadd.f32 %v2005, %v2037
        %v2054 = vadd.f32 %v2006, %v2038
        %v2055 = vadd.f32 %v2007, %v2039
        %v2056 = vadd.f32 %v2008, %v2040
        %v2057 = vadd.f32 %v2009, %v2041
        %v2058 = vadd.f32 %v2010, %v2042
        %v2059 = vadd.f32 %v2011, %v2043
        %v2060 = vadd.f32 %v2012, %v2044
        %v2061 = vadd.f32 %v2013, %v2045
        %v2062 = vadd.f32 %v2014, %v2046
        %v2063 = vadd.f32 %v2015, %v2047
        %v2064 = vadd.f32 %v2016, %v2048
        %v2065 = vadd.f32 %v2017, %v2049
        %v2066 = vadd.f32 %v2018, %v2050
        %s2067 = sadd.s32 8, 2
        %s2068 = smul.u32 %s2067, 32
        %s2069 = scalar_lea.vmem [#allocation2], %s2068
        %v2070 = vld [vmem:[%s2069 + $0x7] sm:$0xff]
        %v2071 = vld [vmem:[%s2069 + $0xf] sm:$0xff]
        %v2072 = vld [vmem:[%s2069 + $0x27] sm:$0xff]
        %v2073 = vld [vmem:[%s2069 + $0x2f] sm:$0xff]
        %v2074 = vld [vmem:[%s2069 + $0x47] sm:$0xff]
        %v2075 = vld [vmem:[%s2069 + $0x4f] sm:$0xff]
        %v2076 = vld [vmem:[%s2069 + $0x67] sm:$0xff]
        %v2077 = vld [vmem:[%s2069 + $0x6f] sm:$0xff]
        %v2078 = vld [vmem:[%s2069 + $0x87] sm:$0xff]
        %v2079 = vld [vmem:[%s2069 + $0x8f] sm:$0xff]
        %v2080 = vld [vmem:[%s2069 + $0xa7] sm:$0xff]
        %v2081 = vld [vmem:[%s2069 + $0xaf] sm:$0xff]
        %v2082 = vld [vmem:[%s2069 + $0xc7] sm:$0xff]
        %v2083 = vld [vmem:[%s2069 + $0xcf] sm:$0xff]
        %v2084 = vld [vmem:[%s2069 + $0xe7] sm:$0xff]
        %v2085 = vld [vmem:[%s2069 + $0xef] sm:$0xff]
        %v2086 = vmul.f32 %v2070, %v1325
        %v2087 = vmul.f32 %v2071, %v1325
        %v2088 = vmul.f32 %v2072, %v1325
        %v2089 = vmul.f32 %v2073, %v1325
        %v2090 = vmul.f32 %v2074, %v1325
        %v2091 = vmul.f32 %v2075, %v1325
        %v2092 = vmul.f32 %v2076, %v1325
        %v2093 = vmul.f32 %v2077, %v1325
        %v2094 = vmul.f32 %v2078, %v1325
        %v2095 = vmul.f32 %v2079, %v1325
        %v2096 = vmul.f32 %v2080, %v1325
        %v2097 = vmul.f32 %v2081, %v1325
        %v2098 = vmul.f32 %v2082, %v1325
        %v2099 = vmul.f32 %v2083, %v1325
        %v2100 = vmul.f32 %v2084, %v1325
        %v2101 = vmul.f32 %v2085, %v1325
        %v2102 = vadd.f32 %v2051, %v2086
        %v2103 = vadd.f32 %v2052, %v2087
        %v2104 = vadd.f32 %v2053, %v2088
        %v2105 = vadd.f32 %v2054, %v2089
        %v2106 = vadd.f32 %v2055, %v2090
        %v2107 = vadd.f32 %v2056, %v2091
        %v2108 = vadd.f32 %v2057, %v2092
        %v2109 = vadd.f32 %v2058, %v2093
        %v2110 = vadd.f32 %v2059, %v2094
        %v2111 = vadd.f32 %v2060, %v2095
        %v2112 = vadd.f32 %v2061, %v2096
        %v2113 = vadd.f32 %v2062, %v2097
        %v2114 = vadd.f32 %v2063, %v2098
        %v2115 = vadd.f32 %v2064, %v2099
        %v2116 = vadd.f32 %v2065, %v2100
        %v2117 = vadd.f32 %v2066, %v2101
        %v2118 = vld [vmem:[%s2069 + $0x8] sm:$0xff]
        %v2119 = vld [vmem:[%s2069 + $0x10] sm:$0xff]
        %v2120 = vld [vmem:[%s2069 + $0x28] sm:$0xff]
        %v2121 = vld [vmem:[%s2069 + $0x30] sm:$0xff]
        %v2122 = vld [vmem:[%s2069 + $0x48] sm:$0xff]
        %v2123 = vld [vmem:[%s2069 + $0x50] sm:$0xff]
        %v2124 = vld [vmem:[%s2069 + $0x68] sm:$0xff]
        %v2125 = vld [vmem:[%s2069 + $0x70] sm:$0xff]
        %v2126 = vld [vmem:[%s2069 + $0x88] sm:$0xff]
        %v2127 = vld [vmem:[%s2069 + $0x90] sm:$0xff]
        %v2128 = vld [vmem:[%s2069 + $0xa8] sm:$0xff]
        %v2129 = vld [vmem:[%s2069 + $0xb0] sm:$0xff]
        %v2130 = vld [vmem:[%s2069 + $0xc8] sm:$0xff]
        %v2131 = vld [vmem:[%s2069 + $0xd0] sm:$0xff]
        %v2132 = vld [vmem:[%s2069 + $0xe8] sm:$0xff]
        %v2133 = vld [vmem:[%s2069 + $0xf0] sm:$0xff]
        %v2134 = vmul.f32 %v2118, %v1377
        %v2135 = vmul.f32 %v2119, %v1377
        %v2136 = vmul.f32 %v2120, %v1377
        %v2137 = vmul.f32 %v2121, %v1377
        %v2138 = vmul.f32 %v2122, %v1377
        %v2139 = vmul.f32 %v2123, %v1377
        %v2140 = vmul.f32 %v2124, %v1377
        %v2141 = vmul.f32 %v2125, %v1377
        %v2142 = vmul.f32 %v2126, %v1377
        %v2143 = vmul.f32 %v2127, %v1377
        %v2144 = vmul.f32 %v2128, %v1377
        %v2145 = vmul.f32 %v2129, %v1377
        %v2146 = vmul.f32 %v2130, %v1377
        %v2147 = vmul.f32 %v2131, %v1377
        %v2148 = vmul.f32 %v2132, %v1377
        %v2149 = vmul.f32 %v2133, %v1377
        %v2150 = vadd.f32 %v2102, %v2134
        %v2151 = vadd.f32 %v2103, %v2135
        %v2152 = vadd.f32 %v2104, %v2136
        %v2153 = vadd.f32 %v2105, %v2137
        %v2154 = vadd.f32 %v2106, %v2138
        %v2155 = vadd.f32 %v2107, %v2139
        %v2156 = vadd.f32 %v2108, %v2140
        %v2157 = vadd.f32 %v2109, %v2141
        %v2158 = vadd.f32 %v2110, %v2142
        %v2159 = vadd.f32 %v2111, %v2143
        %v2160 = vadd.f32 %v2112, %v2144
        %v2161 = vadd.f32 %v2113, %v2145
        %v2162 = vadd.f32 %v2114, %v2146
        %v2163 = vadd.f32 %v2115, %v2147
        %v2164 = vadd.f32 %v2116, %v2148
        %v2165 = vadd.f32 %v2117, %v2149
        %v2166 = vld [vmem:[%s2069 + $0x9] sm:$0xff]
        %v2167 = vld [vmem:[%s2069 + $0x11] sm:$0xff]
        %v2168 = vld [vmem:[%s2069 + $0x29] sm:$0xff]
        %v2169 = vld [vmem:[%s2069 + $0x31] sm:$0xff]
        %v2170 = vld [vmem:[%s2069 + $0x49] sm:$0xff]
        %v2171 = vld [vmem:[%s2069 + $0x51] sm:$0xff]
        %v2172 = vld [vmem:[%s2069 + $0x69] sm:$0xff]
        %v2173 = vld [vmem:[%s2069 + $0x71] sm:$0xff]
        %v2174 = vld [vmem:[%s2069 + $0x89] sm:$0xff]
        %v2175 = vld [vmem:[%s2069 + $0x91] sm:$0xff]
        %v2176 = vld [vmem:[%s2069 + $0xa9] sm:$0xff]
        %v2177 = vld [vmem:[%s2069 + $0xb1] sm:$0xff]
        %v2178 = vld [vmem:[%s2069 + $0xc9] sm:$0xff]
        %v2179 = vld [vmem:[%s2069 + $0xd1] sm:$0xff]
        %v2180 = vld [vmem:[%s2069 + $0xe9] sm:$0xff]
        %v2181 = vld [vmem:[%s2069 + $0xf1] sm:$0xff]
        %v2182 = vmul.f32 %v2166, %v1429
        %v2183 = vmul.f32 %v2167, %v1429
        %v2184 = vmul.f32 %v2168, %v1429
        %v2185 = vmul.f32 %v2169, %v1429
        %v2186 = vmul.f32 %v2170, %v1429
        %v2187 = vmul.f32 %v2171, %v1429
        %v2188 = vmul.f32 %v2172, %v1429
        %v2189 = vmul.f32 %v2173, %v1429
        %v2190 = vmul.f32 %v2174, %v1429
        %v2191 = vmul.f32 %v2175, %v1429
        %v2192 = vmul.f32 %v2176, %v1429
        %v2193 = vmul.f32 %v2177, %v1429
        %v2194 = vmul.f32 %v2178, %v1429
        %v2195 = vmul.f32 %v2179, %v1429
        %v2196 = vmul.f32 %v2180, %v1429
        %v2197 = vmul.f32 %v2181, %v1429
        %v2198 = vadd.f32 %v2150, %v2182
        %v2199 = vadd.f32 %v2151, %v2183
        %v2200 = vadd.f32 %v2152, %v2184
        %v2201 = vadd.f32 %v2153, %v2185
        %v2202 = vadd.f32 %v2154, %v2186
        %v2203 = vadd.f32 %v2155, %v2187
        %v2204 = vadd.f32 %v2156, %v2188
        %v2205 = vadd.f32 %v2157, %v2189
        %v2206 = vadd.f32 %v2158, %v2190
        %v2207 = vadd.f32 %v2159, %v2191
        %v2208 = vadd.f32 %v2160, %v2192
        %v2209 = vadd.f32 %v2161, %v2193
        %v2210 = vadd.f32 %v2162, %v2194
        %v2211 = vadd.f32 %v2163, %v2195
        %v2212 = vadd.f32 %v2164, %v2196
        %v2213 = vadd.f32 %v2165, %v2197
        %v2214 = vmul.f32 %v2198, %v1466
        %v2215 = vmul.f32 %v2199, %v1466
        %v2216 = vmul.f32 %v2200, %v1466
        %v2217 = vmul.f32 %v2201, %v1466
        %v2218 = vmul.f32 %v2202, %v1466
        %v2219 = vmul.f32 %v2203, %v1466
        %v2220 = vmul.f32 %v2204, %v1466
        %v2221 = vmul.f32 %v2205, %v1466
        %v2222 = vmul.f32 %v2206, %v1466
        %v2223 = vmul.f32 %v2207, %v1466
        %v2224 = vmul.f32 %v2208, %v1466
        %v2225 = vmul.f32 %v2209, %v1466
        %v2226 = vmul.f32 %v2210, %v1466
        %v2227 = vmul.f32 %v2211, %v1466
        %v2228 = vmul.f32 %v2212, %v1466
        %v2229 = vmul.f32 %v2213, %v1466
        %v2230 = vadd.f32 %v2214, %v1488
        %v2231 = vadd.f32 %v2215, %v1488
        %v2232 = vadd.f32 %v2216, %v1488
        %v2233 = vadd.f32 %v2217, %v1488
        %v2234 = vadd.f32 %v2218, %v1488
        %v2235 = vadd.f32 %v2219, %v1488
        %v2236 = vadd.f32 %v2220, %v1488
        %v2237 = vadd.f32 %v2221, %v1488
        %v2238 = vadd.f32 %v2222, %v1488
        %v2239 = vadd.f32 %v2223, %v1488
        %v2240 = vadd.f32 %v2224, %v1488
        %v2241 = vadd.f32 %v2225, %v1488
        %v2242 = vadd.f32 %v2226, %v1488
        %v2243 = vadd.f32 %v2227, %v1488
        %v2244 = vadd.f32 %v2228, %v1488
        %v2245 = vadd.f32 %v2229, %v1488
        %v2246 = vmax.f32 %v2230, 0.0
        %v2247 = vmax.f32 %v2231, 0.0
        %v2248 = vmax.f32 %v2232, 0.0
        %v2249 = vmax.f32 %v2233, 0.0
        %v2250 = vmax.f32 %v2234, 0.0
        %v2251 = vmax.f32 %v2235, 0.0
        %v2252 = vmax.f32 %v2236, 0.0
        %v2253 = vmax.f32 %v2237, 0.0
        %v2254 = vmax.f32 %v2238, 0.0
        %v2255 = vmax.f32 %v2239, 0.0
        %v2256 = vmax.f32 %v2240, 0.0
        %v2257 = vmax.f32 %v2241, 0.0
        %v2258 = vmax.f32 %v2242, 0.0
        %v2259 = vmax.f32 %v2243, 0.0
        %v2260 = vmax.f32 %v2244, 0.0
        %v2261 = vmax.f32 %v2245, 0.0
        %v2262 = vmin.f32 %v2246, 6.0
        %v2263 = vmin.f32 %v2247, 6.0
        %v2264 = vmin.f32 %v2248, 6.0
        %v2265 = vmin.f32 %v2249, 6.0
        %v2266 = vmin.f32 %v2250, 6.0
        %v2267 = vmin.f32 %v2251, 6.0
        %v2268 = vmin.f32 %v2252, 6.0
        %v2269 = vmin.f32 %v2253, 6.0
        %v2270 = vmin.f32 %v2254, 6.0
        %v2271 = vmin.f32 %v2255, 6.0
        %v2272 = vmin.f32 %v2256, 6.0
        %v2273 = vmin.f32 %v2257, 6.0
        %v2274 = vmin.f32 %v2258, 6.0
        %v2275 = vmin.f32 %v2259, 6.0
        %v2276 = vmin.f32 %v2260, 6.0
        %v2277 = vmin.f32 %v2261, 6.0
        %2278 = vmatprep.subr.mxu0 0.0
        %2279 = vmatpush1.msra.mxu0 %v404
        %2280 = vmatprep.subr.mxu0 0.0
        %2281 = vmatpush1.msra.mxu0 %v405
        %2282 = vmatprep.subr.mxu0 0.0
        %2283 = vmatpush1.msra.mxu0 %v406
        %2284 = vmatprep.subr.mxu0 0.0
        %2285 = vmatpush1.msra.mxu0 %v407
        %2286 = vmatprep.subr.mxu0 0.0
        %2287 = vmatpush1.msra.mxu0 %v408
        %2288 = vmatprep.subr.mxu0 0.0
        %2289 = vmatpush1.msra.mxu0 %v409
        %2290 = vmatprep.subr.mxu0 0.0
        %2291 = vmatpush1.msra.mxu0 %v410
        %2292 = vmatprep.subr.mxu0 0.0
        %2293 = vmatpush1.msra.mxu0 %v411
        %2294 = vmatprep.subr.mxu0 0.0
        %2295 = vmatpush1.msra.mxu0 %v412
        %2296 = vmatprep.subr.mxu0 0.0
        %2297 = vmatpush1.msra.mxu0 %v413
        %2298 = vmatprep.subr.mxu0 0.0
        %2299 = vmatpush1.msra.mxu0 %v414
        %2300 = vmatprep.subr.mxu0 0.0
        %2301 = vmatpush1.msra.mxu0 %v415
        %2302 = vmatprep.subr.mxu0 0.0
        %2303 = vmatpush1.msra.mxu0 %v416
        %2304 = vmatprep.subr.mxu0 0.0
        %2305 = vmatpush1.msra.mxu0 %v417
        %2306 = vmatprep.subr.mxu0 0.0
        %2307 = vmatpush1.msra.mxu0 %v418
        %2308 = vmatprep.subr.mxu0 0.0
        %2309 = vmatpush1.msra.mxu0 %v419
        %2310 = vmatprep.subr.mxu0 0.0
        %2311 = vmatpush1.msra.mxu0 0.0
        %2312 = vmatprep.subr.mxu0 0.0
        %2313 = vmatpush1.msra.mxu0 0.0
        %2314 = vmatprep.subr.mxu0 0.0
        %2315 = vmatpush1.msra.mxu0 0.0
        %2316 = vmatprep.subr.mxu0 0.0
        %2317 = vmatpush1.msra.mxu0 0.0
        %2318 = vmatprep.subr.mxu0 0.0
        %2319 = vmatpush1.msra.mxu0 0.0
        %2320 = vmatprep.subr.mxu0 0.0
        %2321 = vmatpush1.msra.mxu0 0.0
        %2322 = vmatprep.subr.mxu0 0.0
        %2323 = vmatpush1.msra.mxu0 0.0
        %2324 = vmatprep.subr.mxu0 0.0
        %2325 = vmatpush1.msra.mxu0 0.0
        %2326 = vmatprep.subr.mxu0 0.0
        %2327 = vmatpush1.msra.mxu0 0.0
        %2328 = vmatprep.subr.mxu0 0.0
        %2329 = vmatpush1.msra.mxu0 0.0
        %2330 = vmatprep.subr.mxu0 0.0
        %2331 = vmatpush1.msra.mxu0 0.0
        %2332 = vmatprep.subr.mxu0 0.0
        %2333 = vmatpush1.msra.mxu0 0.0
        %2334 = vmatprep.subr.mxu0 0.0
        %2335 = vmatpush1.msra.mxu0 0.0
        %2336 = vmatprep.subr.mxu0 0.0
        %2337 = vmatpush1.msra.mxu0 0.0
        %2338 = vmatprep.subr.mxu0 0.0
        %2339 = vmatpush1.msra.mxu0 0.0
        %2340 = vmatprep.subr.mxu0 0.0
        %2341 = vmatpush1.msra.mxu0 0.0
        %2342 = vmatprep.mubr.f32.mxu0 0.0
        %2343 = vmatmul.mubr.f32.gmra.mrb[0].mxu0 %v2262
        %v2344 = vpop.f32.mrb[0].mxu0
        %v2345 = vadd.f32 0.0, %v2344
        %v2346 = vpop.f32.mrb[0].mxu0
        %2347 = vmatprep.mubr.f32.mxu0 0.0
        %2348 = vmatmul.mubr.f32.gmra.mrb[0].mxu0 %v2263
        %v2349 = vpop.f32.mrb[0].mxu0
        %v2350 = vadd.f32 0.0, %v2349
        %v2351 = vpop.f32.mrb[0].mxu0
        %2352 = vmatprep.mubr.f32.mxu0 0.0
        %2353 = vmatmul.mubr.f32.gmra.mrb[0].mxu0 %v2264
        %v2354 = vpop.f32.mrb[0].mxu0
        %v2355 = vadd.f32 0.0, %v2354
        %v2356 = vpop.f32.mrb[0].mxu0
        %2357 = vmatprep.mubr.f32.mxu0 0.0
        %2358 = vmatmul.mubr.f32.gmra.mrb[0].mxu0 %v2265
        %v2359 = vpop.f32.mrb[0].mxu0
        %v2360 = vadd.f32 0.0, %v2359
        %v2361 = vpop.f32.mrb[0].mxu0
        %2362 = vmatprep.mubr.f32.mxu0 0.0
        %2363 = vmatmul.mubr.f32.gmra.mrb[0].mxu0 %v2266
        %v2364 = vpop.f32.mrb[0].mxu0
        %v2365 = vadd.f32 0.0, %v2364
        %v2366 = vpop.f32.mrb[0].mxu0
        %2367 = vmatprep.mubr.f32.mxu0 0.0
        %2368 = vmatmul.mubr.f32.gmra.mrb[0].mxu0 %v2267
        %v2369 = vpop.f32.mrb[0].mxu0
        %v2370 = vadd.f32 0.0, %v2369
        %v2371 = vpop.f32.mrb[0].mxu0
        %2372 = vmatprep.mubr.f32.mxu0 0.0
        %2373 = vmatmul.mubr.f32.gmra.mrb[0].mxu0 %v2268
        %v2374 = vpop.f32.mrb[0].mxu0
        %v2375 = vadd.f32 0.0, %v2374
        %v2376 = vpop.f32.mrb[0].mxu0
        %2377 = vmatprep.mubr.f32.mxu0 0.0
        %2378 = vmatmul.mubr.f32.gmra.mrb[0].mxu0 %v2269
        %v2379 = vpop.f32.mrb[0].mxu0
        %v2380 = vadd.f32 0.0, %v2379
        %v2381 = vpop.f32.mrb[0].mxu0
        %2382 = vmatprep.mubr.f32.mxu0 0.0
        %2383 = vmatmul.mubr.f32.gmra.mrb[0].mxu0 %v2270
        %v2384 = vpop.f32.mrb[0].mxu0
        %v2385 = vadd.f32 0.0, %v2384
        %v2386 = vpop.f32.mrb[0].mxu0
        %2387 = vmatprep.mubr.f32.mxu0 0.0
        %2388 = vmatmul.mubr.f32.gmra.mrb[0].mxu0 %v2271
        %v2389 = vpop.f32.mrb[0].mxu0
        %v2390 = vadd.f32 0.0, %v2389
        %v2391 = vpop.f32.mrb[0].mxu0
        %2392 = vmatprep.mubr.f32.mxu0 0.0
        %2393 = vmatmul.mubr.f32.gmra.mrb[0].mxu0 %v2272
        %v2394 = vpop.f32.mrb[0].mxu0
        %v2395 = vadd.f32 0.0, %v2394
        %v2396 = vpop.f32.mrb[0].mxu0
        %2397 = vmatprep.mubr.f32.mxu0 0.0
        %2398 = vmatmul.mubr.f32.gmra.mrb[0].mxu0 %v2273
        %v2399 = vpop.f32.mrb[0].mxu0
        %v2400 = vadd.f32 0.0, %v2399
        %v2401 = vpop.f32.mrb[0].mxu0
        %2402 = vmatprep.mubr.f32.mxu0 0.0
        %2403 = vmatmul.mubr.f32.gmra.mrb[0].mxu0 %v2274
        %v2404 = vpop.f32.mrb[0].mxu0
        %v2405 = vadd.f32 0.0, %v2404
        %v2406 = vpop.f32.mrb[0].mxu0
        %2407 = vmatprep.mubr.f32.mxu0 0.0
        %2408 = vmatmul.mubr.f32.gmra.mrb[0].mxu0 %v2275
        %v2409 = vpop.f32.mrb[0].mxu0
        %v2410 = vadd.f32 0.0, %v2409
        %v2411 = vpop.f32.mrb[0].mxu0
        %2412 = vmatprep.mubr.f32.mxu0 0.0
        %2413 = vmatmul.mubr.f32.gmra.mrb[0].mxu0 %v2276
        %v2414 = vpop.f32.mrb[0].mxu0
        %v2415 = vadd.f32 0.0, %v2414
        %v2416 = vpop.f32.mrb[0].mxu0
        %2417 = vmatprep.mubr.f32.mxu0 0.0
        %2418 = vmatmul.mubr.f32.gmra.mrb[0].mxu0 %v2277
        %v2419 = vpop.f32.mrb[0].mxu0
        %v2420 = vadd.f32 0.0, %v2419
        %v2421 = vpop.f32.mrb[0].mxu0
        %2422 = vdwg.mxu0
        %v2423 = vmul.f32 %v2345, %v1687
        %v2424 = vmul.f32 %v2350, %v1687
        %v2425 = vmul.f32 %v2355, %v1687
        %v2426 = vmul.f32 %v2360, %v1687
        %v2427 = vmul.f32 %v2365, %v1687
        %v2428 = vmul.f32 %v2370, %v1687
        %v2429 = vmul.f32 %v2375, %v1687
        %v2430 = vmul.f32 %v2380, %v1687
        %v2431 = vmul.f32 %v2385, %v1687
        %v2432 = vmul.f32 %v2390, %v1687
        %v2433 = vmul.f32 %v2395, %v1687
        %v2434 = vmul.f32 %v2400, %v1687
        %v2435 = vmul.f32 %v2405, %v1687
        %v2436 = vmul.f32 %v2410, %v1687
        %v2437 = vmul.f32 %v2415, %v1687
        %v2438 = vmul.f32 %v2420, %v1687
        %v2439 = vadd.f32 %v2423, %v1709
        %v2440 = vadd.f32 %v2424, %v1709
        %v2441 = vadd.f32 %v2425, %v1709
        %v2442 = vadd.f32 %v2426, %v1709
        %v2443 = vadd.f32 %v2427, %v1709
        %v2444 = vadd.f32 %v2428, %v1709
        %v2445 = vadd.f32 %v2429, %v1709
        %v2446 = vadd.f32 %v2430, %v1709
        %v2447 = vadd.f32 %v2431, %v1709
        %v2448 = vadd.f32 %v2432, %v1709
        %v2449 = vadd.f32 %v2433, %v1709
        %v2450 = vadd.f32 %v2434, %v1709
        %v2451 = vadd.f32 %v2435, %v1709
        %v2452 = vadd.f32 %v2436, %v1709
        %v2453 = vadd.f32 %v2437, %v1709
        %v2454 = vadd.f32 %v2438, %v1709
        %v2455 = vld [vmem:[%s744] sm:$0xff]
        %v2456 = vld [vmem:[%s744 + $0x8] sm:$0xff]
        %v2457 = vld [vmem:[%s744 + $0x10] sm:$0xff]
        %v2458 = vld [vmem:[%s744 + $0x18] sm:$0xff]
        %v2459 = vld [vmem:[%s744 + $0x20] sm:$0xff]
        %v2460 = vld [vmem:[%s744 + $0x28] sm:$0xff]
        %v2461 = vld [vmem:[%s744 + $0x30] sm:$0xff]
        %v2462 = vld [vmem:[%s744 + $0x38] sm:$0xff]
        %v2463 = vld [vmem:[%s744 + $0x40] sm:$0xff]
        %v2464 = vld [vmem:[%s744 + $0x48] sm:$0xff]
        %v2465 = vld [vmem:[%s744 + $0x50] sm:$0xff]
        %v2466 = vld [vmem:[%s744 + $0x58] sm:$0xff]
        %v2467 = vld [vmem:[%s744 + $0x60] sm:$0xff]
        %v2468 = vld [vmem:[%s744 + $0x68] sm:$0xff]
        %v2469 = vld [vmem:[%s744 + $0x70] sm:$0xff]
        %v2470 = vld [vmem:[%s744 + $0x78] sm:$0xff]
        %v2471 = vadd.f32 %v2439, %v2455
        %v2472 = vadd.f32 %v2440, %v2456
        %v2473 = vadd.f32 %v2441, %v2457
        %v2474 = vadd.f32 %v2442, %v2458
        %v2475 = vadd.f32 %v2443, %v2459
        %v2476 = vadd.f32 %v2444, %v2460
        %v2477 = vadd.f32 %v2445, %v2461
        %v2478 = vadd.f32 %v2446, %v2462
        %v2479 = vadd.f32 %v2447, %v2463
        %v2480 = vadd.f32 %v2448, %v2464
        %v2481 = vadd.f32 %v2449, %v2465
        %v2482 = vadd.f32 %v2450, %v2466
        %v2483 = vadd.f32 %v2451, %v2467
        %v2484 = vadd.f32 %v2452, %v2468
        %v2485 = vadd.f32 %v2453, %v2469
        %v2486 = vadd.f32 %v2454, %v2470
        %s2487 = scalar_lea.vmem %s392, %s743
        %2488 = vst.msk [vmem:[%s2487] sm:$0xff] %vm1760, %v2471
        %2489 = vst.msk [vmem:[%s2487 + $0x8] sm:$0xff] %vm1760, %v2472
        %2490 = vst.msk [vmem:[%s2487 + $0x10] sm:$0xff] %vm1760, %v2473
        %2491 = vst.msk [vmem:[%s2487 + $0x18] sm:$0xff] %vm1760, %v2474
        %2492 = vst.msk [vmem:[%s2487 + $0x20] sm:$0xff] %vm1760, %v2475
        %2493 = vst.msk [vmem:[%s2487 + $0x28] sm:$0xff] %vm1760, %v2476
        %2494 = vst.msk [vmem:[%s2487 + $0x30] sm:$0xff] %vm1760, %v2477
        %2495 = vst.msk [vmem:[%s2487 + $0x38] sm:$0xff] %vm1760, %v2478
        %2496 = vst.msk [vmem:[%s2487 + $0x40] sm:$0xff] %vm1760, %v2479
        %2497 = vst.msk [vmem:[%s2487 + $0x48] sm:$0xff] %vm1760, %v2480
        %2498 = vst.msk [vmem:[%s2487 + $0x50] sm:$0xff] %vm1760, %v2481
        %2499 = vst.msk [vmem:[%s2487 + $0x58] sm:$0xff] %vm1760, %v2482
        %2500 = vst.msk [vmem:[%s2487 + $0x60] sm:$0xff] %vm1760, %v2483
        %2501 = vst.msk [vmem:[%s2487 + $0x68] sm:$0xff] %vm1760, %v2484
        %2502 = vst.msk [vmem:[%s2487 + $0x70] sm:$0xff] %vm1760, %v2485
        %2503 = vst.msk [vmem:[%s2487 + $0x78] sm:$0xff] %vm1760, %v2486
        %p2504 = scmp.lt.s32.totalorder %s25, 1
        %s2505 = scalar_select %p2504, %s25, 1
        %s2506 = smul.addr %s2505, 32
        %s2507 = smul.addr %s2506, 8
        %s2508 = scalar_lea.vmem %s10, %s2507
        // Predicated region
        $region69: #{tpu_custom_call.1} parent=59 // pred_check
          %p2509 = pneg %p258
        $region70: #{tpu_custom_call.1} parent=59 // pred_check_branch
          %2511 = sbr.rel (%p2509) target = $region72
        $region71: #{tpu_custom_call.1} parent=59 // pred_region
          _
        $region72: #{tpu_custom_call.1} parent=59 // pred_fallthru
          _
      $region60: #{tpu_custom_call.1} parent=5 // pred_fallthru
        _
      %p2512 = scmp.le.s32.totalorder 2, %s20
      // Predicated region
      $region73: #{tpu_custom_call.1} parent=5 // pred_check
        %p2513 = pneg %p2512
      $region74: #{tpu_custom_call.1} parent=5 // pred_check_branch
        %2515 = sbr.rel (%p2513) target = $region76
      $region75: #{tpu_custom_call.1} parent=5 // pred_region
        %s2516 = ssub.s32 %s20, 2
        // Predicated region
        $region77: #{tpu_custom_call.1} parent=75 // pred_check
          %p2517 = pneg %p264
        $region78: #{tpu_custom_call.1} parent=75 // pred_check_branch
          %2519 = sbr.rel (%p2517) target = $region80
        $region79: #{tpu_custom_call.1} parent=75 // pred_region
          %p2520 = scmp.lt.s32.totalorder %s26, 1
          %s2521 = scalar_select %p2520, %s26, 1
          %s2522 = smul.addr %s2521, 32
          %s2523 = smul.addr %s2522, 8
          %s2524 = scalar_lea.vmem %s10, %s2523
        $region80: #{tpu_custom_call.1} parent=75 // pred_fallthru
          _
      $region76: #{tpu_custom_call.1} parent=5 // pred_fallthru
        _
    $region6: #{tpu_custom_call.1} parent=1 // loop_footer
      %s24 = sadd.s32 1, %s20
    $region7: #{tpu_custom_call.1} parent=1 // loop_footer_branch
      %19 = sbr.rel target = $region3
    $region8: #{tpu_custom_call.1} parent=1 // loop_exit
      _
    %2525 = vsyncpa [#allocation4], 1
    %s2526 = scalar_lea.sflag [#allocation4], 1
    %2527 = vsyncpa %s2526, 1
    %2528 = vsyncpa [#allocation6], 1

</llo_original>
